<compile_context>
chip_gen: v7x
topology: tpu7x:2x2x1
jax: 0.10.0
libtpu: 0.0.40
codegen_flags: <defaults>
</compile_context>

<pallas_src>
import functools

import jax
import jax.numpy as jnp
from jax import lax
from jax.experimental import pallas as pl
from jax.experimental.pallas import tpu as pltpu


def _round_up(x, m):
    return (x + m - 1) // m * m


# --------------------------------------------------------------------------
# Tiled matmul + bias (+ReLU) kernel: used for 1x1 convs and the two stride-2
# stem convs (which keep a small plain-JAX im2col).
# --------------------------------------------------------------------------

def _matmul_kernel(x_ref, w_ref, b_ref, o_ref, acc_ref, *, relu):
    @pl.when(pl.program_id(2) == 0)
    def _init():
        acc_ref[...] = jnp.zeros_like(acc_ref)

    acc_ref[...] += jnp.dot(x_ref[...], w_ref[...],
                            preferred_element_type=jnp.float32)

    @pl.when(pl.program_id(2) == pl.num_programs(2) - 1)
    def _fin():
        r = acc_ref[...] + b_ref[...]
        if relu:
            r = jnp.maximum(r, 0.0)
        o_ref[...] = r.astype(o_ref.dtype)


@functools.partial(jax.jit, static_argnames=("relu",))
def matmul_bias(x, w, b, relu=False):
    """x:(M,K), w:(K,N), b:(N,) -> (M,N) bf16.  Unconditional M tiling, K tiling
    with an f32 accumulator for large K, output channels padded to 128."""
    M, K = x.shape
    Nout = w.shape[1]
    TM = 256 if M >= 512 else (128 if M >= 256 else 64)
    TN = 128
    if K > 1024:
        TK = 512
        Kp = _round_up(K, TK)
    else:
        TK = K
        Kp = K
    Mp = _round_up(M, TM)
    Np = _round_up(Nout, TN)

    xp = jnp.pad(x.astype(jnp.bfloat16), ((0, Mp - M), (0, Kp - K)))
    wp = jnp.pad(w.astype(jnp.bfloat16), ((0, Kp - K), (0, Np - Nout)))
    bp = jnp.pad(b.astype(jnp.float32), (0, Np - Nout)).reshape(1, Np)

    out = pl.pallas_call(
        functools.partial(_matmul_kernel, relu=relu),
        out_shape=jax.ShapeDtypeStruct((Mp, Np), jnp.bfloat16),
        grid=(Mp // TM, Np // TN, Kp // TK),
        in_specs=[
            pl.BlockSpec((TM, TK), lambda i, j, k: (i, k)),
            pl.BlockSpec((TK, TN), lambda i, j, k: (k, j)),
            pl.BlockSpec((1, TN), lambda i, j, k: (0, j)),
        ],
        out_specs=pl.BlockSpec((TM, TN), lambda i, j, k: (i, j)),
        scratch_shapes=[pltpu.VMEM((TM, TN), jnp.float32)],
        compiler_params=pltpu.CompilerParams(
            dimension_semantics=("parallel", "parallel", "arbitrary")),
    )(xp, wp, bp)
    return out[:M, :Nout]


# --------------------------------------------------------------------------
# Direct stride-1 3x3 conv kernel: 9 shifted-slab matmul accumulations over a
# spatially padded, row-flattened input.  No materialized im2col.
# --------------------------------------------------------------------------

def _conv3x3_kernel(x_ref, w_ref, b_ref, o_ref, xs_ref, *, H, W, cin, relu):
    WP = W + 2                      # padded row width (1 zero column each side)
    L = H * WP                      # flattened content rows
    OFF = 2 * WP                    # content starts at padded row 2
    xs_ref[...] = x_ref[...].astype(jnp.float32)   # f32 staging (clean slab slices)
    acc = jnp.zeros((L, o_ref.shape[-1]), jnp.float32) + b_ref[...]
    for dh in range(3):
        for dw in range(3):
            start = OFF + (dh - 1) * WP + (dw - 1)
            r0 = (dh * 3 + dw) * cin
            acc += jnp.dot(xs_ref[start:start + L, :].astype(jnp.bfloat16),
                           w_ref[r0:r0 + cin, :],
                           preferred_element_type=jnp.float32)
    if relu:
        acc = jnp.maximum(acc, 0.0)
    o_ref[...] = acc.astype(o_ref.dtype)


@functools.partial(jax.jit, static_argnames=("relu",))
def conv3x3(x, w, b, relu=False):
    """x:(N,H,W,Cin) -> (N,H,W,Cout). 'same' padding, stride 1."""
    N, H, W, Cin = x.shape
    Cout = w.shape[-1]
    Cin_p = _round_up(Cin, 8)
    Cout_p = _round_up(Cout, 128)          # lane-dense HBM stores
    WP = W + 2
    FL = (H + 4) * WP
    xp = jnp.pad(x.astype(jnp.bfloat16),
                 ((0, 0), (2, 2), (1, 1), (0, Cin_p - Cin))).reshape(N, FL, Cin_p)
    wp = jnp.pad(w, ((0, 0), (0, 0), (0, Cin_p - Cin), (0, Cout_p - Cout)))
    wp = wp.reshape(9 * Cin_p, Cout_p).astype(jnp.bfloat16)
    bp = jnp.pad(b.astype(jnp.float32), (0, Cout_p - Cout)).reshape(1, Cout_p)

    out = pl.pallas_call(
        functools.partial(_conv3x3_kernel, H=H, W=W, cin=Cin_p, relu=relu),
        out_shape=jax.ShapeDtypeStruct((N, H * WP, Cout_p), jnp.bfloat16),
        grid=(N,),
        in_specs=[
            pl.BlockSpec((None, FL, Cin_p), lambda n: (n, 0, 0)),
            pl.BlockSpec((9 * Cin_p, Cout_p), lambda n: (0, 0)),
            pl.BlockSpec((1, Cout_p), lambda n: (0, 0)),
        ],
        out_specs=pl.BlockSpec((None, H * WP, Cout_p), lambda n: (n, 0, 0)),
        scratch_shapes=[pltpu.VMEM((FL, Cin_p), jnp.float32)],
        compiler_params=pltpu.CompilerParams(dimension_semantics=("parallel",)),
    )(xp, wp, bp)
    return out.reshape(N, H, WP, Cout_p)[:, :, 1:W + 1, :Cout]


# --------------------------------------------------------------------------
# Fused RDB kernel: 6 dense 3x3 convs (growing concat kept in VMEM) + 1x1 LFF
# + residual, all in one pallas_call per image.
# --------------------------------------------------------------------------

def _rdb_kernel(x_ref, mask_ref, w_ref, b_ref, wl_ref, bl_ref, o_ref, t_ref,
                *, H, W, G0, G, C):
    WP = W + 2
    L = H * WP
    OFF = 2 * WP
    CG = G0 + C * G
    # init the dense-concat buffer: zeros (so pad rows/cols of every channel are
    # zero, matching per-conv zero padding) then copy the input features in.
    t_ref[...] = jnp.zeros_like(t_ref)
    t_ref[:, 0:G0] = x_ref[...].astype(jnp.float32)
    cmask = mask_ref[OFF:OFF + L, :]           # zero the pad columns
    for c in range(C):
        cin = G0 + c * G
        acc = jnp.zeros((L, G), jnp.float32) + b_ref[c:c + 1, :]
        for dh in range(3):
            for dw in range(3):
                start = OFF + (dh - 1) * WP + (dw - 1)
                r0 = (c * 9 + dh * 3 + dw) * CG
                acc += jnp.dot(
                    t_ref[start:start + L, 0:cin].astype(jnp.bfloat16),
                    w_ref[r0:r0 + cin, :],
                    preferred_element_type=jnp.float32)
        out = jnp.maximum(acc, 0.0) * cmask
        t_ref[OFF:OFF + L, G0 + c * G:G0 + (c + 1) * G] = out
    # 1x1 LFF over the whole padded extent + fused residual; mask keeps the pad
    # ring at zero so the output is directly consumable by the next RDB.
    res = jnp.dot(t_ref[...].astype(jnp.bfloat16), wl_ref[...],
                  preferred_element_type=jnp.float32) + bl_ref[...]
    res = res + t_ref[:, 0:G0]
    o_ref[...] = (res * mask_ref[...]).astype(o_ref.dtype)


def _make_mask(H, W):
    WP = W + 2
    rows = jnp.arange(H + 4)
    cols = jnp.arange(WP)
    rmask = (rows >= 2) & (rows < H + 2)
    cmask = (cols >= 1) & (cols <= W)
    m = (rmask[:, None] & cmask[None, :]).astype(jnp.float32)
    return m.reshape((H + 4) * WP, 1)


def rdb_stack(x, rdb_params):
    """Run D fused RDBs.  x: (N,H,W,G0) bf16 (half-res features).
    Returns list of D outputs in padded-flat layout (N, (H+4)*(W+2), G0)."""
    N, H, W, G0 = x.shape
    C, G = rdb_params[0]['b_pack'].shape
    CG = G0 + C * G
    WP = W + 2
    FL = (H + 4) * WP
    xp = jnp.pad(x, ((0, 0), (2, 2), (1, 1), (0, 0))).reshape(N, FL, G0)
    mask = _make_mask(H, W)

    rdb_call = jax.jit(pl.pallas_call(
        functools.partial(_rdb_kernel, H=H, W=W, G0=G0, G=G, C=C),
        out_shape=jax.ShapeDtypeStruct((N, FL, G0), jnp.bfloat16),
        grid=(N,),
        in_specs=[
            pl.BlockSpec((None, FL, G0), lambda n: (n, 0, 0)),   # features
            pl.BlockSpec((FL, 1), lambda n: (0, 0)),             # pad mask
            pl.BlockSpec((C * 9 * CG, G), lambda n: (0, 0)),     # packed conv weights
            pl.BlockSpec((C, G), lambda n: (0, 0)),              # conv biases
            pl.BlockSpec((CG, G0), lambda n: (0, 0)),            # LFF weight
            pl.BlockSpec((1, G0), lambda n: (0, 0)),             # LFF bias
        ],
        out_specs=pl.BlockSpec((None, FL, G0), lambda n: (n, 0, 0)),
        scratch_shapes=[pltpu.VMEM((FL, CG), jnp.float32)],
        compiler_params=pltpu.CompilerParams(dimension_semantics=("parallel",)),
    ))

    outs = []
    cur = xp
    for rp in rdb_params:
        cur = rdb_call(cur, mask, rp['w_pack'], rp['b_pack'],
                       rp['w_lff'], rp['b_lff'])
        outs.append(cur)
    return outs, WP


# --------------------------------------------------------------------------
# Layout glue (plain JAX): im2col for the two stride-2 stem convs, pixel
# shuffle, channel slicing / concatenation, residual adds of tiny heads.
# --------------------------------------------------------------------------

def _im2col(x, k, stride, pad):
    N, H, W, C = x.shape
    xp = jnp.pad(x, ((0, 0), (pad, pad), (pad, pad), (0, 0)))
    Ho = (H + 2 * pad - k) // stride + 1
    Wo = (W + 2 * pad - k) // stride + 1
    cols = []
    for kh in range(k):
        for kw in range(k):
            patch = lax.slice(
                xp, (0, kh, kw, 0),
                (N, kh + (Ho - 1) * stride + 1, kw + (Wo - 1) * stride + 1, C),
                (1, stride, stride, 1))
            cols.append(patch)
    patches = jnp.concatenate(cols, axis=-1)
    return patches.reshape(N * Ho * Wo, k * k * C), Ho, Wo


def conv3x3_s2(x, w, b):
    N, H, W, Cin = x.shape
    Cout = w.shape[-1]
    patches, Ho, Wo = _im2col(x, 3, 2, 1)
    out = matmul_bias(patches, w.reshape(9 * Cin, Cout), b)
    return out.reshape(N, Ho, Wo, Cout)


def conv1x1(x, w, b):
    N, H, W, Cin = x.shape
    Cout = w.shape[-1]
    out = matmul_bias(x.reshape(N * H * W, Cin), w.reshape(Cin, Cout), b)
    return out.reshape(N, H, W, Cout)


def pixel_shuffle(x, r):
    N, H, W, Crr = x.shape
    Cc = Crr // (r * r)
    x = x.reshape(N, H, W, Cc, r, r)
    x = jnp.transpose(x, (0, 1, 4, 2, 5, 3))
    return x.reshape(N, H * r, W * r, Cc)


# ----------------------------- parameter init ------------------------------

def _conv_params(key, k, cin, cout):
    kw, kb = jax.random.split(key)
    fan_in = k * k * cin
    w = jax.random.normal(kw, (k, k, cin, cout), jnp.float32) / jnp.sqrt(fan_in)
    b = jax.random.normal(kb, (cout,), jnp.float32) * 0.01
    return w, b


def _pack_rdb(key, G0, G, C):
    """Pack one RDB's weights for the fused kernel: dense-conv weights padded to
    a common Cin=G0+C*G and flattened to (C*9*(G0+C*G), G)."""
    keys = jax.random.split(key, C + 1)
    CG = G0 + C * G
    w_list, b_list = [], []
    for c in range(C):
        cin = G0 + c * G
        w, b = _conv_params(keys[c], 3, cin, G)
        wpad = jnp.pad(w, ((0, 0), (0, 0), (0, CG - cin), (0, 0)))
        w_list.append(wpad.reshape(9, CG, G))
        b_list.append(b)
    w_pack = jnp.stack(w_list, 0).reshape(C * 9 * CG, G).astype(jnp.bfloat16)
    b_pack = jnp.stack(b_list, 0).astype(jnp.float32)
    wl, bl = _conv_params(keys[C], 1, CG, G0)
    return {'w_pack': w_pack, 'b_pack': b_pack,
            'w_lff': wl.reshape(CG, G0).astype(jnp.bfloat16),
            'b_lff': bl.reshape(1, G0).astype(jnp.float32)}


def init_rdn_params(key, G0=128, D=20, C=6, G=32):
    keys = iter(jax.random.split(key, 8 + D))
    p = {}
    p['sfe1'] = _conv_params(next(keys), 3, 5, G0 // 2)      # SFENet1_input5
    p['sfe2'] = _conv_params(next(keys), 3, G0 // 2, G0)     # SFENet2 (stride 2)
    p['rdbs'] = [_pack_rdb(next(keys), G0, G, C) for _ in range(D)]
    w, b = _conv_params(next(keys), 1, D * G0, G0)
    p['gff1'] = (w.reshape(D * G0, G0), b)                   # GFF 1x1
    p['gff2'] = _conv_params(next(keys), 3, G0, G0)          # GFF 3x3
    p['up1'] = _conv_params(next(keys), 3, G0 // 2, G * 4)   # UPNet conv (r=2)
    p['up2'] = _conv_params(next(keys), 3, G, 1)             # UPNet final conv
    p['chroma'] = _conv_params(next(keys), 3, 64, 2)
    p['down'] = _conv_params(next(keys), 3, 5, 5)            # stride 2
    return p


# -------------------------------- forward ----------------------------------

def rdn_forward(params, x_nchw, D=20, C=6):
    x_nhwc = jnp.transpose(x_nchw, (0, 2, 3, 1)).astype(jnp.float32)
    xb = x_nhwc.astype(jnp.bfloat16)
    N, H, W, _ = x_nhwc.shape
    H2, W2 = H // 2, W // 2

    f1 = conv3x3(xb, *params['sfe1'])                 # (N,H,W,64)
    f2 = conv3x3_s2(f1, *params['sfe2'])              # (N,H2,W2,128)

    rdb_outs, WP2 = rdb_stack(f2, params['rdbs'])     # D x (N,(H2+4)*(W2+2),128)
    G0 = f2.shape[-1]

    def unpad(t):
        return t.reshape(N, H2 + 4, WP2, G0)[:, 2:H2 + 2, 1:W2 + 1, :]

    gcat = jnp.concatenate([unpad(t) for t in rdb_outs], axis=-1)
    g = conv1x1(gcat, *params['gff1'])                # 1x1, K = D*G0 = 2560
    g = conv3x3(g, *params['gff2'])                   # 3x3

    y_feat = g[..., :G0 // 2]
    uv_feat = g[..., G0 // 2:]

    u = conv3x3(y_feat, *params['up1'])               # (N,H2,W2,128)
    u = pixel_shuffle(u, 2)                           # (N,H,W,32)
    u = conv3x3(u, *params['up2'])                    # (N,H,W,1)
    outY = u[..., 0].astype(jnp.float32) + x_nhwc[..., 0]

    uv = conv3x3(uv_feat, *params['chroma'])          # (N,H2,W2,2)
    w_down = params['down'][0][..., 1:3]              # only chroma channels 1:3
    b_down = params['down'][1][1:3]
    chroma_org = conv3x3_s2(xb, w_down, b_down)       # (N,H2,W2,2)
    outUV = uv.astype(jnp.float32) + chroma_org.astype(jnp.float32)

    return outY, jnp.transpose(outUV, (0, 3, 1, 2))


# --------------------------------- main -------------------------------------

if __name__ == "__main__":
    # args: RDNconfig='A' -> (D, C, G) = (20, 6, 32); args.G0 = 64 -> G0 = 128
    # (G0=128 is required by the hard-coded 0:64 / 64: split + Conv2d(64, 2)).
    D, C, G, G0 = 20, 6, 32, 128

    key = jax.random.PRNGKey(0)
    kp, kx = jax.random.split(key)
    params = init_rdn_params(kp, G0=G0, D=D, C=C, G=G)

    # input like PyTorch: NCHW, 5 channels, even spatial size
    x = jax.random.normal(kx, (2, 5, 16, 16), jnp.float32)

    outY, outUV = rdn_forward(params, x, D=D, C=C)
    jax.block_until_ready(outY)
    jax.block_until_ready(outUV)

    assert outY.shape == (2, 16, 16), outY.shape        # luma at input resolution
    assert outUV.shape == (2, 2, 8, 8), outUV.shape     # 2 chroma at half res
    assert jnp.isfinite(outY).all() and jnp.isfinite(outUV).all()
    print("KERNEL_OK")
</pallas_src>

<mosaic_0001>
module attributes {stable_mosaic.version = 11 : i64} {
  func.func @_conv3x3_kernel(%arg0: i32, %arg1: memref<1x360x8xbf16, #tpu.memory_space<vmem>>, %arg2: memref<72x128xbf16, #tpu.memory_space<vmem>>, %arg3: memref<1x128xf32, #tpu.memory_space<vmem>>, %arg4: memref<1x288x128xbf16, #tpu.memory_space<vmem>>, %arg5: memref<360x8xf32, #tpu.memory_space<vmem>>) attributes {dimension_semantics = [#tpu.dimension_semantics<parallel>], iteration_bounds = array<i64: 2>, scalar_prefetch = 0 : i64, scratch_operands = 1 : i64, tpu.core_type = #tpu.core_type<tc>, window_params = [{transform_indices = @transform_0, window_bounds = array<i64: 1, 360, 8>}, {pipeline_mode = #tpu.pipeline_mode<synchronous>, transform_indices = @transform_1, window_bounds = array<i64: 72, 128>}, {pipeline_mode = #tpu.pipeline_mode<synchronous>, transform_indices = @transform_2, window_bounds = array<i64: 1, 128>}, {transform_indices = @transform_3, window_bounds = array<i64: 1, 288, 128>}]} {
    %c0 = arith.constant 0 : index
    %c0_0 = arith.constant 0 : index
    %c0_1 = arith.constant 0 : index
    %0 = vector.load %arg1[%c0, %c0_0, %c0_1] : memref<1x360x8xbf16, #tpu.memory_space<vmem>>, vector<1x360x8xbf16>
    %1 = vector.shape_cast %0 : vector<1x360x8xbf16> to vector<360x8xbf16>
    %2 = arith.extf %1 : vector<360x8xbf16> to vector<360x8xf32>
    %c0_2 = arith.constant 0 : index
    %c0_3 = arith.constant 0 : index
    %3 = vector.load %arg5[%c0_2, %c0_3] : memref<360x8xf32, #tpu.memory_space<vmem>>, vector<360x8xf32>
    tpu.vector_store %arg5[%c0_2, %c0_3], %2 {strides = array<i32>} : memref<360x8xf32, #tpu.memory_space<vmem>>, vector<360x8xf32>,
    %cst = arith.constant 0.000000e+00 : f32
    %4 = vector.broadcast %cst : f32 to vector<288x128xf32>
    %c0_4 = arith.constant 0 : index
    %c0_5 = arith.constant 0 : index
    %5 = vector.load %arg3[%c0_4, %c0_5] : memref<1x128xf32, #tpu.memory_space<vmem>>, vector<1x128xf32>
    %6 = vector.broadcast %5 : vector<1x128xf32> to vector<288x128xf32>
    %7 = arith.addf %4, %6 : vector<288x128xf32>
    %c17 = arith.constant 17 : index
    %c0_6 = arith.constant 0 : index
    %8 = vector.load %arg5[%c17, %c0_6] : memref<360x8xf32, #tpu.memory_space<vmem>>, vector<288x8xf32>
    %9 = arith.truncf %8 : vector<288x8xf32> to vector<288x8xbf16>
    %c0_7 = arith.constant 0 : index
    %c0_8 = arith.constant 0 : index
    %10 = vector.load %arg2[%c0_7, %c0_8] : memref<72x128xbf16, #tpu.memory_space<vmem>>, vector<8x128xbf16>
    %cst_9 = arith.constant dense<0.000000e+00> : vector<288x128xf32>
    %11 = tpu.matmul %9, %10, %cst_9 {dimension_numbers = #tpu.dot_dimension_numbers<[1], [0], [0], [1], [0, 0, 1, 1], [], []>} : vector<288x8xbf16>, vector<8x128xbf16>, vector<288x128xf32> -> vector<288x128xf32>
    %12 = arith.addf %7, %11 : vector<288x128xf32>
    %c18 = arith.constant 18 : index
    %c0_10 = arith.constant 0 : index
    %13 = vector.load %arg5[%c18, %c0_10] : memref<360x8xf32, #tpu.memory_space<vmem>>, vector<288x8xf32>
    %14 = arith.truncf %13 : vector<288x8xf32> to vector<288x8xbf16>
    %c8 = arith.constant 8 : index
    %c0_11 = arith.constant 0 : index
    %15 = vector.load %arg2[%c8, %c0_11] : memref<72x128xbf16, #tpu.memory_space<vmem>>, vector<8x128xbf16>
    %cst_12 = arith.constant dense<0.000000e+00> : vector<288x128xf32>
    %16 = tpu.matmul %14, %15, %cst_12 {dimension_numbers = #tpu.dot_dimension_numbers<[1], [0], [0], [1], [0, 0, 1, 1], [], []>} : vector<288x8xbf16>, vector<8x128xbf16>, vector<288x128xf32> -> vector<288x128xf32>
    %17 = arith.addf %12, %16 : vector<288x128xf32>
    %c19 = arith.constant 19 : index
    %c0_13 = arith.constant 0 : index
    %18 = vector.load %arg5[%c19, %c0_13] : memref<360x8xf32, #tpu.memory_space<vmem>>, vector<288x8xf32>
    %19 = arith.truncf %18 : vector<288x8xf32> to vector<288x8xbf16>
    %c16 = arith.constant 16 : index
    %c0_14 = arith.constant 0 : index
    %20 = vector.load %arg2[%c16, %c0_14] : memref<72x128xbf16, #tpu.memory_space<vmem>>, vector<8x128xbf16>
    %cst_15 = arith.constant dense<0.000000e+00> : vector<288x128xf32>
    %21 = tpu.matmul %19, %20, %cst_15 {dimension_numbers = #tpu.dot_dimension_numbers<[1], [0], [0], [1], [0, 0, 1, 1], [], []>} : vector<288x8xbf16>, vector<8x128xbf16>, vector<288x128xf32> -> vector<288x128xf32>
    %22 = arith.addf %17, %21 : vector<288x128xf32>
    %c35 = arith.constant 35 : index
    %c0_16 = arith.constant 0 : index
    %23 = vector.load %arg5[%c35, %c0_16] : memref<360x8xf32, #tpu.memory_space<vmem>>, vector<288x8xf32>
    %24 = arith.truncf %23 : vector<288x8xf32> to vector<288x8xbf16>
    %c24 = arith.constant 24 : index
    %c0_17 = arith.constant 0 : index
    %25 = vector.load %arg2[%c24, %c0_17] : memref<72x128xbf16, #tpu.memory_space<vmem>>, vector<8x128xbf16>
    %cst_18 = arith.constant dense<0.000000e+00> : vector<288x128xf32>
    %26 = tpu.matmul %24, %25, %cst_18 {dimension_numbers = #tpu.dot_dimension_numbers<[1], [0], [0], [1], [0, 0, 1, 1], [], []>} : vector<288x8xbf16>, vector<8x128xbf16>, vector<288x128xf32> -> vector<288x128xf32>
    %27 = arith.addf %22, %26 : vector<288x128xf32>
    %c36 = arith.constant 36 : index
    %c0_19 = arith.constant 0 : index
    %28 = vector.load %arg5[%c36, %c0_19] : memref<360x8xf32, #tpu.memory_space<vmem>>, vector<288x8xf32>
    %29 = arith.truncf %28 : vector<288x8xf32> to vector<288x8xbf16>
    %c32 = arith.constant 32 : index
    %c0_20 = arith.constant 0 : index
    %30 = vector.load %arg2[%c32, %c0_20] : memref<72x128xbf16, #tpu.memory_space<vmem>>, vector<8x128xbf16>
    %cst_21 = arith.constant dense<0.000000e+00> : vector<288x128xf32>
    %31 = tpu.matmul %29, %30, %cst_21 {dimension_numbers = #tpu.dot_dimension_numbers<[1], [0], [0], [1], [0, 0, 1, 1], [], []>} : vector<288x8xbf16>, vector<8x128xbf16>, vector<288x128xf32> -> vector<288x128xf32>
    %32 = arith.addf %27, %31 : vector<288x128xf32>
    %c37 = arith.constant 37 : index
    %c0_22 = arith.constant 0 : index
    %33 = vector.load %arg5[%c37, %c0_22] : memref<360x8xf32, #tpu.memory_space<vmem>>, vector<288x8xf32>
    %34 = arith.truncf %33 : vector<288x8xf32> to vector<288x8xbf16>
    %c40 = arith.constant 40 : index
    %c0_23 = arith.constant 0 : index
    %35 = vector.load %arg2[%c40, %c0_23] : memref<72x128xbf16, #tpu.memory_space<vmem>>, vector<8x128xbf16>
    %cst_24 = arith.constant dense<0.000000e+00> : vector<288x128xf32>
    %36 = tpu.matmul %34, %35, %cst_24 {dimension_numbers = #tpu.dot_dimension_numbers<[1], [0], [0], [1], [0, 0, 1, 1], [], []>} : vector<288x8xbf16>, vector<8x128xbf16>, vector<288x128xf32> -> vector<288x128xf32>
    %37 = arith.addf %32, %36 : vector<288x128xf32>
    %c53 = arith.constant 53 : index
    %c0_25 = arith.constant 0 : index
    %38 = vector.load %arg5[%c53, %c0_25] : memref<360x8xf32, #tpu.memory_space<vmem>>, vector<288x8xf32>
    %39 = arith.truncf %38 : vector<288x8xf32> to vector<288x8xbf16>
    %c48 = arith.constant 48 : index
    %c0_26 = arith.constant 0 : index
    %40 = vector.load %arg2[%c48, %c0_26] : memref<72x128xbf16, #tpu.memory_space<vmem>>, vector<8x128xbf16>
    %cst_27 = arith.constant dense<0.000000e+00> : vector<288x128xf32>
    %41 = tpu.matmul %39, %40, %cst_27 {dimension_numbers = #tpu.dot_dimension_numbers<[1], [0], [0], [1], [0, 0, 1, 1], [], []>} : vector<288x8xbf16>, vector<8x128xbf16>, vector<288x128xf32> -> vector<288x128xf32>
    %42 = arith.addf %37, %41 : vector<288x128xf32>
    %c54 = arith.constant 54 : index
    %c0_28 = arith.constant 0 : index
    %43 = vector.load %arg5[%c54, %c0_28] : memref<360x8xf32, #tpu.memory_space<vmem>>, vector<288x8xf32>
    %44 = arith.truncf %43 : vector<288x8xf32> to vector<288x8xbf16>
    %c56 = arith.constant 56 : index
    %c0_29 = arith.constant 0 : index
    %45 = vector.load %arg2[%c56, %c0_29] : memref<72x128xbf16, #tpu.memory_space<vmem>>, vector<8x128xbf16>
    %cst_30 = arith.constant dense<0.000000e+00> : vector<288x128xf32>
    %46 = tpu.matmul %44, %45, %cst_30 {dimension_numbers = #tpu.dot_dimension_numbers<[1], [0], [0], [1], [0, 0, 1, 1], [], []>} : vector<288x8xbf16>, vector<8x128xbf16>, vector<288x128xf32> -> vector<288x128xf32>
    %47 = arith.addf %42, %46 : vector<288x128xf32>
    %c55 = arith.constant 55 : index
    %c0_31 = arith.constant 0 : index
    %48 = vector.load %arg5[%c55, %c0_31] : memref<360x8xf32, #tpu.memory_space<vmem>>, vector<288x8xf32>
    %49 = arith.truncf %48 : vector<288x8xf32> to vector<288x8xbf16>
    %c64 = arith.constant 64 : index
    %c0_32 = arith.constant 0 : index
    %50 = vector.load %arg2[%c64, %c0_32] : memref<72x128xbf16, #tpu.memory_space<vmem>>, vector<8x128xbf16>
    %cst_33 = arith.constant dense<0.000000e+00> : vector<288x128xf32>
    %51 = tpu.matmul %49, %50, %cst_33 {dimension_numbers = #tpu.dot_dimension_numbers<[1], [0], [0], [1], [0, 0, 1, 1], [], []>} : vector<288x8xbf16>, vector<8x128xbf16>, vector<288x128xf32> -> vector<288x128xf32>
    %52 = arith.addf %47, %51 : vector<288x128xf32>
    %53 = arith.truncf %52 : vector<288x128xf32> to vector<288x128xbf16>
    %c0_34 = arith.constant 0 : index
    %c0_35 = arith.constant 0 : index
    %c0_36 = arith.constant 0 : index
    %54 = vector.load %arg4[%c0_34, %c0_35, %c0_36] : memref<1x288x128xbf16, #tpu.memory_space<vmem>>, vector<1x288x128xbf16>
    %55 = vector.shape_cast %54 : vector<1x288x128xbf16> to vector<288x128xbf16>
    %56 = vector.shape_cast %53 : vector<288x128xbf16> to vector<1x288x128xbf16>
    tpu.vector_store %arg4[%c0_34, %c0_35, %c0_36], %56 {strides = array<i32>} : memref<1x288x128xbf16, #tpu.memory_space<vmem>>, vector<1x288x128xbf16>,
    return
  }
  func.func @transform_0(%arg0: i32) -> (i32, i32, i32) {
    %c0_i32 = arith.constant 0 : i32
    %c0_i32_0 = arith.constant 0 : i32
    %c0_i32_1 = arith.constant 0 : i32
    return %arg0, %c0_i32, %c0_i32_0 : i32, i32, i32
  }
  func.func @transform_1(%arg0: i32) -> (i32, i32) {
    %c0_i32 = arith.constant 0 : i32
    %c0_i32_0 = arith.constant 0 : i32
    %c0_i32_1 = arith.constant 0 : i32
    return %c0_i32, %c0_i32_0 : i32, i32
  }
  func.func @transform_2(%arg0: i32) -> (i32, i32) {
    %c0_i32 = arith.constant 0 : i32
    %c0_i32_0 = arith.constant 0 : i32
    %c0_i32_1 = arith.constant 0 : i32
    return %c0_i32, %c0_i32_0 : i32, i32
  }
  func.func @transform_3(%arg0: i32) -> (i32, i32, i32) {
    %c0_i32 = arith.constant 0 : i32
    %c0_i32_0 = arith.constant 0 : i32
    %c0_i32_1 = arith.constant 0 : i32
    return %arg0, %c0_i32, %c0_i32_0 : i32, i32, i32
  }
}

</mosaic_0001>

<llo_original>
// kernel: conv3x3.1
$region0: #{conv3x3.1}
  #allocation0 [shape = 'u32[]', space=smem, size = 0x4, offset = 0x4, fixed_abs, tag = 'smem constant byte address 0x4 - core index']
  #allocation1 [shape = 'u32[144,128]{1,0:T(1,128)}', space=vmem, size = 0x12000, scoped, tag = 'internal scratch']
  #allocation2 [shape = 'f32[360,8]{1,0:T(8,128)}', space=vmem, size = 0x2d000, scoped, tag = 'scratch operand']
  %s0 = inlined_call_operand.vmem [shape: bf16[2,360,8], index: 0, kind: input, shape index: {}]
  %s1 = inlined_call_operand.vmem [shape: bf16[72,128], index: 1, kind: input, shape index: {}]
  %s2 = inlined_call_operand.vmem [shape: f32[1,128], index: 2, kind: input, shape index: {}]
  %s3 = inlined_call_operand.vmem [shape: bf16[2,288,128], index: 3, kind: output, shape index: {}]
  %s4 = sld [smem:[#allocation0]]
  $region45: #{conv3x3.1} parent=0
    _
  %s6 = ssub.s32 1, %s4
  %s7 = scalar_select 0, %s6, %s4
  loop: start=0, step=1, limit=4
  $region2: #{conv3x3.1} parent=0 // loop_pre_header
    _
  $region3: #{conv3x3.1} parent=0 // loop_header
    %s9 = sphi 0, %s13
    %p10 = scmp.ge.s32.totalorder %s9, 4
    %s19 = sphi 0, %s21
    %s22 = sphi 0, %s19
    %s23 = sphi 0, %s22
    %s39 = sphi 0, %s23
    %s43 = sphi 0, %s43
    %s45 = sphi 0, %s43
    %s46 = sphi 0, %s45
    %s60 = sphi 0, %s46
    %s64 = sphi 0, %s64
    %s66 = sphi 0, %s64
    %s67 = sphi 0, %s66
    %s81 = sphi 0, %s67
    %s87 = sphi 0, %s89
    %s90 = sphi 0, %s87
    %s91 = sphi 0, %s90
    %s107 = sphi 0, %s91
  $region4: #{conv3x3.1} parent=0 // loop_header_branch
    %12 = sbr.rel (%p10) target = $region8
  $region5: #{conv3x3.1} parent=0 // loop_body
    %s14 = ssub.s32 %s9, 1
    %s15 = ssub.s32 %s9, 2
    %s16 = sadd.s32 %s9, 1
    %s17 = ssub.s32 %s9, %s16
    %p18 = scmp.eq.s32.totalorder %s17, 0
    %s20 = sadd.s32 %s19, 1
    %s21 = scalar_select %p18, %s19, %s20
    %p24 = pneg %p18
    %p25 = scmp.eq.s32.totalorder %s9, 1
    %p26 = por %p24, %p25
    %p27 = scmp.ne.s32.totalorder %s19, %s22
    %p28 = scmp.eq.s32.totalorder %s9, 0
    %p29 = por %p27, %p28
    %p30 = scmp.ne.s32.totalorder %s19, %s22
    %p31 = scmp.eq.s32.totalorder %s14, 1
    %p32 = por %p30, %p31
    %p33 = scmp.ne.s32.totalorder %s22, %s23
    %p34 = scmp.eq.s32.totalorder %s14, 0
    %p35 = por %p33, %p34
    %p36 = scmp.ne.s32.totalorder %s22, %s23
    %p37 = scmp.eq.s32.totalorder %s15, 1
    %p38 = por %p36, %p37
    %p40 = scmp.ne.s32.totalorder %s23, %s39
    %p41 = scmp.eq.s32.totalorder %s15, 0
    %p42 = por %p40, %p41
    %s44 = sadd.s32 %s43, 1
    %p47 = scmp.eq.s32.totalorder %s9, 1
    %p48 = scmp.ne.s32.totalorder %s43, %s45
    %p49 = scmp.eq.s32.totalorder %s9, 0
    %p50 = por %p48, %p49
    %p51 = scmp.ne.s32.totalorder %s43, %s45
    %p52 = scmp.eq.s32.totalorder %s14, 1
    %p53 = por %p51, %p52
    %p54 = scmp.ne.s32.totalorder %s45, %s46
    %p55 = scmp.eq.s32.totalorder %s14, 0
    %p56 = por %p54, %p55
    %p57 = scmp.ne.s32.totalorder %s45, %s46
    %p58 = scmp.eq.s32.totalorder %s15, 1
    %p59 = por %p57, %p58
    %p61 = scmp.ne.s32.totalorder %s46, %s60
    %p62 = scmp.eq.s32.totalorder %s15, 0
    %p63 = por %p61, %p62
    %s65 = sadd.s32 %s64, 1
    %p68 = scmp.eq.s32.totalorder %s9, 1
    %p69 = scmp.ne.s32.totalorder %s64, %s66
    %p70 = scmp.eq.s32.totalorder %s9, 0
    %p71 = por %p69, %p70
    %p72 = scmp.ne.s32.totalorder %s64, %s66
    %p73 = scmp.eq.s32.totalorder %s14, 1
    %p74 = por %p72, %p73
    %p75 = scmp.ne.s32.totalorder %s66, %s67
    %p76 = scmp.eq.s32.totalorder %s14, 0
    %p77 = por %p75, %p76
    %p78 = scmp.ne.s32.totalorder %s66, %s67
    %p79 = scmp.eq.s32.totalorder %s15, 1
    %p80 = por %p78, %p79
    %p82 = scmp.ne.s32.totalorder %s67, %s81
    %p83 = scmp.eq.s32.totalorder %s15, 0
    %p84 = por %p82, %p83
    %s85 = ssub.s32 %s9, %s16
    %p86 = scmp.eq.s32.totalorder %s85, 0
    %s88 = sadd.s32 %s87, 1
    %s89 = scalar_select %p86, %s87, %s88
    %p92 = pneg %p86
    %p93 = scmp.eq.s32.totalorder %s9, 1
    %p94 = por %p92, %p93
    %p95 = scmp.ne.s32.totalorder %s87, %s90
    %p96 = scmp.eq.s32.totalorder %s9, 0
    %p97 = por %p95, %p96
    %p98 = scmp.ne.s32.totalorder %s87, %s90
    %p99 = scmp.eq.s32.totalorder %s14, 1
    %p100 = por %p98, %p99
    %p101 = scmp.ne.s32.totalorder %s90, %s91
    %p102 = scmp.eq.s32.totalorder %s14, 0
    %p103 = por %p101, %p102
    %p104 = scmp.ne.s32.totalorder %s90, %s91
    %p105 = scmp.eq.s32.totalorder %s15, 1
    %p106 = por %p104, %p105
    %p108 = scmp.ne.s32.totalorder %s91, %s107
    %p109 = scmp.eq.s32.totalorder %s15, 0
    %p110 = por %p108, %p109
    %p111 = scmp.le.s32.totalorder 1, %s9
    %p112 = scmp.lt.s32.totalorder %s9, 3
    %p113 = pnand %p111, %p112
    %p114 = pneg %p113
    // Predicated region
    $region9: #{conv3x3.1} parent=5 // pred_check
      _
    $region10: #{conv3x3.1} parent=5 // pred_check_branch
      %116 = sbr.rel (%p113) target = $region12
    $region11: #{conv3x3.1} parent=5 // pred_region
      %s117 = ssub.s32 %s9, 1
      // Predicated region
      $region13: #{conv3x3.1} parent=11 // pred_check
        %p118 = pneg %p56
      $region14: #{conv3x3.1} parent=11 // pred_check_branch
        %120 = sbr.rel (%p118) target = $region16
      $region15: #{conv3x3.1} parent=11 // pred_region
        _
      $region16: #{conv3x3.1} parent=11 // pred_fallthru
        _
      // Predicated region
      $region17: #{conv3x3.1} parent=11 // pred_check
        %p121 = pneg %p77
      $region18: #{conv3x3.1} parent=11 // pred_check_branch
        %123 = sbr.rel (%p121) target = $region20
      $region19: #{conv3x3.1} parent=11 // pred_region
        _
      $region20: #{conv3x3.1} parent=11 // pred_fallthru
        _
    $region12: #{conv3x3.1} parent=5 // pred_fallthru
      _
    %p124 = scmp.lt.s32.totalorder %s9, 2
    // Predicated region
    $region21: #{conv3x3.1} parent=5 // pred_check
      %p125 = pneg %p124
    $region22: #{conv3x3.1} parent=5 // pred_check_branch
      %127 = sbr.rel (%p125) target = $region24
    $region23: #{conv3x3.1} parent=5 // pred_region
      // Predicated region
      $region25: #{conv3x3.1} parent=23 // pred_check
        %p128 = pneg %p29
      $region26: #{conv3x3.1} parent=23 // pred_check_branch
        %130 = sbr.rel (%p128) target = $region28
      $region27: #{conv3x3.1} parent=23 // pred_region
        %p131 = scmp.lt.s32.totalorder %s9, 1
        %s132 = scalar_select %p131, %s9, 1
        %s133 = smul.addr %s132, 45
        %s134 = smul.addr %s133, 4
        %s135 = scalar_lea.vmem %s0, %s134
      $region28: #{conv3x3.1} parent=23 // pred_fallthru
        _
    $region24: #{conv3x3.1} parent=5 // pred_fallthru
      _
    %p136 = scmp.le.s32.totalorder 1, %s9
    %p137 = scmp.lt.s32.totalorder %s9, 3
    %p138 = pnand %p136, %p137
    %p139 = pneg %p138
    // Predicated region
    $region29: #{conv3x3.1} parent=5 // pred_check
      _
    $region30: #{conv3x3.1} parent=5 // pred_check_branch
      %141 = sbr.rel (%p138) target = $region32
    $region31: #{conv3x3.1} parent=5 // pred_region
      %s142 = ssub.s32 %s9, 1
      %p143 = scmp.lt.s32.totalorder %s14, 1
      %s144 = scalar_select %p143, %s14, 1
      %s145 = smul.addr %s144, 45
      %s146 = smul.addr %s145, 4
      %s147 = scalar_lea.vmem %s0, %s146
      %p148 = pneg %p35
      %p149 = pneg %p32
      %p150 = pneg %p56
      %p151 = pneg %p53
      %p152 = pneg %p77
      %p153 = pneg %p74
      %p154 = pneg %p103
      %p155 = pneg %p100
      %p156 = scmp.lt.s32.totalorder %s14, 1
      %s157 = scalar_select %p156, %s14, 1
      %s158 = smul.addr %s157, 36
      %s159 = smul.addr %s158, 4
      %s160 = scalar_lea.vmem %s3, %s159
      %p161 = scmp.lt.s32.totalorder %s14, 1
      %s162 = scalar_select %p161, %s14, 1
      %s163 = smul.addr %s162, 45
      %s164 = smul.addr %s163, 4
      %s165 = scalar_lea.vmem %s0, %s164
      %p166 = scmp.lt.s32.totalorder %s14, 1
      %s167 = scalar_select %p166, %s14, 1
      %s168 = smul.addr %s167, 36
      %s169 = smul.addr %s168, 4
      %s170 = scalar_lea.vmem %s3, %s169
      %v172 = vld [vmem:[%s165] sm:$0xf]
      %v173 = vld [vmem:[%s165 + $0x4] sm:$0xf]
      %v174 = vld [vmem:[%s165 + $0x8] sm:$0xf]
      %v175 = vld [vmem:[%s165 + $0xc] sm:$0xf]
      %v176 = vld [vmem:[%s165 + $0x10] sm:$0xf]
      %v177 = vld [vmem:[%s165 + $0x14] sm:$0xf]
      %v178 = vld [vmem:[%s165 + $0x18] sm:$0xf]
      %v179 = vld [vmem:[%s165 + $0x1c] sm:$0xf]
      %v180 = vld [vmem:[%s165 + $0x20] sm:$0xf]
      %v181 = vld [vmem:[%s165 + $0x24] sm:$0xf]
      %v182 = vld [vmem:[%s165 + $0x28] sm:$0xf]
      %v183 = vld [vmem:[%s165 + $0x2c] sm:$0xf]
      %v184 = vld [vmem:[%s165 + $0x30] sm:$0xf]
      %v185 = vld [vmem:[%s165 + $0x34] sm:$0xf]
      %v186 = vld [vmem:[%s165 + $0x38] sm:$0xf]
      %v187 = vld [vmem:[%s165 + $0x3c] sm:$0xf]
      %v188 = vld [vmem:[%s165 + $0x40] sm:$0xf]
      %v189 = vld [vmem:[%s165 + $0x44] sm:$0xf]
      %v190 = vld [vmem:[%s165 + $0x48] sm:$0xf]
      %v191 = vld [vmem:[%s165 + $0x4c] sm:$0xf]
      %v192 = vld [vmem:[%s165 + $0x50] sm:$0xf]
      %v193 = vld [vmem:[%s165 + $0x54] sm:$0xf]
      %v194 = vld [vmem:[%s165 + $0x58] sm:$0xf]
      %v195 = vld [vmem:[%s165 + $0x5c] sm:$0xf]
      %v196 = vld [vmem:[%s165 + $0x60] sm:$0xf]
      %v197 = vld [vmem:[%s165 + $0x64] sm:$0xf]
      %v198 = vld [vmem:[%s165 + $0x68] sm:$0xf]
      %v199 = vld [vmem:[%s165 + $0x6c] sm:$0xf]
      %v200 = vld [vmem:[%s165 + $0x70] sm:$0xf]
      %v201 = vld [vmem:[%s165 + $0x74] sm:$0xf]
      %v202 = vld [vmem:[%s165 + $0x78] sm:$0xf]
      %v203 = vld [vmem:[%s165 + $0x7c] sm:$0xf]
      %v204 = vld [vmem:[%s165 + $0x80] sm:$0xf]
      %v205 = vld [vmem:[%s165 + $0x84] sm:$0xf]
      %v206 = vld [vmem:[%s165 + $0x88] sm:$0xf]
      %v207 = vld [vmem:[%s165 + $0x8c] sm:$0xf]
      %v208 = vld [vmem:[%s165 + $0x90] sm:$0xf]
      %v209 = vld [vmem:[%s165 + $0x94] sm:$0xf]
      %v210 = vld [vmem:[%s165 + $0x98] sm:$0xf]
      %v211 = vld [vmem:[%s165 + $0x9c] sm:$0xf]
      %v212 = vld [vmem:[%s165 + $0xa0] sm:$0xf]
      %v213 = vld [vmem:[%s165 + $0xa4] sm:$0xf]
      %v214 = vld [vmem:[%s165 + $0xa8] sm:$0xf]
      %v215 = vld [vmem:[%s165 + $0xac] sm:$0xf]
      %v216 = vld [vmem:[%s165 + $0xb0] sm:$0xf]
      %v217 = vunpack.c.l.bf16 %v172
      %v218 = vunpack.c.l.bf16 %v173
      %v219 = vunpack.c.l.bf16 %v174
      %v220 = vunpack.c.l.bf16 %v175
      %v221 = vunpack.c.l.bf16 %v176
      %v222 = vunpack.c.l.bf16 %v177
      %v223 = vunpack.c.l.bf16 %v178
      %v224 = vunpack.c.l.bf16 %v179
      %v225 = vunpack.c.l.bf16 %v180
      %v226 = vunpack.c.l.bf16 %v181
      %v227 = vunpack.c.l.bf16 %v182
      %v228 = vunpack.c.l.bf16 %v183
      %v229 = vunpack.c.l.bf16 %v184
      %v230 = vunpack.c.l.bf16 %v185
      %v231 = vunpack.c.l.bf16 %v186
      %v232 = vunpack.c.l.bf16 %v187
      %v233 = vunpack.c.l.bf16 %v188
      %v234 = vunpack.c.l.bf16 %v189
      %v235 = vunpack.c.l.bf16 %v190
      %v236 = vunpack.c.l.bf16 %v191
      %v237 = vunpack.c.l.bf16 %v192
      %v238 = vunpack.c.l.bf16 %v193
      %v239 = vunpack.c.l.bf16 %v194
      %v240 = vunpack.c.l.bf16 %v195
      %v241 = vunpack.c.l.bf16 %v196
      %v242 = vunpack.c.l.bf16 %v197
      %v243 = vunpack.c.l.bf16 %v198
      %v244 = vunpack.c.l.bf16 %v199
      %v245 = vunpack.c.l.bf16 %v200
      %v246 = vunpack.c.l.bf16 %v201
      %v247 = vunpack.c.l.bf16 %v202
      %v248 = vunpack.c.l.bf16 %v203
      %v249 = vunpack.c.l.bf16 %v204
      %v250 = vunpack.c.l.bf16 %v205
      %v251 = vunpack.c.l.bf16 %v206
      %v252 = vunpack.c.l.bf16 %v207
      %v253 = vunpack.c.l.bf16 %v208
      %v254 = vunpack.c.l.bf16 %v209
      %v255 = vunpack.c.l.bf16 %v210
      %v256 = vunpack.c.l.bf16 %v211
      %v257 = vunpack.c.l.bf16 %v212
      %v258 = vunpack.c.l.bf16 %v213
      %v259 = vunpack.c.l.bf16 %v214
      %v260 = vunpack.c.l.bf16 %v215
      %v261 = vunpack.c.l.bf16 %v216
      %vm262 = vcmask 64512
      %263 = vst.msk [vmem:[#allocation2] sm:$0xff] %vm262, %v217
      %264 = vst.msk [vmem:[#allocation2 + $0x8] sm:$0xff] %vm262, %v218
      %265 = vst.msk [vmem:[#allocation2 + $0x10] sm:$0xff] %vm262, %v219
      %266 = vst.msk [vmem:[#allocation2 + $0x18] sm:$0xff] %vm262, %v220
      %267 = vst.msk [vmem:[#allocation2 + $0x20] sm:$0xff] %vm262, %v221
      %268 = vst.msk [vmem:[#allocation2 + $0x28] sm:$0xff] %vm262, %v222
      %269 = vst.msk [vmem:[#allocation2 + $0x30] sm:$0xff] %vm262, %v223
      %270 = vst.msk [vmem:[#allocation2 + $0x38] sm:$0xff] %vm262, %v224
      %271 = vst.msk [vmem:[#allocation2 + $0x40] sm:$0xff] %vm262, %v225
      %272 = vst.msk [vmem:[#allocation2 + $0x48] sm:$0xff] %vm262, %v226
      %273 = vst.msk [vmem:[#allocation2 + $0x50] sm:$0xff] %vm262, %v227
      %274 = vst.msk [vmem:[#allocation2 + $0x58] sm:$0xff] %vm262, %v228
      %275 = vst.msk [vmem:[#allocation2 + $0x60] sm:$0xff] %vm262, %v229
      %276 = vst.msk [vmem:[#allocation2 + $0x68] sm:$0xff] %vm262, %v230
      %277 = vst.msk [vmem:[#allocation2 + $0x70] sm:$0xff] %vm262, %v231
      %278 = vst.msk [vmem:[#allocation2 + $0x78] sm:$0xff] %vm262, %v232
      %279 = vst.msk [vmem:[#allocation2 + $0x80] sm:$0xff] %vm262, %v233
      %280 = vst.msk [vmem:[#allocation2 + $0x88] sm:$0xff] %vm262, %v234
      %281 = vst.msk [vmem:[#allocation2 + $0x90] sm:$0xff] %vm262, %v235
      %282 = vst.msk [vmem:[#allocation2 + $0x98] sm:$0xff] %vm262, %v236
      %283 = vst.msk [vmem:[#allocation2 + $0xa0] sm:$0xff] %vm262, %v237
      %284 = vst.msk [vmem:[#allocation2 + $0xa8] sm:$0xff] %vm262, %v238
      %285 = vst.msk [vmem:[#allocation2 + $0xb0] sm:$0xff] %vm262, %v239
      %286 = vst.msk [vmem:[#allocation2 + $0xb8] sm:$0xff] %vm262, %v240
      %287 = vst.msk [vmem:[#allocation2 + $0xc0] sm:$0xff] %vm262, %v241
      %288 = vst.msk [vmem:[#allocation2 + $0xc8] sm:$0xff] %vm262, %v242
      %289 = vst.msk [vmem:[#allocation2 + $0xd0] sm:$0xff] %vm262, %v243
      %290 = vst.msk [vmem:[#allocation2 + $0xd8] sm:$0xff] %vm262, %v244
      %291 = vst.msk [vmem:[#allocation2 + $0xe0] sm:$0xff] %vm262, %v245
      %292 = vst.msk [vmem:[#allocation2 + $0xe8] sm:$0xff] %vm262, %v246
      %293 = vst.msk [vmem:[#allocation2 + $0xf0] sm:$0xff] %vm262, %v247
      %294 = vst.msk [vmem:[#allocation2 + $0xf8] sm:$0xff] %vm262, %v248
      %295 = vst.msk [vmem:[#allocation2 + $0x100] sm:$0xff] %vm262, %v249
      %296 = vst.msk [vmem:[#allocation2 + $0x108] sm:$0xff] %vm262, %v250
      %297 = vst.msk [vmem:[#allocation2 + $0x110] sm:$0xff] %vm262, %v251
      %298 = vst.msk [vmem:[#allocation2 + $0x118] sm:$0xff] %vm262, %v252
      %299 = vst.msk [vmem:[#allocation2 + $0x120] sm:$0xff] %vm262, %v253
      %300 = vst.msk [vmem:[#allocation2 + $0x128] sm:$0xff] %vm262, %v254
      %301 = vst.msk [vmem:[#allocation2 + $0x130] sm:$0xff] %vm262, %v255
      %302 = vst.msk [vmem:[#allocation2 + $0x138] sm:$0xff] %vm262, %v256
      %303 = vst.msk [vmem:[#allocation2 + $0x140] sm:$0xff] %vm262, %v257
      %304 = vst.msk [vmem:[#allocation2 + $0x148] sm:$0xff] %vm262, %v258
      %305 = vst.msk [vmem:[#allocation2 + $0x150] sm:$0xff] %vm262, %v259
      %306 = vst.msk [vmem:[#allocation2 + $0x158] sm:$0xff] %vm262, %v260
      %307 = vst.msk [vmem:[#allocation2 + $0x160] sm:$0xff] %vm262, %v261
      %v308 = vld [vmem:[%s2] sm:$0x1]
      %v310 = vlaneseq
      %v311 = vshrl.u32 %v310, 7
      %v312 = vsub.s32 0, %v311
      %v313 = vrot.slane %v308, %v312
      %v315 = vadd.f32 %v313, 0.0
      %v316 = vld [vmem:[#allocation2 + $0x11] sm:$0xff]
      %v317 = vld [vmem:[#allocation2 + $0x19] sm:$0xff]
      %v318 = vld [vmem:[#allocation2 + $0x21] sm:$0xff]
      %v319 = vld [vmem:[#allocation2 + $0x29] sm:$0xff]
      %v320 = vld [vmem:[#allocation2 + $0x31] sm:$0xff]
      %v321 = vld [vmem:[#allocation2 + $0x39] sm:$0xff]
      %v322 = vld [vmem:[#allocation2 + $0x41] sm:$0xff]
      %v323 = vld [vmem:[#allocation2 + $0x49] sm:$0xff]
      %v324 = vld [vmem:[#allocation2 + $0x51] sm:$0xff]
      %v325 = vld [vmem:[#allocation2 + $0x59] sm:$0xff]
      %v326 = vld [vmem:[#allocation2 + $0x61] sm:$0xff]
      %v327 = vld [vmem:[#allocation2 + $0x69] sm:$0xff]
      %v328 = vld [vmem:[#allocation2 + $0x71] sm:$0xff]
      %v329 = vld [vmem:[#allocation2 + $0x79] sm:$0xff]
      %v330 = vld [vmem:[#allocation2 + $0x81] sm:$0xff]
      %v331 = vld [vmem:[#allocation2 + $0x89] sm:$0xff]
      %v332 = vld [vmem:[#allocation2 + $0x91] sm:$0xff]
      %v333 = vld [vmem:[#allocation2 + $0x99] sm:$0xff]
      %v334 = vld [vmem:[#allocation2 + $0xa1] sm:$0xff]
      %v335 = vld [vmem:[#allocation2 + $0xa9] sm:$0xff]
      %v336 = vld [vmem:[#allocation2 + $0xb1] sm:$0xff]
      %v337 = vld [vmem:[#allocation2 + $0xb9] sm:$0xff]
      %v338 = vld [vmem:[#allocation2 + $0xc1] sm:$0xff]
      %v339 = vld [vmem:[#allocation2 + $0xc9] sm:$0xff]
      %v340 = vld [vmem:[#allocation2 + $0xd1] sm:$0xff]
      %v341 = vld [vmem:[#allocation2 + $0xd9] sm:$0xff]
      %v342 = vld [vmem:[#allocation2 + $0xe1] sm:$0xff]
      %v343 = vld [vmem:[#allocation2 + $0xe9] sm:$0xff]
      %v344 = vld [vmem:[#allocation2 + $0xf1] sm:$0xff]
      %v345 = vld [vmem:[#allocation2 + $0xf9] sm:$0xff]
      %v346 = vld [vmem:[#allocation2 + $0x101] sm:$0xff]
      %v347 = vld [vmem:[#allocation2 + $0x109] sm:$0xff]
      %v348 = vld [vmem:[#allocation2 + $0x111] sm:$0xff]
      %v349 = vld [vmem:[#allocation2 + $0x119] sm:$0xff]
      %v350 = vld [vmem:[#allocation2 + $0x121] sm:$0xff]
      %v351 = vld [vmem:[#allocation2 + $0x129] sm:$0xff]
      %v352 = vpack.c.bf16 %v317, %v316
      %v353 = vpack.c.bf16 %v319, %v318
      %v354 = vpack.c.bf16 %v321, %v320
      %v355 = vpack.c.bf16 %v323, %v322
      %v356 = vpack.c.bf16 %v325, %v324
      %v357 = vpack.c.bf16 %v327, %v326
      %v358 = vpack.c.bf16 %v329, %v328
      %v359 = vpack.c.bf16 %v331, %v330
      %v360 = vpack.c.bf16 %v333, %v332
      %v361 = vpack.c.bf16 %v335, %v334
      %v362 = vpack.c.bf16 %v337, %v336
      %v363 = vpack.c.bf16 %v339, %v338
      %v364 = vpack.c.bf16 %v341, %v340
      %v365 = vpack.c.bf16 %v343, %v342
      %v366 = vpack.c.bf16 %v345, %v344
      %v367 = vpack.c.bf16 %v347, %v346
      %v368 = vpack.c.bf16 %v349, %v348
      %v369 = vpack.c.bf16 %v351, %v350
      %v370 = vld [vmem:[%s1] sm:$0xf]
      %v372 = vsel %vm262, %v352, 0
      %v375 = vsel %vm262, %v353, 0
      %v378 = vsel %vm262, %v354, 0
      %v381 = vsel %vm262, %v355, 0
      %v384 = vsel %vm262, %v356, 0
      %v387 = vsel %vm262, %v357, 0
      %v390 = vsel %vm262, %v358, 0
      %v393 = vsel %vm262, %v359, 0
      %v396 = vsel %vm262, %v360, 0
      %v399 = vsel %vm262, %v361, 0
      %v402 = vsel %vm262, %v362, 0
      %v405 = vsel %vm262, %v363, 0
      %v408 = vsel %vm262, %v364, 0
      %v411 = vsel %vm262, %v365, 0
      %v414 = vsel %vm262, %v366, 0
      %v417 = vsel %vm262, %v367, 0
      %v420 = vsel %vm262, %v368, 0
      %v423 = vsel %vm262, %v369, 0
      %vm425 = vcmask 1043456
      %v427 = vsel %vm425, %v370, 0
      %429 = vmatprep.subr.bf16.mxu0 0
      %430 = vmatpush1.bf16.msra.mxu0 %v427
      %431 = vmatprep.subr.bf16.mxu0 0
      %432 = vmatpush1.bf16.msra.mxu0 0
      %433 = vmatprep.subr.bf16.mxu0 0
      %434 = vmatpush1.bf16.msra.mxu0 0
      %435 = vmatprep.subr.bf16.mxu0 0
      %436 = vmatpush1.bf16.msra.mxu0 0
      %437 = vmatprep.subr.bf16.mxu0 0
      %438 = vmatpush1.bf16.msra.mxu0 0
      %439 = vmatprep.subr.bf16.mxu0 0
      %440 = vmatpush1.bf16.msra.mxu0 0
      %441 = vmatprep.subr.bf16.mxu0 0
      %442 = vmatpush1.bf16.msra.mxu0 0
      %443 = vmatprep.subr.bf16.mxu0 0
      %444 = vmatpush1.bf16.msra.mxu0 0
      %445 = vmatprep.subr.bf16.mxu0 0
      %446 = vmatpush1.bf16.msra.mxu0 0
      %447 = vmatprep.subr.bf16.mxu0 0
      %448 = vmatpush1.bf16.msra.mxu0 0
      %449 = vmatprep.subr.bf16.mxu0 0
      %450 = vmatpush1.bf16.msra.mxu0 0
      %451 = vmatprep.subr.bf16.mxu0 0
      %452 = vmatpush1.bf16.msra.mxu0 0
      %453 = vmatprep.subr.bf16.mxu0 0
      %454 = vmatpush1.bf16.msra.mxu0 0
      %455 = vmatprep.subr.bf16.mxu0 0
      %456 = vmatpush1.bf16.msra.mxu0 0
      %457 = vmatprep.subr.bf16.mxu0 0
      %458 = vmatpush1.bf16.msra.mxu0 0
      %459 = vmatprep.subr.bf16.mxu0 0
      %460 = vmatpush1.bf16.msra.mxu0 0
      %461 = vmatprep.mubr.bf16.mxu0 0
      %462 = vmatmul.mubr.bf16.gmra.mrb[0].mxu0 %v372
      %v463 = vpop.f32.mrb[0].mxu0
      %v464 = vadd.f32 0.0, %v463
      %v465 = vpop.f32.mrb[0].mxu0
      %v466 = vpop.f32.mrb[0].mxu0
      %v467 = vadd.f32 0.0, %v466
      %v468 = vpop.f32.mrb[0].mxu0
      %469 = vmatprep.mubr.bf16.mxu0 0
      %470 = vmatmul.mubr.bf16.gmra.mrb[0].mxu0 %v375
      %v471 = vpop.f32.mrb[0].mxu0
      %v472 = vadd.f32 0.0, %v471
      %v473 = vpop.f32.mrb[0].mxu0
      %v474 = vpop.f32.mrb[0].mxu0
      %v475 = vadd.f32 0.0, %v474
      %v476 = vpop.f32.mrb[0].mxu0
      %477 = vmatprep.mubr.bf16.mxu0 0
      %478 = vmatmul.mubr.bf16.gmra.mrb[0].mxu0 %v378
      %v479 = vpop.f32.mrb[0].mxu0
      %v480 = vadd.f32 0.0, %v479
      %v481 = vpop.f32.mrb[0].mxu0
      %v482 = vpop.f32.mrb[0].mxu0
      %v483 = vadd.f32 0.0, %v482
      %v484 = vpop.f32.mrb[0].mxu0
      %485 = vmatprep.mubr.bf16.mxu0 0
      %486 = vmatmul.mubr.bf16.gmra.mrb[0].mxu0 %v381
      %v487 = vpop.f32.mrb[0].mxu0
      %v488 = vadd.f32 0.0, %v487
      %v489 = vpop.f32.mrb[0].mxu0
      %v490 = vpop.f32.mrb[0].mxu0
      %v491 = vadd.f32 0.0, %v490
      %v492 = vpop.f32.mrb[0].mxu0
      %493 = vmatprep.mubr.bf16.mxu0 0
      %494 = vmatmul.mubr.bf16.gmra.mrb[0].mxu0 %v384
      %v495 = vpop.f32.mrb[0].mxu0
      %v496 = vadd.f32 0.0, %v495
      %v497 = vpop.f32.mrb[0].mxu0
      %v498 = vpop.f32.mrb[0].mxu0
      %v499 = vadd.f32 0.0, %v498
      %v500 = vpop.f32.mrb[0].mxu0
      %501 = vmatprep.mubr.bf16.mxu0 0
      %502 = vmatmul.mubr.bf16.gmra.mrb[0].mxu0 %v387
      %v503 = vpop.f32.mrb[0].mxu0
      %v504 = vadd.f32 0.0, %v503
      %v505 = vpop.f32.mrb[0].mxu0
      %v506 = vpop.f32.mrb[0].mxu0
      %v507 = vadd.f32 0.0, %v506
      %v508 = vpop.f32.mrb[0].mxu0
      %509 = vmatprep.mubr.bf16.mxu0 0
      %510 = vmatmul.mubr.bf16.gmra.mrb[0].mxu0 %v390
      %v511 = vpop.f32.mrb[0].mxu0
      %v512 = vadd.f32 0.0, %v511
      %v513 = vpop.f32.mrb[0].mxu0
      %v514 = vpop.f32.mrb[0].mxu0
      %v515 = vadd.f32 0.0, %v514
      %v516 = vpop.f32.mrb[0].mxu0
      %517 = vmatprep.mubr.bf16.mxu0 0
      %518 = vmatmul.mubr.bf16.gmra.mrb[0].mxu0 %v393
      %v519 = vpop.f32.mrb[0].mxu0
      %v520 = vadd.f32 0.0, %v519
      %v521 = vpop.f32.mrb[0].mxu0
      %v522 = vpop.f32.mrb[0].mxu0
      %v523 = vadd.f32 0.0, %v522
      %v524 = vpop.f32.mrb[0].mxu0
      %525 = vmatprep.mubr.bf16.mxu0 0
      %526 = vmatmul.mubr.bf16.gmra.mrb[0].mxu0 %v396
      %v527 = vpop.f32.mrb[0].mxu0
      %v528 = vadd.f32 0.0, %v527
      %v529 = vpop.f32.mrb[0].mxu0
      %v530 = vpop.f32.mrb[0].mxu0
      %v531 = vadd.f32 0.0, %v530
      %v532 = vpop.f32.mrb[0].mxu0
      %533 = vmatprep.mubr.bf16.mxu0 0
      %534 = vmatmul.mubr.bf16.gmra.mrb[0].mxu0 %v399
      %v535 = vpop.f32.mrb[0].mxu0
      %v536 = vadd.f32 0.0, %v535
      %v537 = vpop.f32.mrb[0].mxu0
      %v538 = vpop.f32.mrb[0].mxu0
      %v539 = vadd.f32 0.0, %v538
      %v540 = vpop.f32.mrb[0].mxu0
      %541 = vmatprep.mubr.bf16.mxu0 0
      %542 = vmatmul.mubr.bf16.gmra.mrb[0].mxu0 %v402
      %v543 = vpop.f32.mrb[0].mxu0
      %v544 = vadd.f32 0.0, %v543
      %v545 = vpop.f32.mrb[0].mxu0
      %v546 = vpop.f32.mrb[0].mxu0
      %v547 = vadd.f32 0.0, %v546
      %v548 = vpop.f32.mrb[0].mxu0
      %549 = vmatprep.mubr.bf16.mxu0 0
      %550 = vmatmul.mubr.bf16.gmra.mrb[0].mxu0 %v405
      %v551 = vpop.f32.mrb[0].mxu0
      %v552 = vadd.f32 0.0, %v551
      %v553 = vpop.f32.mrb[0].mxu0
      %v554 = vpop.f32.mrb[0].mxu0
      %v555 = vadd.f32 0.0, %v554
      %v556 = vpop.f32.mrb[0].mxu0
      %557 = vmatprep.mubr.bf16.mxu0 0
      %558 = vmatmul.mubr.bf16.gmra.mrb[0].mxu0 %v408
      %v559 = vpop.f32.mrb[0].mxu0
      %v560 = vadd.f32 0.0, %v559
      %v561 = vpop.f32.mrb[0].mxu0
      %v562 = vpop.f32.mrb[0].mxu0
      %v563 = vadd.f32 0.0, %v562
      %v564 = vpop.f32.mrb[0].mxu0
      %565 = vmatprep.mubr.bf16.mxu0 0
      %566 = vmatmul.mubr.bf16.gmra.mrb[0].mxu0 %v411
      %v567 = vpop.f32.mrb[0].mxu0
      %v568 = vadd.f32 0.0, %v567
      %v569 = vpop.f32.mrb[0].mxu0
      %v570 = vpop.f32.mrb[0].mxu0
      %v571 = vadd.f32 0.0, %v570
      %v572 = vpop.f32.mrb[0].mxu0
      %573 = vmatprep.mubr.bf16.mxu0 0
      %574 = vmatmul.mubr.bf16.gmra.mrb[0].mxu0 %v414
      %v575 = vpop.f32.mrb[0].mxu0
      %v576 = vadd.f32 0.0, %v575
      %v577 = vpop.f32.mrb[0].mxu0
      %v578 = vpop.f32.mrb[0].mxu0
      %v579 = vadd.f32 0.0, %v578
      %v580 = vpop.f32.mrb[0].mxu0
      %581 = vmatprep.mubr.bf16.mxu0 0
      %582 = vmatmul.mubr.bf16.gmra.mrb[0].mxu0 %v417
      %v583 = vpop.f32.mrb[0].mxu0
      %v584 = vadd.f32 0.0, %v583
      %v585 = vpop.f32.mrb[0].mxu0
      %v586 = vpop.f32.mrb[0].mxu0
      %v587 = vadd.f32 0.0, %v586
      %v588 = vpop.f32.mrb[0].mxu0
      %589 = vmatprep.mubr.bf16.mxu0 0
      %590 = vmatmul.mubr.bf16.gmra.mrb[0].mxu0 %v420
      %v591 = vpop.f32.mrb[0].mxu0
      %v592 = vadd.f32 0.0, %v591
      %v593 = vpop.f32.mrb[0].mxu0
      %v594 = vpop.f32.mrb[0].mxu0
      %v595 = vadd.f32 0.0, %v594
      %v596 = vpop.f32.mrb[0].mxu0
      %597 = vmatprep.mubr.bf16.mxu0 0
      %598 = vmatmul.mubr.bf16.gmra.mrb[0].mxu0 %v423
      %v599 = vpop.f32.mrb[0].mxu0
      %v600 = vadd.f32 0.0, %v599
      %v601 = vpop.f32.mrb[0].mxu0
      %v602 = vpop.f32.mrb[0].mxu0
      %v603 = vadd.f32 0.0, %v602
      %v604 = vpop.f32.mrb[0].mxu0
      %605 = vdwg.mxu0
      %v606 = vadd.f32 %v315, %v464
      %v607 = vadd.f32 %v315, %v467
      %v608 = vadd.f32 %v315, %v472
      %v609 = vadd.f32 %v315, %v475
      %v610 = vadd.f32 %v315, %v480
      %v611 = vadd.f32 %v315, %v483
      %v612 = vadd.f32 %v315, %v488
      %v613 = vadd.f32 %v315, %v491
      %v614 = vadd.f32 %v315, %v496
      %v615 = vadd.f32 %v315, %v499
      %v616 = vadd.f32 %v315, %v504
      %v617 = vadd.f32 %v315, %v507
      %v618 = vadd.f32 %v315, %v512
      %v619 = vadd.f32 %v315, %v515
      %v620 = vadd.f32 %v315, %v520
      %v621 = vadd.f32 %v315, %v523
      %v622 = vadd.f32 %v315, %v528
      %v623 = vadd.f32 %v315, %v531
      %v624 = vadd.f32 %v315, %v536
      %v625 = vadd.f32 %v315, %v539
      %v626 = vadd.f32 %v315, %v544
      %v627 = vadd.f32 %v315, %v547
      %v628 = vadd.f32 %v315, %v552
      %v629 = vadd.f32 %v315, %v555
      %v630 = vadd.f32 %v315, %v560
      %v631 = vadd.f32 %v315, %v563
      %v632 = vadd.f32 %v315, %v568
      %v633 = vadd.f32 %v315, %v571
      %v634 = vadd.f32 %v315, %v576
      %v635 = vadd.f32 %v315, %v579
      %v636 = vadd.f32 %v315, %v584
      %v637 = vadd.f32 %v315, %v587
      %v638 = vadd.f32 %v315, %v592
      %v639 = vadd.f32 %v315, %v595
      %v640 = vadd.f32 %v315, %v600
      %v641 = vadd.f32 %v315, %v603
      %v642 = vld [vmem:[#allocation2 + $0x12] sm:$0xff]
      %v643 = vld [vmem:[#allocation2 + $0x1a] sm:$0xff]
      %v644 = vld [vmem:[#allocation2 + $0x22] sm:$0xff]
      %v645 = vld [vmem:[#allocation2 + $0x2a] sm:$0xff]
      %v646 = vld [vmem:[#allocation2 + $0x32] sm:$0xff]
      %v647 = vld [vmem:[#allocation2 + $0x3a] sm:$0xff]
      %v648 = vld [vmem:[#allocation2 + $0x42] sm:$0xff]
      %v649 = vld [vmem:[#allocation2 + $0x4a] sm:$0xff]
      %v650 = vld [vmem:[#allocation2 + $0x52] sm:$0xff]
      %v651 = vld [vmem:[#allocation2 + $0x5a] sm:$0xff]
      %v652 = vld [vmem:[#allocation2 + $0x62] sm:$0xff]
      %v653 = vld [vmem:[#allocation2 + $0x6a] sm:$0xff]
      %v654 = vld [vmem:[#allocation2 + $0x72] sm:$0xff]
      %v655 = vld [vmem:[#allocation2 + $0x7a] sm:$0xff]
      %v656 = vld [vmem:[#allocation2 + $0x82] sm:$0xff]
      %v657 = vld [vmem:[#allocation2 + $0x8a] sm:$0xff]
      %v658 = vld [vmem:[#allocation2 + $0x92] sm:$0xff]
      %v659 = vld [vmem:[#allocation2 + $0x9a] sm:$0xff]
      %v660 = vld [vmem:[#allocation2 + $0xa2] sm:$0xff]
      %v661 = vld [vmem:[#allocation2 + $0xaa] sm:$0xff]
      %v662 = vld [vmem:[#allocation2 + $0xb2] sm:$0xff]
      %v663 = vld [vmem:[#allocation2 + $0xba] sm:$0xff]
      %v664 = vld [vmem:[#allocation2 + $0xc2] sm:$0xff]
      %v665 = vld [vmem:[#allocation2 + $0xca] sm:$0xff]
      %v666 = vld [vmem:[#allocation2 + $0xd2] sm:$0xff]
      %v667 = vld [vmem:[#allocation2 + $0xda] sm:$0xff]
      %v668 = vld [vmem:[#allocation2 + $0xe2] sm:$0xff]
      %v669 = vld [vmem:[#allocation2 + $0xea] sm:$0xff]
      %v670 = vld [vmem:[#allocation2 + $0xf2] sm:$0xff]
      %v671 = vld [vmem:[#allocation2 + $0xfa] sm:$0xff]
      %v672 = vld [vmem:[#allocation2 + $0x102] sm:$0xff]
      %v673 = vld [vmem:[#allocation2 + $0x10a] sm:$0xff]
      %v674 = vld [vmem:[#allocation2 + $0x112] sm:$0xff]
      %v675 = vld [vmem:[#allocation2 + $0x11a] sm:$0xff]
      %v676 = vld [vmem:[#allocation2 + $0x122] sm:$0xff]
      %v677 = vld [vmem:[#allocation2 + $0x12a] sm:$0xff]
      %v678 = vpack.c.bf16 %v643, %v642
      %v679 = vpack.c.bf16 %v645, %v644
      %v680 = vpack.c.bf16 %v647, %v646
      %v681 = vpack.c.bf16 %v649, %v648
      %v682 = vpack.c.bf16 %v651, %v650
      %v683 = vpack.c.bf16 %v653, %v652
      %v684 = vpack.c.bf16 %v655, %v654
      %v685 = vpack.c.bf16 %v657, %v656
      %v686 = vpack.c.bf16 %v659, %v658
      %v687 = vpack.c.bf16 %v661, %v660
      %v688 = vpack.c.bf16 %v663, %v662
      %v689 = vpack.c.bf16 %v665, %v664
      %v690 = vpack.c.bf16 %v667, %v666
      %v691 = vpack.c.bf16 %v669, %v668
      %v692 = vpack.c.bf16 %v671, %v670
      %v693 = vpack.c.bf16 %v673, %v672
      %v694 = vpack.c.bf16 %v675, %v674
      %v695 = vpack.c.bf16 %v677, %v676
      %v696 = vld [vmem:[%s1 + $0x4] sm:$0xf]
      %v698 = vsel %vm262, %v678, 0
      %v701 = vsel %vm262, %v679, 0
      %v704 = vsel %vm262, %v680, 0
      %v707 = vsel %vm262, %v681, 0
      %v710 = vsel %vm262, %v682, 0
      %v713 = vsel %vm262, %v683, 0
      %v716 = vsel %vm262, %v684, 0
      %v719 = vsel %vm262, %v685, 0
      %v722 = vsel %vm262, %v686, 0
      %v725 = vsel %vm262, %v687, 0
      %v728 = vsel %vm262, %v688, 0
      %v731 = vsel %vm262, %v689, 0
      %v734 = vsel %vm262, %v690, 0
      %v737 = vsel %vm262, %v691, 0
      %v740 = vsel %vm262, %v692, 0
      %v743 = vsel %vm262, %v693, 0
      %v746 = vsel %vm262, %v694, 0
      %v749 = vsel %vm262, %v695, 0
      %v752 = vsel %vm425, %v696, 0
      %754 = vmatprep.subr.bf16.mxu0 0
      %755 = vmatpush1.bf16.msra.mxu0 %v752
      %756 = vmatprep.subr.bf16.mxu0 0
      %757 = vmatpush1.bf16.msra.mxu0 0
      %758 = vmatprep.subr.bf16.mxu0 0
      %759 = vmatpush1.bf16.msra.mxu0 0
      %760 = vmatprep.subr.bf16.mxu0 0
      %761 = vmatpush1.bf16.msra.mxu0 0
      %762 = vmatprep.subr.bf16.mxu0 0
      %763 = vmatpush1.bf16.msra.mxu0 0
      %764 = vmatprep.subr.bf16.mxu0 0
      %765 = vmatpush1.bf16.msra.mxu0 0
      %766 = vmatprep.subr.bf16.mxu0 0
      %767 = vmatpush1.bf16.msra.mxu0 0
      %768 = vmatprep.subr.bf16.mxu0 0
      %769 = vmatpush1.bf16.msra.mxu0 0
      %770 = vmatprep.subr.bf16.mxu0 0
      %771 = vmatpush1.bf16.msra.mxu0 0
      %772 = vmatprep.subr.bf16.mxu0 0
      %773 = vmatpush1.bf16.msra.mxu0 0
      %774 = vmatprep.subr.bf16.mxu0 0
      %775 = vmatpush1.bf16.msra.mxu0 0
      %776 = vmatprep.subr.bf16.mxu0 0
      %777 = vmatpush1.bf16.msra.mxu0 0
      %778 = vmatprep.subr.bf16.mxu0 0
      %779 = vmatpush1.bf16.msra.mxu0 0
      %780 = vmatprep.subr.bf16.mxu0 0
      %781 = vmatpush1.bf16.msra.mxu0 0
      %782 = vmatprep.subr.bf16.mxu0 0
      %783 = vmatpush1.bf16.msra.mxu0 0
      %784 = vmatprep.subr.bf16.mxu0 0
      %785 = vmatpush1.bf16.msra.mxu0 0
      %786 = vmatprep.mubr.bf16.mxu0 0
      %787 = vmatmul.mubr.bf16.gmra.mrb[0].mxu0 %v698
      %v788 = vpop.f32.mrb[0].mxu0
      %v789 = vadd.f32 0.0, %v788
      %v790 = vpop.f32.mrb[0].mxu0
      %v791 = vpop.f32.mrb[0].mxu0
      %v792 = vadd.f32 0.0, %v791
      %v793 = vpop.f32.mrb[0].mxu0
      %794 = vmatprep.mubr.bf16.mxu0 0
      %795 = vmatmul.mubr.bf16.gmra.mrb[0].mxu0 %v701
      %v796 = vpop.f32.mrb[0].mxu0
      %v797 = vadd.f32 0.0, %v796
      %v798 = vpop.f32.mrb[0].mxu0
      %v799 = vpop.f32.mrb[0].mxu0
      %v800 = vadd.f32 0.0, %v799
      %v801 = vpop.f32.mrb[0].mxu0
      %802 = vmatprep.mubr.bf16.mxu0 0
      %803 = vmatmul.mubr.bf16.gmra.mrb[0].mxu0 %v704
      %v804 = vpop.f32.mrb[0].mxu0
      %v805 = vadd.f32 0.0, %v804
      %v806 = vpop.f32.mrb[0].mxu0
      %v807 = vpop.f32.mrb[0].mxu0
      %v808 = vadd.f32 0.0, %v807
      %v809 = vpop.f32.mrb[0].mxu0
      %810 = vmatprep.mubr.bf16.mxu0 0
      %811 = vmatmul.mubr.bf16.gmra.mrb[0].mxu0 %v707
      %v812 = vpop.f32.mrb[0].mxu0
      %v813 = vadd.f32 0.0, %v812
      %v814 = vpop.f32.mrb[0].mxu0
      %v815 = vpop.f32.mrb[0].mxu0
      %v816 = vadd.f32 0.0, %v815
      %v817 = vpop.f32.mrb[0].mxu0
      %818 = vmatprep.mubr.bf16.mxu0 0
      %819 = vmatmul.mubr.bf16.gmra.mrb[0].mxu0 %v710
      %v820 = vpop.f32.mrb[0].mxu0
      %v821 = vadd.f32 0.0, %v820
      %v822 = vpop.f32.mrb[0].mxu0
      %v823 = vpop.f32.mrb[0].mxu0
      %v824 = vadd.f32 0.0, %v823
      %v825 = vpop.f32.mrb[0].mxu0
      %826 = vmatprep.mubr.bf16.mxu0 0
      %827 = vmatmul.mubr.bf16.gmra.mrb[0].mxu0 %v713
      %v828 = vpop.f32.mrb[0].mxu0
      %v829 = vadd.f32 0.0, %v828
      %v830 = vpop.f32.mrb[0].mxu0
      %v831 = vpop.f32.mrb[0].mxu0
      %v832 = vadd.f32 0.0, %v831
      %v833 = vpop.f32.mrb[0].mxu0
      %834 = vmatprep.mubr.bf16.mxu0 0
      %835 = vmatmul.mubr.bf16.gmra.mrb[0].mxu0 %v716
      %v836 = vpop.f32.mrb[0].mxu0
      %v837 = vadd.f32 0.0, %v836
      %v838 = vpop.f32.mrb[0].mxu0
      %v839 = vpop.f32.mrb[0].mxu0
      %v840 = vadd.f32 0.0, %v839
      %v841 = vpop.f32.mrb[0].mxu0
      %842 = vmatprep.mubr.bf16.mxu0 0
      %843 = vmatmul.mubr.bf16.gmra.mrb[0].mxu0 %v719
      %v844 = vpop.f32.mrb[0].mxu0
      %v845 = vadd.f32 0.0, %v844
      %v846 = vpop.f32.mrb[0].mxu0
      %v847 = vpop.f32.mrb[0].mxu0
      %v848 = vadd.f32 0.0, %v847
      %v849 = vpop.f32.mrb[0].mxu0
      %850 = vmatprep.mubr.bf16.mxu0 0
      %851 = vmatmul.mubr.bf16.gmra.mrb[0].mxu0 %v722
      %v852 = vpop.f32.mrb[0].mxu0
      %v853 = vadd.f32 0.0, %v852
      %v854 = vpop.f32.mrb[0].mxu0
      %v855 = vpop.f32.mrb[0].mxu0
      %v856 = vadd.f32 0.0, %v855
      %v857 = vpop.f32.mrb[0].mxu0
      %858 = vmatprep.mubr.bf16.mxu0 0
      %859 = vmatmul.mubr.bf16.gmra.mrb[0].mxu0 %v725
      %v860 = vpop.f32.mrb[0].mxu0
      %v861 = vadd.f32 0.0, %v860
      %v862 = vpop.f32.mrb[0].mxu0
      %v863 = vpop.f32.mrb[0].mxu0
      %v864 = vadd.f32 0.0, %v863
      %v865 = vpop.f32.mrb[0].mxu0
      %866 = vmatprep.mubr.bf16.mxu0 0
      %867 = vmatmul.mubr.bf16.gmra.mrb[0].mxu0 %v728
      %v868 = vpop.f32.mrb[0].mxu0
      %v869 = vadd.f32 0.0, %v868
      %v870 = vpop.f32.mrb[0].mxu0
      %v871 = vpop.f32.mrb[0].mxu0
      %v872 = vadd.f32 0.0, %v871
      %v873 = vpop.f32.mrb[0].mxu0
      %874 = vmatprep.mubr.bf16.mxu0 0
      %875 = vmatmul.mubr.bf16.gmra.mrb[0].mxu0 %v731
      %v876 = vpop.f32.mrb[0].mxu0
      %v877 = vadd.f32 0.0, %v876
      %v878 = vpop.f32.mrb[0].mxu0
      %v879 = vpop.f32.mrb[0].mxu0
      %v880 = vadd.f32 0.0, %v879
      %v881 = vpop.f32.mrb[0].mxu0
      %882 = vmatprep.mubr.bf16.mxu0 0
      %883 = vmatmul.mubr.bf16.gmra.mrb[0].mxu0 %v734
      %v884 = vpop.f32.mrb[0].mxu0
      %v885 = vadd.f32 0.0, %v884
      %v886 = vpop.f32.mrb[0].mxu0
      %v887 = vpop.f32.mrb[0].mxu0
      %v888 = vadd.f32 0.0, %v887
      %v889 = vpop.f32.mrb[0].mxu0
      %890 = vmatprep.mubr.bf16.mxu0 0
      %891 = vmatmul.mubr.bf16.gmra.mrb[0].mxu0 %v737
      %v892 = vpop.f32.mrb[0].mxu0
      %v893 = vadd.f32 0.0, %v892
      %v894 = vpop.f32.mrb[0].mxu0
      %v895 = vpop.f32.mrb[0].mxu0
      %v896 = vadd.f32 0.0, %v895
      %v897 = vpop.f32.mrb[0].mxu0
      %898 = vmatprep.mubr.bf16.mxu0 0
      %899 = vmatmul.mubr.bf16.gmra.mrb[0].mxu0 %v740
      %v900 = vpop.f32.mrb[0].mxu0
      %v901 = vadd.f32 0.0, %v900
      %v902 = vpop.f32.mrb[0].mxu0
      %v903 = vpop.f32.mrb[0].mxu0
      %v904 = vadd.f32 0.0, %v903
      %v905 = vpop.f32.mrb[0].mxu0
      %906 = vmatprep.mubr.bf16.mxu0 0
      %907 = vmatmul.mubr.bf16.gmra.mrb[0].mxu0 %v743
      %v908 = vpop.f32.mrb[0].mxu0
      %v909 = vadd.f32 0.0, %v908
      %v910 = vpop.f32.mrb[0].mxu0
      %v911 = vpop.f32.mrb[0].mxu0
      %v912 = vadd.f32 0.0, %v911
      %v913 = vpop.f32.mrb[0].mxu0
      %914 = vmatprep.mubr.bf16.mxu0 0
      %915 = vmatmul.mubr.bf16.gmra.mrb[0].mxu0 %v746
      %v916 = vpop.f32.mrb[0].mxu0
      %v917 = vadd.f32 0.0, %v916
      %v918 = vpop.f32.mrb[0].mxu0
      %v919 = vpop.f32.mrb[0].mxu0
      %v920 = vadd.f32 0.0, %v919
      %v921 = vpop.f32.mrb[0].mxu0
      %922 = vmatprep.mubr.bf16.mxu0 0
      %923 = vmatmul.mubr.bf16.gmra.mrb[0].mxu0 %v749
      %v924 = vpop.f32.mrb[0].mxu0
      %v925 = vadd.f32 0.0, %v924
      %v926 = vpop.f32.mrb[0].mxu0
      %v927 = vpop.f32.mrb[0].mxu0
      %v928 = vadd.f32 0.0, %v927
      %v929 = vpop.f32.mrb[0].mxu0
      %930 = vdwg.mxu0
      %v931 = vadd.f32 %v606, %v789
      %v932 = vadd.f32 %v607, %v792
      %v933 = vadd.f32 %v608, %v797
      %v934 = vadd.f32 %v609, %v800
      %v935 = vadd.f32 %v610, %v805
      %v936 = vadd.f32 %v611, %v808
      %v937 = vadd.f32 %v612, %v813
      %v938 = vadd.f32 %v613, %v816
      %v939 = vadd.f32 %v614, %v821
      %v940 = vadd.f32 %v615, %v824
      %v941 = vadd.f32 %v616, %v829
      %v942 = vadd.f32 %v617, %v832
      %v943 = vadd.f32 %v618, %v837
      %v944 = vadd.f32 %v619, %v840
      %v945 = vadd.f32 %v620, %v845
      %v946 = vadd.f32 %v621, %v848
      %v947 = vadd.f32 %v622, %v853
      %v948 = vadd.f32 %v623, %v856
      %v949 = vadd.f32 %v624, %v861
      %v950 = vadd.f32 %v625, %v864
      %v951 = vadd.f32 %v626, %v869
      %v952 = vadd.f32 %v627, %v872
      %v953 = vadd.f32 %v628, %v877
      %v954 = vadd.f32 %v629, %v880
      %v955 = vadd.f32 %v630, %v885
      %v956 = vadd.f32 %v631, %v888
      %v957 = vadd.f32 %v632, %v893
      %v958 = vadd.f32 %v633, %v896
      %v959 = vadd.f32 %v634, %v901
      %v960 = vadd.f32 %v635, %v904
      %v961 = vadd.f32 %v636, %v909
      %v962 = vadd.f32 %v637, %v912
      %v963 = vadd.f32 %v638, %v917
      %v964 = vadd.f32 %v639, %v920
      %v965 = vadd.f32 %v640, %v925
      %v966 = vadd.f32 %v641, %v928
      %v967 = vld [vmem:[#allocation2 + $0x13] sm:$0xff]
      %v968 = vld [vmem:[#allocation2 + $0x1b] sm:$0xff]
      %v969 = vld [vmem:[#allocation2 + $0x23] sm:$0xff]
      %v970 = vld [vmem:[#allocation2 + $0x2b] sm:$0xff]
      %v971 = vld [vmem:[#allocation2 + $0x33] sm:$0xff]
      %v972 = vld [vmem:[#allocation2 + $0x3b] sm:$0xff]
      %v973 = vld [vmem:[#allocation2 + $0x43] sm:$0xff]
      %v974 = vld [vmem:[#allocation2 + $0x4b] sm:$0xff]
      %v975 = vld [vmem:[#allocation2 + $0x53] sm:$0xff]
      %v976 = vld [vmem:[#allocation2 + $0x5b] sm:$0xff]
      %v977 = vld [vmem:[#allocation2 + $0x63] sm:$0xff]
      %v978 = vld [vmem:[#allocation2 + $0x6b] sm:$0xff]
      %v979 = vld [vmem:[#allocation2 + $0x73] sm:$0xff]
      %v980 = vld [vmem:[#allocation2 + $0x7b] sm:$0xff]
      %v981 = vld [vmem:[#allocation2 + $0x83] sm:$0xff]
      %v982 = vld [vmem:[#allocation2 + $0x8b] sm:$0xff]
      %v983 = vld [vmem:[#allocation2 + $0x93] sm:$0xff]
      %v984 = vld [vmem:[#allocation2 + $0x9b] sm:$0xff]
      %v985 = vld [vmem:[#allocation2 + $0xa3] sm:$0xff]
      %v986 = vld [vmem:[#allocation2 + $0xab] sm:$0xff]
      %v987 = vld [vmem:[#allocation2 + $0xb3] sm:$0xff]
      %v988 = vld [vmem:[#allocation2 + $0xbb] sm:$0xff]
      %v989 = vld [vmem:[#allocation2 + $0xc3] sm:$0xff]
      %v990 = vld [vmem:[#allocation2 + $0xcb] sm:$0xff]
      %v991 = vld [vmem:[#allocation2 + $0xd3] sm:$0xff]
      %v992 = vld [vmem:[#allocation2 + $0xdb] sm:$0xff]
      %v993 = vld [vmem:[#allocation2 + $0xe3] sm:$0xff]
      %v994 = vld [vmem:[#allocation2 + $0xeb] sm:$0xff]
      %v995 = vld [vmem:[#allocation2 + $0xf3] sm:$0xff]
      %v996 = vld [vmem:[#allocation2 + $0xfb] sm:$0xff]
      %v997 = vld [vmem:[#allocation2 + $0x103] sm:$0xff]
      %v998 = vld [vmem:[#allocation2 + $0x10b] sm:$0xff]
      %v999 = vld [vmem:[#allocation2 + $0x113] sm:$0xff]
      %v1000 = vld [vmem:[#allocation2 + $0x11b] sm:$0xff]
      %v1001 = vld [vmem:[#allocation2 + $0x123] sm:$0xff]
      %v1002 = vld [vmem:[#allocation2 + $0x12b] sm:$0xff]
      %v1003 = vpack.c.bf16 %v968, %v967
      %v1004 = vpack.c.bf16 %v970, %v969
      %v1005 = vpack.c.bf16 %v972, %v971
      %v1006 = vpack.c.bf16 %v974, %v973
      %v1007 = vpack.c.bf16 %v976, %v975
      %v1008 = vpack.c.bf16 %v978, %v977
      %v1009 = vpack.c.bf16 %v980, %v979
      %v1010 = vpack.c.bf16 %v982, %v981
      %v1011 = vpack.c.bf16 %v984, %v983
      %v1012 = vpack.c.bf16 %v986, %v985
      %v1013 = vpack.c.bf16 %v988, %v987
      %v1014 = vpack.c.bf16 %v990, %v989
      %v1015 = vpack.c.bf16 %v992, %v991
      %v1016 = vpack.c.bf16 %v994, %v993
      %v1017 = vpack.c.bf16 %v996, %v995
      %v1018 = vpack.c.bf16 %v998, %v997
      %v1019 = vpack.c.bf16 %v1000, %v999
      %v1020 = vpack.c.bf16 %v1002, %v1001
      %v1021 = vld [vmem:[%s1 + $0x8] sm:$0xf]
      %v1023 = vsel %vm262, %v1003, 0
      %v1026 = vsel %vm262, %v1004, 0
      %v1029 = vsel %vm262, %v1005, 0
      %v1032 = vsel %vm262, %v1006, 0
      %v1035 = vsel %vm262, %v1007, 0
      %v1038 = vsel %vm262, %v1008, 0
      %v1041 = vsel %vm262, %v1009, 0
      %v1044 = vsel %vm262, %v1010, 0
      %v1047 = vsel %vm262, %v1011, 0
      %v1050 = vsel %vm262, %v1012, 0
      %v1053 = vsel %vm262, %v1013, 0
      %v1056 = vsel %vm262, %v1014, 0
      %v1059 = vsel %vm262, %v1015, 0
      %v1062 = vsel %vm262, %v1016, 0
      %v1065 = vsel %vm262, %v1017, 0
      %v1068 = vsel %vm262, %v1018, 0
      %v1071 = vsel %vm262, %v1019, 0
      %v1074 = vsel %vm262, %v1020, 0
      %v1077 = vsel %vm425, %v1021, 0
      %1079 = vmatprep.subr.bf16.mxu0 0
      %1080 = vmatpush1.bf16.msra.mxu0 %v1077
      %1081 = vmatprep.subr.bf16.mxu0 0
      %1082 = vmatpush1.bf16.msra.mxu0 0
      %1083 = vmatprep.subr.bf16.mxu0 0
      %1084 = vmatpush1.bf16.msra.mxu0 0
      %1085 = vmatprep.subr.bf16.mxu0 0
      %1086 = vmatpush1.bf16.msra.mxu0 0
      %1087 = vmatprep.subr.bf16.mxu0 0
      %1088 = vmatpush1.bf16.msra.mxu0 0
      %1089 = vmatprep.subr.bf16.mxu0 0
      %1090 = vmatpush1.bf16.msra.mxu0 0
      %1091 = vmatprep.subr.bf16.mxu0 0
      %1092 = vmatpush1.bf16.msra.mxu0 0
      %1093 = vmatprep.subr.bf16.mxu0 0
      %1094 = vmatpush1.bf16.msra.mxu0 0
      %1095 = vmatprep.subr.bf16.mxu0 0
      %1096 = vmatpush1.bf16.msra.mxu0 0
      %1097 = vmatprep.subr.bf16.mxu0 0
      %1098 = vmatpush1.bf16.msra.mxu0 0
      %1099 = vmatprep.subr.bf16.mxu0 0
      %1100 = vmatpush1.bf16.msra.mxu0 0
      %1101 = vmatprep.subr.bf16.mxu0 0
      %1102 = vmatpush1.bf16.msra.mxu0 0
      %1103 = vmatprep.subr.bf16.mxu0 0
      %1104 = vmatpush1.bf16.msra.mxu0 0
      %1105 = vmatprep.subr.bf16.mxu0 0
      %1106 = vmatpush1.bf16.msra.mxu0 0
      %1107 = vmatprep.subr.bf16.mxu0 0
      %1108 = vmatpush1.bf16.msra.mxu0 0
      %1109 = vmatprep.subr.bf16.mxu0 0
      %1110 = vmatpush1.bf16.msra.mxu0 0
      %1111 = vmatprep.mubr.bf16.mxu0 0
      %1112 = vmatmul.mubr.bf16.gmra.mrb[0].mxu0 %v1023
      %v1113 = vpop.f32.mrb[0].mxu0
      %v1114 = vadd.f32 0.0, %v1113
      %v1115 = vpop.f32.mrb[0].mxu0
      %v1116 = vpop.f32.mrb[0].mxu0
      %v1117 = vadd.f32 0.0, %v1116
      %v1118 = vpop.f32.mrb[0].mxu0
      %1119 = vmatprep.mubr.bf16.mxu0 0
      %1120 = vmatmul.mubr.bf16.gmra.mrb[0].mxu0 %v1026
      %v1121 = vpop.f32.mrb[0].mxu0
      %v1122 = vadd.f32 0.0, %v1121
      %v1123 = vpop.f32.mrb[0].mxu0
      %v1124 = vpop.f32.mrb[0].mxu0
      %v1125 = vadd.f32 0.0, %v1124
      %v1126 = vpop.f32.mrb[0].mxu0
      %1127 = vmatprep.mubr.bf16.mxu0 0
      %1128 = vmatmul.mubr.bf16.gmra.mrb[0].mxu0 %v1029
      %v1129 = vpop.f32.mrb[0].mxu0
      %v1130 = vadd.f32 0.0, %v1129
      %v1131 = vpop.f32.mrb[0].mxu0
      %v1132 = vpop.f32.mrb[0].mxu0
      %v1133 = vadd.f32 0.0, %v1132
      %v1134 = vpop.f32.mrb[0].mxu0
      %1135 = vmatprep.mubr.bf16.mxu0 0
      %1136 = vmatmul.mubr.bf16.gmra.mrb[0].mxu0 %v1032
      %v1137 = vpop.f32.mrb[0].mxu0
      %v1138 = vadd.f32 0.0, %v1137
      %v1139 = vpop.f32.mrb[0].mxu0
      %v1140 = vpop.f32.mrb[0].mxu0
      %v1141 = vadd.f32 0.0, %v1140
      %v1142 = vpop.f32.mrb[0].mxu0
      %1143 = vmatprep.mubr.bf16.mxu0 0
      %1144 = vmatmul.mubr.bf16.gmra.mrb[0].mxu0 %v1035
      %v1145 = vpop.f32.mrb[0].mxu0
      %v1146 = vadd.f32 0.0, %v1145
      %v1147 = vpop.f32.mrb[0].mxu0
      %v1148 = vpop.f32.mrb[0].mxu0
      %v1149 = vadd.f32 0.0, %v1148
      %v1150 = vpop.f32.mrb[0].mxu0
      %1151 = vmatprep.mubr.bf16.mxu0 0
      %1152 = vmatmul.mubr.bf16.gmra.mrb[0].mxu0 %v1038
      %v1153 = vpop.f32.mrb[0].mxu0
      %v1154 = vadd.f32 0.0, %v1153
      %v1155 = vpop.f32.mrb[0].mxu0
      %v1156 = vpop.f32.mrb[0].mxu0
      %v1157 = vadd.f32 0.0, %v1156
      %v1158 = vpop.f32.mrb[0].mxu0
      %1159 = vmatprep.mubr.bf16.mxu0 0
      %1160 = vmatmul.mubr.bf16.gmra.mrb[0].mxu0 %v1041
      %v1161 = vpop.f32.mrb[0].mxu0
      %v1162 = vadd.f32 0.0, %v1161
      %v1163 = vpop.f32.mrb[0].mxu0
      %v1164 = vpop.f32.mrb[0].mxu0
      %v1165 = vadd.f32 0.0, %v1164
      %v1166 = vpop.f32.mrb[0].mxu0
      %1167 = vmatprep.mubr.bf16.mxu0 0
      %1168 = vmatmul.mubr.bf16.gmra.mrb[0].mxu0 %v1044
      %v1169 = vpop.f32.mrb[0].mxu0
      %v1170 = vadd.f32 0.0, %v1169
      %v1171 = vpop.f32.mrb[0].mxu0
      %v1172 = vpop.f32.mrb[0].mxu0
      %v1173 = vadd.f32 0.0, %v1172
      %v1174 = vpop.f32.mrb[0].mxu0
      %1175 = vmatprep.mubr.bf16.mxu0 0
      %1176 = vmatmul.mubr.bf16.gmra.mrb[0].mxu0 %v1047
      %v1177 = vpop.f32.mrb[0].mxu0
      %v1178 = vadd.f32 0.0, %v1177
      %v1179 = vpop.f32.mrb[0].mxu0
      %v1180 = vpop.f32.mrb[0].mxu0
      %v1181 = vadd.f32 0.0, %v1180
      %v1182 = vpop.f32.mrb[0].mxu0
      %1183 = vmatprep.mubr.bf16.mxu0 0
      %1184 = vmatmul.mubr.bf16.gmra.mrb[0].mxu0 %v1050
      %v1185 = vpop.f32.mrb[0].mxu0
      %v1186 = vadd.f32 0.0, %v1185
      %v1187 = vpop.f32.mrb[0].mxu0
      %v1188 = vpop.f32.mrb[0].mxu0
      %v1189 = vadd.f32 0.0, %v1188
      %v1190 = vpop.f32.mrb[0].mxu0
      %1191 = vmatprep.mubr.bf16.mxu0 0
      %1192 = vmatmul.mubr.bf16.gmra.mrb[0].mxu0 %v1053
      %v1193 = vpop.f32.mrb[0].mxu0
      %v1194 = vadd.f32 0.0, %v1193
      %v1195 = vpop.f32.mrb[0].mxu0
      %v1196 = vpop.f32.mrb[0].mxu0
      %v1197 = vadd.f32 0.0, %v1196
      %v1198 = vpop.f32.mrb[0].mxu0
      %1199 = vmatprep.mubr.bf16.mxu0 0
      %1200 = vmatmul.mubr.bf16.gmra.mrb[0].mxu0 %v1056
      %v1201 = vpop.f32.mrb[0].mxu0
      %v1202 = vadd.f32 0.0, %v1201
      %v1203 = vpop.f32.mrb[0].mxu0
      %v1204 = vpop.f32.mrb[0].mxu0
      %v1205 = vadd.f32 0.0, %v1204
      %v1206 = vpop.f32.mrb[0].mxu0
      %1207 = vmatprep.mubr.bf16.mxu0 0
      %1208 = vmatmul.mubr.bf16.gmra.mrb[0].mxu0 %v1059
      %v1209 = vpop.f32.mrb[0].mxu0
      %v1210 = vadd.f32 0.0, %v1209
      %v1211 = vpop.f32.mrb[0].mxu0
      %v1212 = vpop.f32.mrb[0].mxu0
      %v1213 = vadd.f32 0.0, %v1212
      %v1214 = vpop.f32.mrb[0].mxu0
      %1215 = vmatprep.mubr.bf16.mxu0 0
      %1216 = vmatmul.mubr.bf16.gmra.mrb[0].mxu0 %v1062
      %v1217 = vpop.f32.mrb[0].mxu0
      %v1218 = vadd.f32 0.0, %v1217
      %v1219 = vpop.f32.mrb[0].mxu0
      %v1220 = vpop.f32.mrb[0].mxu0
      %v1221 = vadd.f32 0.0, %v1220
      %v1222 = vpop.f32.mrb[0].mxu0
      %1223 = vmatprep.mubr.bf16.mxu0 0
      %1224 = vmatmul.mubr.bf16.gmra.mrb[0].mxu0 %v1065
      %v1225 = vpop.f32.mrb[0].mxu0
      %v1226 = vadd.f32 0.0, %v1225
      %v1227 = vpop.f32.mrb[0].mxu0
      %v1228 = vpop.f32.mrb[0].mxu0
      %v1229 = vadd.f32 0.0, %v1228
      %v1230 = vpop.f32.mrb[0].mxu0
      %1231 = vmatprep.mubr.bf16.mxu0 0
      %1232 = vmatmul.mubr.bf16.gmra.mrb[0].mxu0 %v1068
      %v1233 = vpop.f32.mrb[0].mxu0
      %v1234 = vadd.f32 0.0, %v1233
      %v1235 = vpop.f32.mrb[0].mxu0
      %v1236 = vpop.f32.mrb[0].mxu0
      %v1237 = vadd.f32 0.0, %v1236
      %v1238 = vpop.f32.mrb[0].mxu0
      %1239 = vmatprep.mubr.bf16.mxu0 0
      %1240 = vmatmul.mubr.bf16.gmra.mrb[0].mxu0 %v1071
      %v1241 = vpop.f32.mrb[0].mxu0
      %v1242 = vadd.f32 0.0, %v1241
      %v1243 = vpop.f32.mrb[0].mxu0
      %v1244 = vpop.f32.mrb[0].mxu0
      %v1245 = vadd.f32 0.0, %v1244
      %v1246 = vpop.f32.mrb[0].mxu0
      %1247 = vmatprep.mubr.bf16.mxu0 0
      %1248 = vmatmul.mubr.bf16.gmra.mrb[0].mxu0 %v1074
      %v1249 = vpop.f32.mrb[0].mxu0
      %v1250 = vadd.f32 0.0, %v1249
      %v1251 = vpop.f32.mrb[0].mxu0
      %v1252 = vpop.f32.mrb[0].mxu0
      %v1253 = vadd.f32 0.0, %v1252
      %v1254 = vpop.f32.mrb[0].mxu0
      %1255 = vdwg.mxu0
      %v1256 = vadd.f32 %v931, %v1114
      %v1257 = vadd.f32 %v932, %v1117
      %v1258 = vadd.f32 %v933, %v1122
      %v1259 = vadd.f32 %v934, %v1125
      %v1260 = vadd.f32 %v935, %v1130
      %v1261 = vadd.f32 %v936, %v1133
      %v1262 = vadd.f32 %v937, %v1138
      %v1263 = vadd.f32 %v938, %v1141
      %v1264 = vadd.f32 %v939, %v1146
      %v1265 = vadd.f32 %v940, %v1149
      %v1266 = vadd.f32 %v941, %v1154
      %v1267 = vadd.f32 %v942, %v1157
      %v1268 = vadd.f32 %v943, %v1162
      %v1269 = vadd.f32 %v944, %v1165
      %v1270 = vadd.f32 %v945, %v1170
      %v1271 = vadd.f32 %v946, %v1173
      %v1272 = vadd.f32 %v947, %v1178
      %v1273 = vadd.f32 %v948, %v1181
      %v1274 = vadd.f32 %v949, %v1186
      %v1275 = vadd.f32 %v950, %v1189
      %v1276 = vadd.f32 %v951, %v1194
      %v1277 = vadd.f32 %v952, %v1197
      %v1278 = vadd.f32 %v953, %v1202
      %v1279 = vadd.f32 %v954, %v1205
      %v1280 = vadd.f32 %v955, %v1210
      %v1281 = vadd.f32 %v956, %v1213
      %v1282 = vadd.f32 %v957, %v1218
      %v1283 = vadd.f32 %v958, %v1221
      %v1284 = vadd.f32 %v959, %v1226
      %v1285 = vadd.f32 %v960, %v1229
      %v1286 = vadd.f32 %v961, %v1234
      %v1287 = vadd.f32 %v962, %v1237
      %v1288 = vadd.f32 %v963, %v1242
      %v1289 = vadd.f32 %v964, %v1245
      %v1290 = vadd.f32 %v965, %v1250
      %v1291 = vadd.f32 %v966, %v1253
      %v1292 = vld [vmem:[#allocation2 + $0x23] sm:$0xff]
      %v1293 = vld [vmem:[#allocation2 + $0x2b] sm:$0xff]
      %v1294 = vld [vmem:[#allocation2 + $0x33] sm:$0xff]
      %v1295 = vld [vmem:[#allocation2 + $0x3b] sm:$0xff]
      %v1296 = vld [vmem:[#allocation2 + $0x43] sm:$0xff]
      %v1297 = vld [vmem:[#allocation2 + $0x4b] sm:$0xff]
      %v1298 = vld [vmem:[#allocation2 + $0x53] sm:$0xff]
      %v1299 = vld [vmem:[#allocation2 + $0x5b] sm:$0xff]
      %v1300 = vld [vmem:[#allocation2 + $0x63] sm:$0xff]
      %v1301 = vld [vmem:[#allocation2 + $0x6b] sm:$0xff]
      %v1302 = vld [vmem:[#allocation2 + $0x73] sm:$0xff]
      %v1303 = vld [vmem:[#allocation2 + $0x7b] sm:$0xff]
      %v1304 = vld [vmem:[#allocation2 + $0x83] sm:$0xff]
      %v1305 = vld [vmem:[#allocation2 + $0x8b] sm:$0xff]
      %v1306 = vld [vmem:[#allocation2 + $0x93] sm:$0xff]
      %v1307 = vld [vmem:[#allocation2 + $0x9b] sm:$0xff]
      %v1308 = vld [vmem:[#allocation2 + $0xa3] sm:$0xff]
      %v1309 = vld [vmem:[#allocation2 + $0xab] sm:$0xff]
      %v1310 = vld [vmem:[#allocation2 + $0xb3] sm:$0xff]
      %v1311 = vld [vmem:[#allocation2 + $0xbb] sm:$0xff]
      %v1312 = vld [vmem:[#allocation2 + $0xc3] sm:$0xff]
      %v1313 = vld [vmem:[#allocation2 + $0xcb] sm:$0xff]
      %v1314 = vld [vmem:[#allocation2 + $0xd3] sm:$0xff]
      %v1315 = vld [vmem:[#allocation2 + $0xdb] sm:$0xff]
      %v1316 = vld [vmem:[#allocation2 + $0xe3] sm:$0xff]
      %v1317 = vld [vmem:[#allocation2 + $0xeb] sm:$0xff]
      %v1318 = vld [vmem:[#allocation2 + $0xf3] sm:$0xff]
      %v1319 = vld [vmem:[#allocation2 + $0xfb] sm:$0xff]
      %v1320 = vld [vmem:[#allocation2 + $0x103] sm:$0xff]
      %v1321 = vld [vmem:[#allocation2 + $0x10b] sm:$0xff]
      %v1322 = vld [vmem:[#allocation2 + $0x113] sm:$0xff]
      %v1323 = vld [vmem:[#allocation2 + $0x11b] sm:$0xff]
      %v1324 = vld [vmem:[#allocation2 + $0x123] sm:$0xff]
      %v1325 = vld [vmem:[#allocation2 + $0x12b] sm:$0xff]
      %v1326 = vld [vmem:[#allocation2 + $0x133] sm:$0xff]
      %v1327 = vld [vmem:[#allocation2 + $0x13b] sm:$0xff]
      %v1328 = vpack.c.bf16 %v1293, %v1292
      %v1329 = vpack.c.bf16 %v1295, %v1294
      %v1330 = vpack.c.bf16 %v1297, %v1296
      %v1331 = vpack.c.bf16 %v1299, %v1298
      %v1332 = vpack.c.bf16 %v1301, %v1300
      %v1333 = vpack.c.bf16 %v1303, %v1302
      %v1334 = vpack.c.bf16 %v1305, %v1304
      %v1335 = vpack.c.bf16 %v1307, %v1306
      %v1336 = vpack.c.bf16 %v1309, %v1308
      %v1337 = vpack.c.bf16 %v1311, %v1310
      %v1338 = vpack.c.bf16 %v1313, %v1312
      %v1339 = vpack.c.bf16 %v1315, %v1314
      %v1340 = vpack.c.bf16 %v1317, %v1316
      %v1341 = vpack.c.bf16 %v1319, %v1318
      %v1342 = vpack.c.bf16 %v1321, %v1320
      %v1343 = vpack.c.bf16 %v1323, %v1322
      %v1344 = vpack.c.bf16 %v1325, %v1324
      %v1345 = vpack.c.bf16 %v1327, %v1326
      %v1346 = vld [vmem:[%s1 + $0xc] sm:$0xf]
      %v1348 = vsel %vm262, %v1328, 0
      %v1351 = vsel %vm262, %v1329, 0
      %v1354 = vsel %vm262, %v1330, 0
      %v1357 = vsel %vm262, %v1331, 0
      %v1360 = vsel %vm262, %v1332, 0
      %v1363 = vsel %vm262, %v1333, 0
      %v1366 = vsel %vm262, %v1334, 0
      %v1369 = vsel %vm262, %v1335, 0
      %v1372 = vsel %vm262, %v1336, 0
      %v1375 = vsel %vm262, %v1337, 0
      %v1378 = vsel %vm262, %v1338, 0
      %v1381 = vsel %vm262, %v1339, 0
      %v1384 = vsel %vm262, %v1340, 0
      %v1387 = vsel %vm262, %v1341, 0
      %v1390 = vsel %vm262, %v1342, 0
      %v1393 = vsel %vm262, %v1343, 0
      %v1396 = vsel %vm262, %v1344, 0
      %v1399 = vsel %vm262, %v1345, 0
      %v1402 = vsel %vm425, %v1346, 0
      %1404 = vmatprep.subr.bf16.mxu0 0
      %1405 = vmatpush1.bf16.msra.mxu0 %v1402
      %1406 = vmatprep.subr.bf16.mxu0 0
      %1407 = vmatpush1.bf16.msra.mxu0 0
      %1408 = vmatprep.subr.bf16.mxu0 0
      %1409 = vmatpush1.bf16.msra.mxu0 0
      %1410 = vmatprep.subr.bf16.mxu0 0
      %1411 = vmatpush1.bf16.msra.mxu0 0
      %1412 = vmatprep.subr.bf16.mxu0 0
      %1413 = vmatpush1.bf16.msra.mxu0 0
      %1414 = vmatprep.subr.bf16.mxu0 0
      %1415 = vmatpush1.bf16.msra.mxu0 0
      %1416 = vmatprep.subr.bf16.mxu0 0
      %1417 = vmatpush1.bf16.msra.mxu0 0
      %1418 = vmatprep.subr.bf16.mxu0 0
      %1419 = vmatpush1.bf16.msra.mxu0 0
      %1420 = vmatprep.subr.bf16.mxu0 0
      %1421 = vmatpush1.bf16.msra.mxu0 0
      %1422 = vmatprep.subr.bf16.mxu0 0
      %1423 = vmatpush1.bf16.msra.mxu0 0
      %1424 = vmatprep.subr.bf16.mxu0 0
      %1425 = vmatpush1.bf16.msra.mxu0 0
      %1426 = vmatprep.subr.bf16.mxu0 0
      %1427 = vmatpush1.bf16.msra.mxu0 0
      %1428 = vmatprep.subr.bf16.mxu0 0
      %1429 = vmatpush1.bf16.msra.mxu0 0
      %1430 = vmatprep.subr.bf16.mxu0 0
      %1431 = vmatpush1.bf16.msra.mxu0 0
      %1432 = vmatprep.subr.bf16.mxu0 0
      %1433 = vmatpush1.bf16.msra.mxu0 0
      %1434 = vmatprep.subr.bf16.mxu0 0
      %1435 = vmatpush1.bf16.msra.mxu0 0
      %1436 = vmatprep.mubr.bf16.mxu0 0
      %1437 = vmatmul.mubr.bf16.gmra.mrb[0].mxu0 %v1348
      %v1438 = vpop.f32.mrb[0].mxu0
      %v1439 = vadd.f32 0.0, %v1438
      %v1440 = vpop.f32.mrb[0].mxu0
      %v1441 = vpop.f32.mrb[0].mxu0
      %v1442 = vadd.f32 0.0, %v1441
      %v1443 = vpop.f32.mrb[0].mxu0
      %1444 = vmatprep.mubr.bf16.mxu0 0
      %1445 = vmatmul.mubr.bf16.gmra.mrb[0].mxu0 %v1351
      %v1446 = vpop.f32.mrb[0].mxu0
      %v1447 = vadd.f32 0.0, %v1446
      %v1448 = vpop.f32.mrb[0].mxu0
      %v1449 = vpop.f32.mrb[0].mxu0
      %v1450 = vadd.f32 0.0, %v1449
      %v1451 = vpop.f32.mrb[0].mxu0
      %1452 = vmatprep.mubr.bf16.mxu0 0
      %1453 = vmatmul.mubr.bf16.gmra.mrb[0].mxu0 %v1354
      %v1454 = vpop.f32.mrb[0].mxu0
      %v1455 = vadd.f32 0.0, %v1454
      %v1456 = vpop.f32.mrb[0].mxu0
      %v1457 = vpop.f32.mrb[0].mxu0
      %v1458 = vadd.f32 0.0, %v1457
      %v1459 = vpop.f32.mrb[0].mxu0
      %1460 = vmatprep.mubr.bf16.mxu0 0
      %1461 = vmatmul.mubr.bf16.gmra.mrb[0].mxu0 %v1357
      %v1462 = vpop.f32.mrb[0].mxu0
      %v1463 = vadd.f32 0.0, %v1462
      %v1464 = vpop.f32.mrb[0].mxu0
      %v1465 = vpop.f32.mrb[0].mxu0
      %v1466 = vadd.f32 0.0, %v1465
      %v1467 = vpop.f32.mrb[0].mxu0
      %1468 = vmatprep.mubr.bf16.mxu0 0
      %1469 = vmatmul.mubr.bf16.gmra.mrb[0].mxu0 %v1360
      %v1470 = vpop.f32.mrb[0].mxu0
      %v1471 = vadd.f32 0.0, %v1470
      %v1472 = vpop.f32.mrb[0].mxu0
      %v1473 = vpop.f32.mrb[0].mxu0
      %v1474 = vadd.f32 0.0, %v1473
      %v1475 = vpop.f32.mrb[0].mxu0
      %1476 = vmatprep.mubr.bf16.mxu0 0
      %1477 = vmatmul.mubr.bf16.gmra.mrb[0].mxu0 %v1363
      %v1478 = vpop.f32.mrb[0].mxu0
      %v1479 = vadd.f32 0.0, %v1478
      %v1480 = vpop.f32.mrb[0].mxu0
      %v1481 = vpop.f32.mrb[0].mxu0
      %v1482 = vadd.f32 0.0, %v1481
      %v1483 = vpop.f32.mrb[0].mxu0
      %1484 = vmatprep.mubr.bf16.mxu0 0
      %1485 = vmatmul.mubr.bf16.gmra.mrb[0].mxu0 %v1366
      %v1486 = vpop.f32.mrb[0].mxu0
      %v1487 = vadd.f32 0.0, %v1486
      %v1488 = vpop.f32.mrb[0].mxu0
      %v1489 = vpop.f32.mrb[0].mxu0
      %v1490 = vadd.f32 0.0, %v1489
      %v1491 = vpop.f32.mrb[0].mxu0
      %1492 = vmatprep.mubr.bf16.mxu0 0
      %1493 = vmatmul.mubr.bf16.gmra.mrb[0].mxu0 %v1369
      %v1494 = vpop.f32.mrb[0].mxu0
      %v1495 = vadd.f32 0.0, %v1494
      %v1496 = vpop.f32.mrb[0].mxu0
      %v1497 = vpop.f32.mrb[0].mxu0
      %v1498 = vadd.f32 0.0, %v1497
      %v1499 = vpop.f32.mrb[0].mxu0
      %1500 = vmatprep.mubr.bf16.mxu0 0
      %1501 = vmatmul.mubr.bf16.gmra.mrb[0].mxu0 %v1372
      %v1502 = vpop.f32.mrb[0].mxu0
      %v1503 = vadd.f32 0.0, %v1502
      %v1504 = vpop.f32.mrb[0].mxu0
      %v1505 = vpop.f32.mrb[0].mxu0
      %v1506 = vadd.f32 0.0, %v1505
      %v1507 = vpop.f32.mrb[0].mxu0
      %1508 = vmatprep.mubr.bf16.mxu0 0
      %1509 = vmatmul.mubr.bf16.gmra.mrb[0].mxu0 %v1375
      %v1510 = vpop.f32.mrb[0].mxu0
      %v1511 = vadd.f32 0.0, %v1510
      %v1512 = vpop.f32.mrb[0].mxu0
      %v1513 = vpop.f32.mrb[0].mxu0
      %v1514 = vadd.f32 0.0, %v1513
      %v1515 = vpop.f32.mrb[0].mxu0
      %1516 = vmatprep.mubr.bf16.mxu0 0
      %1517 = vmatmul.mubr.bf16.gmra.mrb[0].mxu0 %v1378
      %v1518 = vpop.f32.mrb[0].mxu0
      %v1519 = vadd.f32 0.0, %v1518
      %v1520 = vpop.f32.mrb[0].mxu0
      %v1521 = vpop.f32.mrb[0].mxu0
      %v1522 = vadd.f32 0.0, %v1521
      %v1523 = vpop.f32.mrb[0].mxu0
      %1524 = vmatprep.mubr.bf16.mxu0 0
      %1525 = vmatmul.mubr.bf16.gmra.mrb[0].mxu0 %v1381
      %v1526 = vpop.f32.mrb[0].mxu0
      %v1527 = vadd.f32 0.0, %v1526
      %v1528 = vpop.f32.mrb[0].mxu0
      %v1529 = vpop.f32.mrb[0].mxu0
      %v1530 = vadd.f32 0.0, %v1529
      %v1531 = vpop.f32.mrb[0].mxu0
      %1532 = vmatprep.mubr.bf16.mxu0 0
      %1533 = vmatmul.mubr.bf16.gmra.mrb[0].mxu0 %v1384
      %v1534 = vpop.f32.mrb[0].mxu0
      %v1535 = vadd.f32 0.0, %v1534
      %v1536 = vpop.f32.mrb[0].mxu0
      %v1537 = vpop.f32.mrb[0].mxu0
      %v1538 = vadd.f32 0.0, %v1537
      %v1539 = vpop.f32.mrb[0].mxu0
      %1540 = vmatprep.mubr.bf16.mxu0 0
      %1541 = vmatmul.mubr.bf16.gmra.mrb[0].mxu0 %v1387
      %v1542 = vpop.f32.mrb[0].mxu0
      %v1543 = vadd.f32 0.0, %v1542
      %v1544 = vpop.f32.mrb[0].mxu0
      %v1545 = vpop.f32.mrb[0].mxu0
      %v1546 = vadd.f32 0.0, %v1545
      %v1547 = vpop.f32.mrb[0].mxu0
      %1548 = vmatprep.mubr.bf16.mxu0 0
      %1549 = vmatmul.mubr.bf16.gmra.mrb[0].mxu0 %v1390
      %v1550 = vpop.f32.mrb[0].mxu0
      %v1551 = vadd.f32 0.0, %v1550
      %v1552 = vpop.f32.mrb[0].mxu0
      %v1553 = vpop.f32.mrb[0].mxu0
      %v1554 = vadd.f32 0.0, %v1553
      %v1555 = vpop.f32.mrb[0].mxu0
      %1556 = vmatprep.mubr.bf16.mxu0 0
      %1557 = vmatmul.mubr.bf16.gmra.mrb[0].mxu0 %v1393
      %v1558 = vpop.f32.mrb[0].mxu0
      %v1559 = vadd.f32 0.0, %v1558
      %v1560 = vpop.f32.mrb[0].mxu0
      %v1561 = vpop.f32.mrb[0].mxu0
      %v1562 = vadd.f32 0.0, %v1561
      %v1563 = vpop.f32.mrb[0].mxu0
      %1564 = vmatprep.mubr.bf16.mxu0 0
      %1565 = vmatmul.mubr.bf16.gmra.mrb[0].mxu0 %v1396
      %v1566 = vpop.f32.mrb[0].mxu0
      %v1567 = vadd.f32 0.0, %v1566
      %v1568 = vpop.f32.mrb[0].mxu0
      %v1569 = vpop.f32.mrb[0].mxu0
      %v1570 = vadd.f32 0.0, %v1569
      %v1571 = vpop.f32.mrb[0].mxu0
      %1572 = vmatprep.mubr.bf16.mxu0 0
      %1573 = vmatmul.mubr.bf16.gmra.mrb[0].mxu0 %v1399
      %v1574 = vpop.f32.mrb[0].mxu0
      %v1575 = vadd.f32 0.0, %v1574
      %v1576 = vpop.f32.mrb[0].mxu0
      %v1577 = vpop.f32.mrb[0].mxu0
      %v1578 = vadd.f32 0.0, %v1577
      %v1579 = vpop.f32.mrb[0].mxu0
      %1580 = vdwg.mxu0
      %v1581 = vadd.f32 %v1256, %v1439
      %v1582 = vadd.f32 %v1257, %v1442
      %v1583 = vadd.f32 %v1258, %v1447
      %v1584 = vadd.f32 %v1259, %v1450
      %v1585 = vadd.f32 %v1260, %v1455
      %v1586 = vadd.f32 %v1261, %v1458
      %v1587 = vadd.f32 %v1262, %v1463
      %v1588 = vadd.f32 %v1263, %v1466
      %v1589 = vadd.f32 %v1264, %v1471
      %v1590 = vadd.f32 %v1265, %v1474
      %v1591 = vadd.f32 %v1266, %v1479
      %v1592 = vadd.f32 %v1267, %v1482
      %v1593 = vadd.f32 %v1268, %v1487
      %v1594 = vadd.f32 %v1269, %v1490
      %v1595 = vadd.f32 %v1270, %v1495
      %v1596 = vadd.f32 %v1271, %v1498
      %v1597 = vadd.f32 %v1272, %v1503
      %v1598 = vadd.f32 %v1273, %v1506
      %v1599 = vadd.f32 %v1274, %v1511
      %v1600 = vadd.f32 %v1275, %v1514
      %v1601 = vadd.f32 %v1276, %v1519
      %v1602 = vadd.f32 %v1277, %v1522
      %v1603 = vadd.f32 %v1278, %v1527
      %v1604 = vadd.f32 %v1279, %v1530
      %v1605 = vadd.f32 %v1280, %v1535
      %v1606 = vadd.f32 %v1281, %v1538
      %v1607 = vadd.f32 %v1282, %v1543
      %v1608 = vadd.f32 %v1283, %v1546
      %v1609 = vadd.f32 %v1284, %v1551
      %v1610 = vadd.f32 %v1285, %v1554
      %v1611 = vadd.f32 %v1286, %v1559
      %v1612 = vadd.f32 %v1287, %v1562
      %v1613 = vadd.f32 %v1288, %v1567
      %v1614 = vadd.f32 %v1289, %v1570
      %v1615 = vadd.f32 %v1290, %v1575
      %v1616 = vadd.f32 %v1291, %v1578
      %v1617 = vld [vmem:[#allocation2 + $0x24] sm:$0xff]
      %v1618 = vld [vmem:[#allocation2 + $0x2c] sm:$0xff]
      %v1619 = vld [vmem:[#allocation2 + $0x34] sm:$0xff]
      %v1620 = vld [vmem:[#allocation2 + $0x3c] sm:$0xff]
      %v1621 = vld [vmem:[#allocation2 + $0x44] sm:$0xff]
      %v1622 = vld [vmem:[#allocation2 + $0x4c] sm:$0xff]
      %v1623 = vld [vmem:[#allocation2 + $0x54] sm:$0xff]
      %v1624 = vld [vmem:[#allocation2 + $0x5c] sm:$0xff]
      %v1625 = vld [vmem:[#allocation2 + $0x64] sm:$0xff]
      %v1626 = vld [vmem:[#allocation2 + $0x6c] sm:$0xff]
      %v1627 = vld [vmem:[#allocation2 + $0x74] sm:$0xff]
      %v1628 = vld [vmem:[#allocation2 + $0x7c] sm:$0xff]
      %v1629 = vld [vmem:[#allocation2 + $0x84] sm:$0xff]
      %v1630 = vld [vmem:[#allocation2 + $0x8c] sm:$0xff]
      %v1631 = vld [vmem:[#allocation2 + $0x94] sm:$0xff]
      %v1632 = vld [vmem:[#allocation2 + $0x9c] sm:$0xff]
      %v1633 = vld [vmem:[#allocation2 + $0xa4] sm:$0xff]
      %v1634 = vld [vmem:[#allocation2 + $0xac] sm:$0xff]
      %v1635 = vld [vmem:[#allocation2 + $0xb4] sm:$0xff]
      %v1636 = vld [vmem:[#allocation2 + $0xbc] sm:$0xff]
      %v1637 = vld [vmem:[#allocation2 + $0xc4] sm:$0xff]
      %v1638 = vld [vmem:[#allocation2 + $0xcc] sm:$0xff]
      %v1639 = vld [vmem:[#allocation2 + $0xd4] sm:$0xff]
      %v1640 = vld [vmem:[#allocation2 + $0xdc] sm:$0xff]
      %v1641 = vld [vmem:[#allocation2 + $0xe4] sm:$0xff]
      %v1642 = vld [vmem:[#allocation2 + $0xec] sm:$0xff]
      %v1643 = vld [vmem:[#allocation2 + $0xf4] sm:$0xff]
      %v1644 = vld [vmem:[#allocation2 + $0xfc] sm:$0xff]
      %v1645 = vld [vmem:[#allocation2 + $0x104] sm:$0xff]
      %v1646 = vld [vmem:[#allocation2 + $0x10c] sm:$0xff]
      %v1647 = vld [vmem:[#allocation2 + $0x114] sm:$0xff]
      %v1648 = vld [vmem:[#allocation2 + $0x11c] sm:$0xff]
      %v1649 = vld [vmem:[#allocation2 + $0x124] sm:$0xff]
      %v1650 = vld [vmem:[#allocation2 + $0x12c] sm:$0xff]
      %v1651 = vld [vmem:[#allocation2 + $0x134] sm:$0xff]
      %v1652 = vld [vmem:[#allocation2 + $0x13c] sm:$0xff]
      %v1653 = vpack.c.bf16 %v1618, %v1617
      %v1654 = vpack.c.bf16 %v1620, %v1619
      %v1655 = vpack.c.bf16 %v1622, %v1621
      %v1656 = vpack.c.bf16 %v1624, %v1623
      %v1657 = vpack.c.bf16 %v1626, %v1625
      %v1658 = vpack.c.bf16 %v1628, %v1627
      %v1659 = vpack.c.bf16 %v1630, %v1629
      %v1660 = vpack.c.bf16 %v1632, %v1631
      %v1661 = vpack.c.bf16 %v1634, %v1633
      %v1662 = vpack.c.bf16 %v1636, %v1635
      %v1663 = vpack.c.bf16 %v1638, %v1637
      %v1664 = vpack.c.bf16 %v1640, %v1639
      %v1665 = vpack.c.bf16 %v1642, %v1641
      %v1666 = vpack.c.bf16 %v1644, %v1643
      %v1667 = vpack.c.bf16 %v1646, %v1645
      %v1668 = vpack.c.bf16 %v1648, %v1647
      %v1669 = vpack.c.bf16 %v1650, %v1649
      %v1670 = vpack.c.bf16 %v1652, %v1651
      %v1671 = vld [vmem:[%s1 + $0x10] sm:$0xf]
      %v1673 = vsel %vm262, %v1653, 0
      %v1676 = vsel %vm262, %v1654, 0
      %v1679 = vsel %vm262, %v1655, 0
      %v1682 = vsel %vm262, %v1656, 0
      %v1685 = vsel %vm262, %v1657, 0
      %v1688 = vsel %vm262, %v1658, 0
      %v1691 = vsel %vm262, %v1659, 0
      %v1694 = vsel %vm262, %v1660, 0
      %v1697 = vsel %vm262, %v1661, 0
      %v1700 = vsel %vm262, %v1662, 0
      %v1703 = vsel %vm262, %v1663, 0
      %v1706 = vsel %vm262, %v1664, 0
      %v1709 = vsel %vm262, %v1665, 0
      %v1712 = vsel %vm262, %v1666, 0
      %v1715 = vsel %vm262, %v1667, 0
      %v1718 = vsel %vm262, %v1668, 0
      %v1721 = vsel %vm262, %v1669, 0
      %v1724 = vsel %vm262, %v1670, 0
      %v1727 = vsel %vm425, %v1671, 0
      %1729 = vmatprep.subr.bf16.mxu0 0
      %1730 = vmatpush1.bf16.msra.mxu0 %v1727
      %1731 = vmatprep.subr.bf16.mxu0 0
      %1732 = vmatpush1.bf16.msra.mxu0 0
      %1733 = vmatprep.subr.bf16.mxu0 0
      %1734 = vmatpush1.bf16.msra.mxu0 0
      %1735 = vmatprep.subr.bf16.mxu0 0
      %1736 = vmatpush1.bf16.msra.mxu0 0
      %1737 = vmatprep.subr.bf16.mxu0 0
      %1738 = vmatpush1.bf16.msra.mxu0 0
      %1739 = vmatprep.subr.bf16.mxu0 0
      %1740 = vmatpush1.bf16.msra.mxu0 0
      %1741 = vmatprep.subr.bf16.mxu0 0
      %1742 = vmatpush1.bf16.msra.mxu0 0
      %1743 = vmatprep.subr.bf16.mxu0 0
      %1744 = vmatpush1.bf16.msra.mxu0 0
      %1745 = vmatprep.subr.bf16.mxu0 0
      %1746 = vmatpush1.bf16.msra.mxu0 0
      %1747 = vmatprep.subr.bf16.mxu0 0
      %1748 = vmatpush1.bf16.msra.mxu0 0
      %1749 = vmatprep.subr.bf16.mxu0 0
      %1750 = vmatpush1.bf16.msra.mxu0 0
      %1751 = vmatprep.subr.bf16.mxu0 0
      %1752 = vmatpush1.bf16.msra.mxu0 0
      %1753 = vmatprep.subr.bf16.mxu0 0
      %1754 = vmatpush1.bf16.msra.mxu0 0
      %1755 = vmatprep.subr.bf16.mxu0 0
      %1756 = vmatpush1.bf16.msra.mxu0 0
      %1757 = vmatprep.subr.bf16.mxu0 0
      %1758 = vmatpush1.bf16.msra.mxu0 0
      %1759 = vmatprep.subr.bf16.mxu0 0
      %1760 = vmatpush1.bf16.msra.mxu0 0
      %1761 = vmatprep.mubr.bf16.mxu0 0
      %1762 = vmatmul.mubr.bf16.gmra.mrb[0].mxu0 %v1673
      %v1763 = vpop.f32.mrb[0].mxu0
      %v1764 = vadd.f32 0.0, %v1763
      %v1765 = vpop.f32.mrb[0].mxu0
      %v1766 = vpop.f32.mrb[0].mxu0
      %v1767 = vadd.f32 0.0, %v1766
      %v1768 = vpop.f32.mrb[0].mxu0
      %1769 = vmatprep.mubr.bf16.mxu0 0
      %1770 = vmatmul.mubr.bf16.gmra.mrb[0].mxu0 %v1676
      %v1771 = vpop.f32.mrb[0].mxu0
      %v1772 = vadd.f32 0.0, %v1771
      %v1773 = vpop.f32.mrb[0].mxu0
      %v1774 = vpop.f32.mrb[0].mxu0
      %v1775 = vadd.f32 0.0, %v1774
      %v1776 = vpop.f32.mrb[0].mxu0
      %1777 = vmatprep.mubr.bf16.mxu0 0
      %1778 = vmatmul.mubr.bf16.gmra.mrb[0].mxu0 %v1679
      %v1779 = vpop.f32.mrb[0].mxu0
      %v1780 = vadd.f32 0.0, %v1779
      %v1781 = vpop.f32.mrb[0].mxu0
      %v1782 = vpop.f32.mrb[0].mxu0
      %v1783 = vadd.f32 0.0, %v1782
      %v1784 = vpop.f32.mrb[0].mxu0
      %1785 = vmatprep.mubr.bf16.mxu0 0
      %1786 = vmatmul.mubr.bf16.gmra.mrb[0].mxu0 %v1682
      %v1787 = vpop.f32.mrb[0].mxu0
      %v1788 = vadd.f32 0.0, %v1787
      %v1789 = vpop.f32.mrb[0].mxu0
      %v1790 = vpop.f32.mrb[0].mxu0
      %v1791 = vadd.f32 0.0, %v1790
      %v1792 = vpop.f32.mrb[0].mxu0
      %1793 = vmatprep.mubr.bf16.mxu0 0
      %1794 = vmatmul.mubr.bf16.gmra.mrb[0].mxu0 %v1685
      %v1795 = vpop.f32.mrb[0].mxu0
      %v1796 = vadd.f32 0.0, %v1795
      %v1797 = vpop.f32.mrb[0].mxu0
      %v1798 = vpop.f32.mrb[0].mxu0
      %v1799 = vadd.f32 0.0, %v1798
      %v1800 = vpop.f32.mrb[0].mxu0
      %1801 = vmatprep.mubr.bf16.mxu0 0
      %1802 = vmatmul.mubr.bf16.gmra.mrb[0].mxu0 %v1688
      %v1803 = vpop.f32.mrb[0].mxu0
      %v1804 = vadd.f32 0.0, %v1803
      %v1805 = vpop.f32.mrb[0].mxu0
      %v1806 = vpop.f32.mrb[0].mxu0
      %v1807 = vadd.f32 0.0, %v1806
      %v1808 = vpop.f32.mrb[0].mxu0
      %1809 = vmatprep.mubr.bf16.mxu0 0
      %1810 = vmatmul.mubr.bf16.gmra.mrb[0].mxu0 %v1691
      %v1811 = vpop.f32.mrb[0].mxu0
      %v1812 = vadd.f32 0.0, %v1811
      %v1813 = vpop.f32.mrb[0].mxu0
      %v1814 = vpop.f32.mrb[0].mxu0
      %v1815 = vadd.f32 0.0, %v1814
      %v1816 = vpop.f32.mrb[0].mxu0
      %1817 = vmatprep.mubr.bf16.mxu0 0
      %1818 = vmatmul.mubr.bf16.gmra.mrb[0].mxu0 %v1694
      %v1819 = vpop.f32.mrb[0].mxu0
      %v1820 = vadd.f32 0.0, %v1819
      %v1821 = vpop.f32.mrb[0].mxu0
      %v1822 = vpop.f32.mrb[0].mxu0
      %v1823 = vadd.f32 0.0, %v1822
      %v1824 = vpop.f32.mrb[0].mxu0
      %1825 = vmatprep.mubr.bf16.mxu0 0
      %1826 = vmatmul.mubr.bf16.gmra.mrb[0].mxu0 %v1697
      %v1827 = vpop.f32.mrb[0].mxu0
      %v1828 = vadd.f32 0.0, %v1827
      %v1829 = vpop.f32.mrb[0].mxu0
      %v1830 = vpop.f32.mrb[0].mxu0
      %v1831 = vadd.f32 0.0, %v1830
      %v1832 = vpop.f32.mrb[0].mxu0
      %1833 = vmatprep.mubr.bf16.mxu0 0
      %1834 = vmatmul.mubr.bf16.gmra.mrb[0].mxu0 %v1700
      %v1835 = vpop.f32.mrb[0].mxu0
      %v1836 = vadd.f32 0.0, %v1835
      %v1837 = vpop.f32.mrb[0].mxu0
      %v1838 = vpop.f32.mrb[0].mxu0
      %v1839 = vadd.f32 0.0, %v1838
      %v1840 = vpop.f32.mrb[0].mxu0
      %1841 = vmatprep.mubr.bf16.mxu0 0
      %1842 = vmatmul.mubr.bf16.gmra.mrb[0].mxu0 %v1703
      %v1843 = vpop.f32.mrb[0].mxu0
      %v1844 = vadd.f32 0.0, %v1843
      %v1845 = vpop.f32.mrb[0].mxu0
      %v1846 = vpop.f32.mrb[0].mxu0
      %v1847 = vadd.f32 0.0, %v1846
      %v1848 = vpop.f32.mrb[0].mxu0
      %1849 = vmatprep.mubr.bf16.mxu0 0
      %1850 = vmatmul.mubr.bf16.gmra.mrb[0].mxu0 %v1706
      %v1851 = vpop.f32.mrb[0].mxu0
      %v1852 = vadd.f32 0.0, %v1851
      %v1853 = vpop.f32.mrb[0].mxu0
      %v1854 = vpop.f32.mrb[0].mxu0
      %v1855 = vadd.f32 0.0, %v1854
      %v1856 = vpop.f32.mrb[0].mxu0
      %1857 = vmatprep.mubr.bf16.mxu0 0
      %1858 = vmatmul.mubr.bf16.gmra.mrb[0].mxu0 %v1709
      %v1859 = vpop.f32.mrb[0].mxu0
      %v1860 = vadd.f32 0.0, %v1859
      %v1861 = vpop.f32.mrb[0].mxu0
      %v1862 = vpop.f32.mrb[0].mxu0
      %v1863 = vadd.f32 0.0, %v1862
      %v1864 = vpop.f32.mrb[0].mxu0
      %1865 = vmatprep.mubr.bf16.mxu0 0
      %1866 = vmatmul.mubr.bf16.gmra.mrb[0].mxu0 %v1712
      %v1867 = vpop.f32.mrb[0].mxu0
      %v1868 = vadd.f32 0.0, %v1867
      %v1869 = vpop.f32.mrb[0].mxu0
      %v1870 = vpop.f32.mrb[0].mxu0
      %v1871 = vadd.f32 0.0, %v1870
      %v1872 = vpop.f32.mrb[0].mxu0
      %1873 = vmatprep.mubr.bf16.mxu0 0
      %1874 = vmatmul.mubr.bf16.gmra.mrb[0].mxu0 %v1715
      %v1875 = vpop.f32.mrb[0].mxu0
      %v1876 = vadd.f32 0.0, %v1875
      %v1877 = vpop.f32.mrb[0].mxu0
      %v1878 = vpop.f32.mrb[0].mxu0
      %v1879 = vadd.f32 0.0, %v1878
      %v1880 = vpop.f32.mrb[0].mxu0
      %1881 = vmatprep.mubr.bf16.mxu0 0
      %1882 = vmatmul.mubr.bf16.gmra.mrb[0].mxu0 %v1718
      %v1883 = vpop.f32.mrb[0].mxu0
      %v1884 = vadd.f32 0.0, %v1883
      %v1885 = vpop.f32.mrb[0].mxu0
      %v1886 = vpop.f32.mrb[0].mxu0
      %v1887 = vadd.f32 0.0, %v1886
      %v1888 = vpop.f32.mrb[0].mxu0
      %1889 = vmatprep.mubr.bf16.mxu0 0
      %1890 = vmatmul.mubr.bf16.gmra.mrb[0].mxu0 %v1721
      %v1891 = vpop.f32.mrb[0].mxu0
      %v1892 = vadd.f32 0.0, %v1891
      %v1893 = vpop.f32.mrb[0].mxu0
      %v1894 = vpop.f32.mrb[0].mxu0
      %v1895 = vadd.f32 0.0, %v1894
      %v1896 = vpop.f32.mrb[0].mxu0
      %1897 = vmatprep.mubr.bf16.mxu0 0
      %1898 = vmatmul.mubr.bf16.gmra.mrb[0].mxu0 %v1724
      %v1899 = vpop.f32.mrb[0].mxu0
      %v1900 = vadd.f32 0.0, %v1899
      %v1901 = vpop.f32.mrb[0].mxu0
      %v1902 = vpop.f32.mrb[0].mxu0
      %v1903 = vadd.f32 0.0, %v1902
      %v1904 = vpop.f32.mrb[0].mxu0
      %1905 = vdwg.mxu0
      %v1906 = vadd.f32 %v1581, %v1764
      %v1907 = vadd.f32 %v1582, %v1767
      %v1908 = vadd.f32 %v1583, %v1772
      %v1909 = vadd.f32 %v1584, %v1775
      %v1910 = vadd.f32 %v1585, %v1780
      %v1911 = vadd.f32 %v1586, %v1783
      %v1912 = vadd.f32 %v1587, %v1788
      %v1913 = vadd.f32 %v1588, %v1791
      %v1914 = vadd.f32 %v1589, %v1796
      %v1915 = vadd.f32 %v1590, %v1799
      %v1916 = vadd.f32 %v1591, %v1804
      %v1917 = vadd.f32 %v1592, %v1807
      %v1918 = vadd.f32 %v1593, %v1812
      %v1919 = vadd.f32 %v1594, %v1815
      %v1920 = vadd.f32 %v1595, %v1820
      %v1921 = vadd.f32 %v1596, %v1823
      %v1922 = vadd.f32 %v1597, %v1828
      %v1923 = vadd.f32 %v1598, %v1831
      %v1924 = vadd.f32 %v1599, %v1836
      %v1925 = vadd.f32 %v1600, %v1839
      %v1926 = vadd.f32 %v1601, %v1844
      %v1927 = vadd.f32 %v1602, %v1847
      %v1928 = vadd.f32 %v1603, %v1852
      %v1929 = vadd.f32 %v1604, %v1855
      %v1930 = vadd.f32 %v1605, %v1860
      %v1931 = vadd.f32 %v1606, %v1863
      %v1932 = vadd.f32 %v1607, %v1868
      %v1933 = vadd.f32 %v1608, %v1871
      %v1934 = vadd.f32 %v1609, %v1876
      %v1935 = vadd.f32 %v1610, %v1879
      %v1936 = vadd.f32 %v1611, %v1884
      %v1937 = vadd.f32 %v1612, %v1887
      %v1938 = vadd.f32 %v1613, %v1892
      %v1939 = vadd.f32 %v1614, %v1895
      %v1940 = vadd.f32 %v1615, %v1900
      %v1941 = vadd.f32 %v1616, %v1903
      %v1942 = vld [vmem:[#allocation2 + $0x25] sm:$0xff]
      %v1943 = vld [vmem:[#allocation2 + $0x2d] sm:$0xff]
      %v1944 = vld [vmem:[#allocation2 + $0x35] sm:$0xff]
      %v1945 = vld [vmem:[#allocation2 + $0x3d] sm:$0xff]
      %v1946 = vld [vmem:[#allocation2 + $0x45] sm:$0xff]
      %v1947 = vld [vmem:[#allocation2 + $0x4d] sm:$0xff]
      %v1948 = vld [vmem:[#allocation2 + $0x55] sm:$0xff]
      %v1949 = vld [vmem:[#allocation2 + $0x5d] sm:$0xff]
      %v1950 = vld [vmem:[#allocation2 + $0x65] sm:$0xff]
      %v1951 = vld [vmem:[#allocation2 + $0x6d] sm:$0xff]
      %v1952 = vld [vmem:[#allocation2 + $0x75] sm:$0xff]
      %v1953 = vld [vmem:[#allocation2 + $0x7d] sm:$0xff]
      %v1954 = vld [vmem:[#allocation2 + $0x85] sm:$0xff]
      %v1955 = vld [vmem:[#allocation2 + $0x8d] sm:$0xff]
      %v1956 = vld [vmem:[#allocation2 + $0x95] sm:$0xff]
      %v1957 = vld [vmem:[#allocation2 + $0x9d] sm:$0xff]
      %v1958 = vld [vmem:[#allocation2 + $0xa5] sm:$0xff]
      %v1959 = vld [vmem:[#allocation2 + $0xad] sm:$0xff]
      %v1960 = vld [vmem:[#allocation2 + $0xb5] sm:$0xff]
      %v1961 = vld [vmem:[#allocation2 + $0xbd] sm:$0xff]
      %v1962 = vld [vmem:[#allocation2 + $0xc5] sm:$0xff]
      %v1963 = vld [vmem:[#allocation2 + $0xcd] sm:$0xff]
      %v1964 = vld [vmem:[#allocation2 + $0xd5] sm:$0xff]
      %v1965 = vld [vmem:[#allocation2 + $0xdd] sm:$0xff]
      %v1966 = vld [vmem:[#allocation2 + $0xe5] sm:$0xff]
      %v1967 = vld [vmem:[#allocation2 + $0xed] sm:$0xff]
      %v1968 = vld [vmem:[#allocation2 + $0xf5] sm:$0xff]
      %v1969 = vld [vmem:[#allocation2 + $0xfd] sm:$0xff]
      %v1970 = vld [vmem:[#allocation2 + $0x105] sm:$0xff]
      %v1971 = vld [vmem:[#allocation2 + $0x10d] sm:$0xff]
      %v1972 = vld [vmem:[#allocation2 + $0x115] sm:$0xff]
      %v1973 = vld [vmem:[#allocation2 + $0x11d] sm:$0xff]
      %v1974 = vld [vmem:[#allocation2 + $0x125] sm:$0xff]
      %v1975 = vld [vmem:[#allocation2 + $0x12d] sm:$0xff]
      %v1976 = vld [vmem:[#allocation2 + $0x135] sm:$0xff]
      %v1977 = vld [vmem:[#allocation2 + $0x13d] sm:$0xff]
      %v1978 = vpack.c.bf16 %v1943, %v1942
      %v1979 = vpack.c.bf16 %v1945, %v1944
      %v1980 = vpack.c.bf16 %v1947, %v1946
      %v1981 = vpack.c.bf16 %v1949, %v1948
      %v1982 = vpack.c.bf16 %v1951, %v1950
      %v1983 = vpack.c.bf16 %v1953, %v1952
      %v1984 = vpack.c.bf16 %v1955, %v1954
      %v1985 = vpack.c.bf16 %v1957, %v1956
      %v1986 = vpack.c.bf16 %v1959, %v1958
      %v1987 = vpack.c.bf16 %v1961, %v1960
      %v1988 = vpack.c.bf16 %v1963, %v1962
      %v1989 = vpack.c.bf16 %v1965, %v1964
      %v1990 = vpack.c.bf16 %v1967, %v1966
      %v1991 = vpack.c.bf16 %v1969, %v1968
      %v1992 = vpack.c.bf16 %v1971, %v1970
      %v1993 = vpack.c.bf16 %v1973, %v1972
      %v1994 = vpack.c.bf16 %v1975, %v1974
      %v1995 = vpack.c.bf16 %v1977, %v1976
      %v1996 = vld [vmem:[%s1 + $0x14] sm:$0xf]
      %v1998 = vsel %vm262, %v1978, 0
      %v2001 = vsel %vm262, %v1979, 0
      %v2004 = vsel %vm262, %v1980, 0
      %v2007 = vsel %vm262, %v1981, 0
      %v2010 = vsel %vm262, %v1982, 0
      %v2013 = vsel %vm262, %v1983, 0
      %v2016 = vsel %vm262, %v1984, 0
      %v2019 = vsel %vm262, %v1985, 0
      %v2022 = vsel %vm262, %v1986, 0
      %v2025 = vsel %vm262, %v1987, 0
      %v2028 = vsel %vm262, %v1988, 0
      %v2031 = vsel %vm262, %v1989, 0
      %v2034 = vsel %vm262, %v1990, 0
      %v2037 = vsel %vm262, %v1991, 0
      %v2040 = vsel %vm262, %v1992, 0
      %v2043 = vsel %vm262, %v1993, 0
      %v2046 = vsel %vm262, %v1994, 0
      %v2049 = vsel %vm262, %v1995, 0
      %v2052 = vsel %vm425, %v1996, 0
      %2054 = vmatprep.subr.bf16.mxu0 0
      %2055 = vmatpush1.bf16.msra.mxu0 %v2052
      %2056 = vmatprep.subr.bf16.mxu0 0
      %2057 = vmatpush1.bf16.msra.mxu0 0
      %2058 = vmatprep.subr.bf16.mxu0 0
      %2059 = vmatpush1.bf16.msra.mxu0 0
      %2060 = vmatprep.subr.bf16.mxu0 0
      %2061 = vmatpush1.bf16.msra.mxu0 0
      %2062 = vmatprep.subr.bf16.mxu0 0
      %2063 = vmatpush1.bf16.msra.mxu0 0
      %2064 = vmatprep.subr.bf16.mxu0 0
      %2065 = vmatpush1.bf16.msra.mxu0 0
      %2066 = vmatprep.subr.bf16.mxu0 0
      %2067 = vmatpush1.bf16.msra.mxu0 0
      %2068 = vmatprep.subr.bf16.mxu0 0
      %2069 = vmatpush1.bf16.msra.mxu0 0
      %2070 = vmatprep.subr.bf16.mxu0 0
      %2071 = vmatpush1.bf16.msra.mxu0 0
      %2072 = vmatprep.subr.bf16.mxu0 0
      %2073 = vmatpush1.bf16.msra.mxu0 0
      %2074 = vmatprep.subr.bf16.mxu0 0
      %2075 = vmatpush1.bf16.msra.mxu0 0
      %2076 = vmatprep.subr.bf16.mxu0 0
      %2077 = vmatpush1.bf16.msra.mxu0 0
      %2078 = vmatprep.subr.bf16.mxu0 0
      %2079 = vmatpush1.bf16.msra.mxu0 0
      %2080 = vmatprep.subr.bf16.mxu0 0
      %2081 = vmatpush1.bf16.msra.mxu0 0
      %2082 = vmatprep.subr.bf16.mxu0 0
      %2083 = vmatpush1.bf16.msra.mxu0 0
      %2084 = vmatprep.subr.bf16.mxu0 0
      %2085 = vmatpush1.bf16.msra.mxu0 0
      %2086 = vmatprep.mubr.bf16.mxu0 0
      %2087 = vmatmul.mubr.bf16.gmra.mrb[0].mxu0 %v1998
      %v2088 = vpop.f32.mrb[0].mxu0
      %v2089 = vadd.f32 0.0, %v2088
      %v2090 = vpop.f32.mrb[0].mxu0
      %v2091 = vpop.f32.mrb[0].mxu0
      %v2092 = vadd.f32 0.0, %v2091
      %v2093 = vpop.f32.mrb[0].mxu0
      %2094 = vmatprep.mubr.bf16.mxu0 0
      %2095 = vmatmul.mubr.bf16.gmra.mrb[0].mxu0 %v2001
      %v2096 = vpop.f32.mrb[0].mxu0
      %v2097 = vadd.f32 0.0, %v2096
      %v2098 = vpop.f32.mrb[0].mxu0
      %v2099 = vpop.f32.mrb[0].mxu0
      %v2100 = vadd.f32 0.0, %v2099
      %v2101 = vpop.f32.mrb[0].mxu0
      %2102 = vmatprep.mubr.bf16.mxu0 0
      %2103 = vmatmul.mubr.bf16.gmra.mrb[0].mxu0 %v2004
      %v2104 = vpop.f32.mrb[0].mxu0
      %v2105 = vadd.f32 0.0, %v2104
      %v2106 = vpop.f32.mrb[0].mxu0
      %v2107 = vpop.f32.mrb[0].mxu0
      %v2108 = vadd.f32 0.0, %v2107
      %v2109 = vpop.f32.mrb[0].mxu0
      %2110 = vmatprep.mubr.bf16.mxu0 0
      %2111 = vmatmul.mubr.bf16.gmra.mrb[0].mxu0 %v2007
      %v2112 = vpop.f32.mrb[0].mxu0
      %v2113 = vadd.f32 0.0, %v2112
      %v2114 = vpop.f32.mrb[0].mxu0
      %v2115 = vpop.f32.mrb[0].mxu0
      %v2116 = vadd.f32 0.0, %v2115
      %v2117 = vpop.f32.mrb[0].mxu0
      %2118 = vmatprep.mubr.bf16.mxu0 0
      %2119 = vmatmul.mubr.bf16.gmra.mrb[0].mxu0 %v2010
      %v2120 = vpop.f32.mrb[0].mxu0
      %v2121 = vadd.f32 0.0, %v2120
      %v2122 = vpop.f32.mrb[0].mxu0
      %v2123 = vpop.f32.mrb[0].mxu0
      %v2124 = vadd.f32 0.0, %v2123
      %v2125 = vpop.f32.mrb[0].mxu0
      %2126 = vmatprep.mubr.bf16.mxu0 0
      %2127 = vmatmul.mubr.bf16.gmra.mrb[0].mxu0 %v2013
      %v2128 = vpop.f32.mrb[0].mxu0
      %v2129 = vadd.f32 0.0, %v2128
      %v2130 = vpop.f32.mrb[0].mxu0
      %v2131 = vpop.f32.mrb[0].mxu0
      %v2132 = vadd.f32 0.0, %v2131
      %v2133 = vpop.f32.mrb[0].mxu0
      %2134 = vmatprep.mubr.bf16.mxu0 0
      %2135 = vmatmul.mubr.bf16.gmra.mrb[0].mxu0 %v2016
      %v2136 = vpop.f32.mrb[0].mxu0
      %v2137 = vadd.f32 0.0, %v2136
      %v2138 = vpop.f32.mrb[0].mxu0
      %v2139 = vpop.f32.mrb[0].mxu0
      %v2140 = vadd.f32 0.0, %v2139
      %v2141 = vpop.f32.mrb[0].mxu0
      %2142 = vmatprep.mubr.bf16.mxu0 0
      %2143 = vmatmul.mubr.bf16.gmra.mrb[0].mxu0 %v2019
      %v2144 = vpop.f32.mrb[0].mxu0
      %v2145 = vadd.f32 0.0, %v2144
      %v2146 = vpop.f32.mrb[0].mxu0
      %v2147 = vpop.f32.mrb[0].mxu0
      %v2148 = vadd.f32 0.0, %v2147
      %v2149 = vpop.f32.mrb[0].mxu0
      %2150 = vmatprep.mubr.bf16.mxu0 0
      %2151 = vmatmul.mubr.bf16.gmra.mrb[0].mxu0 %v2022
      %v2152 = vpop.f32.mrb[0].mxu0
      %v2153 = vadd.f32 0.0, %v2152
      %v2154 = vpop.f32.mrb[0].mxu0
      %v2155 = vpop.f32.mrb[0].mxu0
      %v2156 = vadd.f32 0.0, %v2155
      %v2157 = vpop.f32.mrb[0].mxu0
      %2158 = vmatprep.mubr.bf16.mxu0 0
      %2159 = vmatmul.mubr.bf16.gmra.mrb[0].mxu0 %v2025
      %v2160 = vpop.f32.mrb[0].mxu0
      %v2161 = vadd.f32 0.0, %v2160
      %v2162 = vpop.f32.mrb[0].mxu0
      %v2163 = vpop.f32.mrb[0].mxu0
      %v2164 = vadd.f32 0.0, %v2163
      %v2165 = vpop.f32.mrb[0].mxu0
      %2166 = vmatprep.mubr.bf16.mxu0 0
      %2167 = vmatmul.mubr.bf16.gmra.mrb[0].mxu0 %v2028
      %v2168 = vpop.f32.mrb[0].mxu0
      %v2169 = vadd.f32 0.0, %v2168
      %v2170 = vpop.f32.mrb[0].mxu0
      %v2171 = vpop.f32.mrb[0].mxu0
      %v2172 = vadd.f32 0.0, %v2171
      %v2173 = vpop.f32.mrb[0].mxu0
      %2174 = vmatprep.mubr.bf16.mxu0 0
      %2175 = vmatmul.mubr.bf16.gmra.mrb[0].mxu0 %v2031
      %v2176 = vpop.f32.mrb[0].mxu0
      %v2177 = vadd.f32 0.0, %v2176
      %v2178 = vpop.f32.mrb[0].mxu0
      %v2179 = vpop.f32.mrb[0].mxu0
      %v2180 = vadd.f32 0.0, %v2179
      %v2181 = vpop.f32.mrb[0].mxu0
      %2182 = vmatprep.mubr.bf16.mxu0 0
      %2183 = vmatmul.mubr.bf16.gmra.mrb[0].mxu0 %v2034
      %v2184 = vpop.f32.mrb[0].mxu0
      %v2185 = vadd.f32 0.0, %v2184
      %v2186 = vpop.f32.mrb[0].mxu0
      %v2187 = vpop.f32.mrb[0].mxu0
      %v2188 = vadd.f32 0.0, %v2187
      %v2189 = vpop.f32.mrb[0].mxu0
      %2190 = vmatprep.mubr.bf16.mxu0 0
      %2191 = vmatmul.mubr.bf16.gmra.mrb[0].mxu0 %v2037
      %v2192 = vpop.f32.mrb[0].mxu0
      %v2193 = vadd.f32 0.0, %v2192
      %v2194 = vpop.f32.mrb[0].mxu0
      %v2195 = vpop.f32.mrb[0].mxu0
      %v2196 = vadd.f32 0.0, %v2195
      %v2197 = vpop.f32.mrb[0].mxu0
      %2198 = vmatprep.mubr.bf16.mxu0 0
      %2199 = vmatmul.mubr.bf16.gmra.mrb[0].mxu0 %v2040
      %v2200 = vpop.f32.mrb[0].mxu0
      %v2201 = vadd.f32 0.0, %v2200
      %v2202 = vpop.f32.mrb[0].mxu0
      %v2203 = vpop.f32.mrb[0].mxu0
      %v2204 = vadd.f32 0.0, %v2203
      %v2205 = vpop.f32.mrb[0].mxu0
      %2206 = vmatprep.mubr.bf16.mxu0 0
      %2207 = vmatmul.mubr.bf16.gmra.mrb[0].mxu0 %v2043
      %v2208 = vpop.f32.mrb[0].mxu0
      %v2209 = vadd.f32 0.0, %v2208
      %v2210 = vpop.f32.mrb[0].mxu0
      %v2211 = vpop.f32.mrb[0].mxu0
      %v2212 = vadd.f32 0.0, %v2211
      %v2213 = vpop.f32.mrb[0].mxu0
      %2214 = vmatprep.mubr.bf16.mxu0 0
      %2215 = vmatmul.mubr.bf16.gmra.mrb[0].mxu0 %v2046
      %v2216 = vpop.f32.mrb[0].mxu0
      %v2217 = vadd.f32 0.0, %v2216
      %v2218 = vpop.f32.mrb[0].mxu0
      %v2219 = vpop.f32.mrb[0].mxu0
      %v2220 = vadd.f32 0.0, %v2219
      %v2221 = vpop.f32.mrb[0].mxu0
      %2222 = vmatprep.mubr.bf16.mxu0 0
      %2223 = vmatmul.mubr.bf16.gmra.mrb[0].mxu0 %v2049
      %v2224 = vpop.f32.mrb[0].mxu0
      %v2225 = vadd.f32 0.0, %v2224
      %v2226 = vpop.f32.mrb[0].mxu0
      %v2227 = vpop.f32.mrb[0].mxu0
      %v2228 = vadd.f32 0.0, %v2227
      %v2229 = vpop.f32.mrb[0].mxu0
      %2230 = vdwg.mxu0
      %v2231 = vadd.f32 %v1906, %v2089
      %v2232 = vadd.f32 %v1907, %v2092
      %v2233 = vadd.f32 %v1908, %v2097
      %v2234 = vadd.f32 %v1909, %v2100
      %v2235 = vadd.f32 %v1910, %v2105
      %v2236 = vadd.f32 %v1911, %v2108
      %v2237 = vadd.f32 %v1912, %v2113
      %v2238 = vadd.f32 %v1913, %v2116
      %v2239 = vadd.f32 %v1914, %v2121
      %v2240 = vadd.f32 %v1915, %v2124
      %v2241 = vadd.f32 %v1916, %v2129
      %v2242 = vadd.f32 %v1917, %v2132
      %v2243 = vadd.f32 %v1918, %v2137
      %v2244 = vadd.f32 %v1919, %v2140
      %v2245 = vadd.f32 %v1920, %v2145
      %v2246 = vadd.f32 %v1921, %v2148
      %v2247 = vadd.f32 %v1922, %v2153
      %v2248 = vadd.f32 %v1923, %v2156
      %v2249 = vadd.f32 %v1924, %v2161
      %v2250 = vadd.f32 %v1925, %v2164
      %v2251 = vadd.f32 %v1926, %v2169
      %v2252 = vadd.f32 %v1927, %v2172
      %v2253 = vadd.f32 %v1928, %v2177
      %v2254 = vadd.f32 %v1929, %v2180
      %v2255 = vadd.f32 %v1930, %v2185
      %v2256 = vadd.f32 %v1931, %v2188
      %v2257 = vadd.f32 %v1932, %v2193
      %v2258 = vadd.f32 %v1933, %v2196
      %v2259 = vadd.f32 %v1934, %v2201
      %v2260 = vadd.f32 %v1935, %v2204
      %v2261 = vadd.f32 %v1936, %v2209
      %v2262 = vadd.f32 %v1937, %v2212
      %v2263 = vadd.f32 %v1938, %v2217
      %v2264 = vadd.f32 %v1939, %v2220
      %v2265 = vadd.f32 %v1940, %v2225
      %v2266 = vadd.f32 %v1941, %v2228
      %v2267 = vld [vmem:[#allocation2 + $0x35] sm:$0xff]
      %v2268 = vld [vmem:[#allocation2 + $0x3d] sm:$0xff]
      %v2269 = vld [vmem:[#allocation2 + $0x45] sm:$0xff]
      %v2270 = vld [vmem:[#allocation2 + $0x4d] sm:$0xff]
      %v2271 = vld [vmem:[#allocation2 + $0x55] sm:$0xff]
      %v2272 = vld [vmem:[#allocation2 + $0x5d] sm:$0xff]
      %v2273 = vld [vmem:[#allocation2 + $0x65] sm:$0xff]
      %v2274 = vld [vmem:[#allocation2 + $0x6d] sm:$0xff]
      %v2275 = vld [vmem:[#allocation2 + $0x75] sm:$0xff]
      %v2276 = vld [vmem:[#allocation2 + $0x7d] sm:$0xff]
      %v2277 = vld [vmem:[#allocation2 + $0x85] sm:$0xff]
      %v2278 = vld [vmem:[#allocation2 + $0x8d] sm:$0xff]
      %v2279 = vld [vmem:[#allocation2 + $0x95] sm:$0xff]
      %v2280 = vld [vmem:[#allocation2 + $0x9d] sm:$0xff]
      %v2281 = vld [vmem:[#allocation2 + $0xa5] sm:$0xff]
      %v2282 = vld [vmem:[#allocation2 + $0xad] sm:$0xff]
      %v2283 = vld [vmem:[#allocation2 + $0xb5] sm:$0xff]
      %v2284 = vld [vmem:[#allocation2 + $0xbd] sm:$0xff]
      %v2285 = vld [vmem:[#allocation2 + $0xc5] sm:$0xff]
      %v2286 = vld [vmem:[#allocation2 + $0xcd] sm:$0xff]
      %v2287 = vld [vmem:[#allocation2 + $0xd5] sm:$0xff]
      %v2288 = vld [vmem:[#allocation2 + $0xdd] sm:$0xff]
      %v2289 = vld [vmem:[#allocation2 + $0xe5] sm:$0xff]
      %v2290 = vld [vmem:[#allocation2 + $0xed] sm:$0xff]
      %v2291 = vld [vmem:[#allocation2 + $0xf5] sm:$0xff]
      %v2292 = vld [vmem:[#allocation2 + $0xfd] sm:$0xff]
      %v2293 = vld [vmem:[#allocation2 + $0x105] sm:$0xff]
      %v2294 = vld [vmem:[#allocation2 + $0x10d] sm:$0xff]
      %v2295 = vld [vmem:[#allocation2 + $0x115] sm:$0xff]
      %v2296 = vld [vmem:[#allocation2 + $0x11d] sm:$0xff]
      %v2297 = vld [vmem:[#allocation2 + $0x125] sm:$0xff]
      %v2298 = vld [vmem:[#allocation2 + $0x12d] sm:$0xff]
      %v2299 = vld [vmem:[#allocation2 + $0x135] sm:$0xff]
      %v2300 = vld [vmem:[#allocation2 + $0x13d] sm:$0xff]
      %v2301 = vld [vmem:[#allocation2 + $0x145] sm:$0xff]
      %v2302 = vld [vmem:[#allocation2 + $0x14d] sm:$0xff]
      %v2303 = vpack.c.bf16 %v2268, %v2267
      %v2304 = vpack.c.bf16 %v2270, %v2269
      %v2305 = vpack.c.bf16 %v2272, %v2271
      %v2306 = vpack.c.bf16 %v2274, %v2273
      %v2307 = vpack.c.bf16 %v2276, %v2275
      %v2308 = vpack.c.bf16 %v2278, %v2277
      %v2309 = vpack.c.bf16 %v2280, %v2279
      %v2310 = vpack.c.bf16 %v2282, %v2281
      %v2311 = vpack.c.bf16 %v2284, %v2283
      %v2312 = vpack.c.bf16 %v2286, %v2285
      %v2313 = vpack.c.bf16 %v2288, %v2287
      %v2314 = vpack.c.bf16 %v2290, %v2289
      %v2315 = vpack.c.bf16 %v2292, %v2291
      %v2316 = vpack.c.bf16 %v2294, %v2293
      %v2317 = vpack.c.bf16 %v2296, %v2295
      %v2318 = vpack.c.bf16 %v2298, %v2297
      %v2319 = vpack.c.bf16 %v2300, %v2299
      %v2320 = vpack.c.bf16 %v2302, %v2301
      %v2321 = vld [vmem:[%s1 + $0x18] sm:$0xf]
      %v2323 = vsel %vm262, %v2303, 0
      %v2326 = vsel %vm262, %v2304, 0
      %v2329 = vsel %vm262, %v2305, 0
      %v2332 = vsel %vm262, %v2306, 0
      %v2335 = vsel %vm262, %v2307, 0
      %v2338 = vsel %vm262, %v2308, 0
      %v2341 = vsel %vm262, %v2309, 0
      %v2344 = vsel %vm262, %v2310, 0
      %v2347 = vsel %vm262, %v2311, 0
      %v2350 = vsel %vm262, %v2312, 0
      %v2353 = vsel %vm262, %v2313, 0
      %v2356 = vsel %vm262, %v2314, 0
      %v2359 = vsel %vm262, %v2315, 0
      %v2362 = vsel %vm262, %v2316, 0
      %v2365 = vsel %vm262, %v2317, 0
      %v2368 = vsel %vm262, %v2318, 0
      %v2371 = vsel %vm262, %v2319, 0
      %v2374 = vsel %vm262, %v2320, 0
      %v2377 = vsel %vm425, %v2321, 0
      %2379 = vmatprep.subr.bf16.mxu0 0
      %2380 = vmatpush1.bf16.msra.mxu0 %v2377
      %2381 = vmatprep.subr.bf16.mxu0 0
      %2382 = vmatpush1.bf16.msra.mxu0 0
      %2383 = vmatprep.subr.bf16.mxu0 0
      %2384 = vmatpush1.bf16.msra.mxu0 0
      %2385 = vmatprep.subr.bf16.mxu0 0
      %2386 = vmatpush1.bf16.msra.mxu0 0
      %2387 = vmatprep.subr.bf16.mxu0 0
      %2388 = vmatpush1.bf16.msra.mxu0 0
      %2389 = vmatprep.subr.bf16.mxu0 0
      %2390 = vmatpush1.bf16.msra.mxu0 0
      %2391 = vmatprep.subr.bf16.mxu0 0
      %2392 = vmatpush1.bf16.msra.mxu0 0
      %2393 = vmatprep.subr.bf16.mxu0 0
      %2394 = vmatpush1.bf16.msra.mxu0 0
      %2395 = vmatprep.subr.bf16.mxu0 0
      %2396 = vmatpush1.bf16.msra.mxu0 0
      %2397 = vmatprep.subr.bf16.mxu0 0
      %2398 = vmatpush1.bf16.msra.mxu0 0
      %2399 = vmatprep.subr.bf16.mxu0 0
      %2400 = vmatpush1.bf16.msra.mxu0 0
      %2401 = vmatprep.subr.bf16.mxu0 0
      %2402 = vmatpush1.bf16.msra.mxu0 0
      %2403 = vmatprep.subr.bf16.mxu0 0
      %2404 = vmatpush1.bf16.msra.mxu0 0
      %2405 = vmatprep.subr.bf16.mxu0 0
      %2406 = vmatpush1.bf16.msra.mxu0 0
      %2407 = vmatprep.subr.bf16.mxu0 0
      %2408 = vmatpush1.bf16.msra.mxu0 0
      %2409 = vmatprep.subr.bf16.mxu0 0
      %2410 = vmatpush1.bf16.msra.mxu0 0
      %2411 = vmatprep.mubr.bf16.mxu0 0
      %2412 = vmatmul.mubr.bf16.gmra.mrb[0].mxu0 %v2323
      %v2413 = vpop.f32.mrb[0].mxu0
      %v2414 = vadd.f32 0.0, %v2413
      %v2415 = vpop.f32.mrb[0].mxu0
      %v2416 = vpop.f32.mrb[0].mxu0
      %v2417 = vadd.f32 0.0, %v2416
      %v2418 = vpop.f32.mrb[0].mxu0
      %2419 = vmatprep.mubr.bf16.mxu0 0
      %2420 = vmatmul.mubr.bf16.gmra.mrb[0].mxu0 %v2326
      %v2421 = vpop.f32.mrb[0].mxu0
      %v2422 = vadd.f32 0.0, %v2421
      %v2423 = vpop.f32.mrb[0].mxu0
      %v2424 = vpop.f32.mrb[0].mxu0
      %v2425 = vadd.f32 0.0, %v2424
      %v2426 = vpop.f32.mrb[0].mxu0
      %2427 = vmatprep.mubr.bf16.mxu0 0
      %2428 = vmatmul.mubr.bf16.gmra.mrb[0].mxu0 %v2329
      %v2429 = vpop.f32.mrb[0].mxu0
      %v2430 = vadd.f32 0.0, %v2429
      %v2431 = vpop.f32.mrb[0].mxu0
      %v2432 = vpop.f32.mrb[0].mxu0
      %v2433 = vadd.f32 0.0, %v2432
      %v2434 = vpop.f32.mrb[0].mxu0
      %2435 = vmatprep.mubr.bf16.mxu0 0
      %2436 = vmatmul.mubr.bf16.gmra.mrb[0].mxu0 %v2332
      %v2437 = vpop.f32.mrb[0].mxu0
      %v2438 = vadd.f32 0.0, %v2437
      %v2439 = vpop.f32.mrb[0].mxu0
      %v2440 = vpop.f32.mrb[0].mxu0
      %v2441 = vadd.f32 0.0, %v2440
      %v2442 = vpop.f32.mrb[0].mxu0
      %2443 = vmatprep.mubr.bf16.mxu0 0
      %2444 = vmatmul.mubr.bf16.gmra.mrb[0].mxu0 %v2335
      %v2445 = vpop.f32.mrb[0].mxu0
      %v2446 = vadd.f32 0.0, %v2445
      %v2447 = vpop.f32.mrb[0].mxu0
      %v2448 = vpop.f32.mrb[0].mxu0
      %v2449 = vadd.f32 0.0, %v2448
      %v2450 = vpop.f32.mrb[0].mxu0
      %2451 = vmatprep.mubr.bf16.mxu0 0
      %2452 = vmatmul.mubr.bf16.gmra.mrb[0].mxu0 %v2338
      %v2453 = vpop.f32.mrb[0].mxu0
      %v2454 = vadd.f32 0.0, %v2453
      %v2455 = vpop.f32.mrb[0].mxu0
      %v2456 = vpop.f32.mrb[0].mxu0
      %v2457 = vadd.f32 0.0, %v2456
      %v2458 = vpop.f32.mrb[0].mxu0
      %2459 = vmatprep.mubr.bf16.mxu0 0
      %2460 = vmatmul.mubr.bf16.gmra.mrb[0].mxu0 %v2341
      %v2461 = vpop.f32.mrb[0].mxu0
      %v2462 = vadd.f32 0.0, %v2461
      %v2463 = vpop.f32.mrb[0].mxu0
      %v2464 = vpop.f32.mrb[0].mxu0
      %v2465 = vadd.f32 0.0, %v2464
      %v2466 = vpop.f32.mrb[0].mxu0
      %2467 = vmatprep.mubr.bf16.mxu0 0
      %2468 = vmatmul.mubr.bf16.gmra.mrb[0].mxu0 %v2344
      %v2469 = vpop.f32.mrb[0].mxu0
      %v2470 = vadd.f32 0.0, %v2469
      %v2471 = vpop.f32.mrb[0].mxu0
      %v2472 = vpop.f32.mrb[0].mxu0
      %v2473 = vadd.f32 0.0, %v2472
      %v2474 = vpop.f32.mrb[0].mxu0
      %2475 = vmatprep.mubr.bf16.mxu0 0
      %2476 = vmatmul.mubr.bf16.gmra.mrb[0].mxu0 %v2347
      %v2477 = vpop.f32.mrb[0].mxu0
      %v2478 = vadd.f32 0.0, %v2477
      %v2479 = vpop.f32.mrb[0].mxu0
      %v2480 = vpop.f32.mrb[0].mxu0
      %v2481 = vadd.f32 0.0, %v2480
      %v2482 = vpop.f32.mrb[0].mxu0
      %2483 = vmatprep.mubr.bf16.mxu0 0
      %2484 = vmatmul.mubr.bf16.gmra.mrb[0].mxu0 %v2350
      %v2485 = vpop.f32.mrb[0].mxu0
      %v2486 = vadd.f32 0.0, %v2485
      %v2487 = vpop.f32.mrb[0].mxu0
      %v2488 = vpop.f32.mrb[0].mxu0
      %v2489 = vadd.f32 0.0, %v2488
      %v2490 = vpop.f32.mrb[0].mxu0
      %2491 = vmatprep.mubr.bf16.mxu0 0
      %2492 = vmatmul.mubr.bf16.gmra.mrb[0].mxu0 %v2353
      %v2493 = vpop.f32.mrb[0].mxu0
      %v2494 = vadd.f32 0.0, %v2493
      %v2495 = vpop.f32.mrb[0].mxu0
      %v2496 = vpop.f32.mrb[0].mxu0
      %v2497 = vadd.f32 0.0, %v2496
      %v2498 = vpop.f32.mrb[0].mxu0
      %2499 = vmatprep.mubr.bf16.mxu0 0
      %2500 = vmatmul.mubr.bf16.gmra.mrb[0].mxu0 %v2356
      %v2501 = vpop.f32.mrb[0].mxu0
      %v2502 = vadd.f32 0.0, %v2501
      %v2503 = vpop.f32.mrb[0].mxu0
      %v2504 = vpop.f32.mrb[0].mxu0
      %v2505 = vadd.f32 0.0, %v2504
      %v2506 = vpop.f32.mrb[0].mxu0
      %2507 = vmatprep.mubr.bf16.mxu0 0
      %2508 = vmatmul.mubr.bf16.gmra.mrb[0].mxu0 %v2359
      %v2509 = vpop.f32.mrb[0].mxu0
      %v2510 = vadd.f32 0.0, %v2509
      %v2511 = vpop.f32.mrb[0].mxu0
      %v2512 = vpop.f32.mrb[0].mxu0
      %v2513 = vadd.f32 0.0, %v2512
      %v2514 = vpop.f32.mrb[0].mxu0
      %2515 = vmatprep.mubr.bf16.mxu0 0
      %2516 = vmatmul.mubr.bf16.gmra.mrb[0].mxu0 %v2362
      %v2517 = vpop.f32.mrb[0].mxu0
      %v2518 = vadd.f32 0.0, %v2517
      %v2519 = vpop.f32.mrb[0].mxu0
      %v2520 = vpop.f32.mrb[0].mxu0
      %v2521 = vadd.f32 0.0, %v2520
      %v2522 = vpop.f32.mrb[0].mxu0
      %2523 = vmatprep.mubr.bf16.mxu0 0
      %2524 = vmatmul.mubr.bf16.gmra.mrb[0].mxu0 %v2365
      %v2525 = vpop.f32.mrb[0].mxu0
      %v2526 = vadd.f32 0.0, %v2525
      %v2527 = vpop.f32.mrb[0].mxu0
      %v2528 = vpop.f32.mrb[0].mxu0
      %v2529 = vadd.f32 0.0, %v2528
      %v2530 = vpop.f32.mrb[0].mxu0
      %2531 = vmatprep.mubr.bf16.mxu0 0
      %2532 = vmatmul.mubr.bf16.gmra.mrb[0].mxu0 %v2368
      %v2533 = vpop.f32.mrb[0].mxu0
      %v2534 = vadd.f32 0.0, %v2533
      %v2535 = vpop.f32.mrb[0].mxu0
      %v2536 = vpop.f32.mrb[0].mxu0
      %v2537 = vadd.f32 0.0, %v2536
      %v2538 = vpop.f32.mrb[0].mxu0
      %2539 = vmatprep.mubr.bf16.mxu0 0
      %2540 = vmatmul.mubr.bf16.gmra.mrb[0].mxu0 %v2371
      %v2541 = vpop.f32.mrb[0].mxu0
      %v2542 = vadd.f32 0.0, %v2541
      %v2543 = vpop.f32.mrb[0].mxu0
      %v2544 = vpop.f32.mrb[0].mxu0
      %v2545 = vadd.f32 0.0, %v2544
      %v2546 = vpop.f32.mrb[0].mxu0
      %2547 = vmatprep.mubr.bf16.mxu0 0
      %2548 = vmatmul.mubr.bf16.gmra.mrb[0].mxu0 %v2374
      %v2549 = vpop.f32.mrb[0].mxu0
      %v2550 = vadd.f32 0.0, %v2549
      %v2551 = vpop.f32.mrb[0].mxu0
      %v2552 = vpop.f32.mrb[0].mxu0
      %v2553 = vadd.f32 0.0, %v2552
      %v2554 = vpop.f32.mrb[0].mxu0
      %2555 = vdwg.mxu0
      %v2556 = vadd.f32 %v2231, %v2414
      %v2557 = vadd.f32 %v2232, %v2417
      %v2558 = vadd.f32 %v2233, %v2422
      %v2559 = vadd.f32 %v2234, %v2425
      %v2560 = vadd.f32 %v2235, %v2430
      %v2561 = vadd.f32 %v2236, %v2433
      %v2562 = vadd.f32 %v2237, %v2438
      %v2563 = vadd.f32 %v2238, %v2441
      %v2564 = vadd.f32 %v2239, %v2446
      %v2565 = vadd.f32 %v2240, %v2449
      %v2566 = vadd.f32 %v2241, %v2454
      %v2567 = vadd.f32 %v2242, %v2457
      %v2568 = vadd.f32 %v2243, %v2462
      %v2569 = vadd.f32 %v2244, %v2465
      %v2570 = vadd.f32 %v2245, %v2470
      %v2571 = vadd.f32 %v2246, %v2473
      %v2572 = vadd.f32 %v2247, %v2478
      %v2573 = vadd.f32 %v2248, %v2481
      %v2574 = vadd.f32 %v2249, %v2486
      %v2575 = vadd.f32 %v2250, %v2489
      %v2576 = vadd.f32 %v2251, %v2494
      %v2577 = vadd.f32 %v2252, %v2497
      %v2578 = vadd.f32 %v2253, %v2502
      %v2579 = vadd.f32 %v2254, %v2505
      %v2580 = vadd.f32 %v2255, %v2510
      %v2581 = vadd.f32 %v2256, %v2513
      %v2582 = vadd.f32 %v2257, %v2518
      %v2583 = vadd.f32 %v2258, %v2521
      %v2584 = vadd.f32 %v2259, %v2526
      %v2585 = vadd.f32 %v2260, %v2529
      %v2586 = vadd.f32 %v2261, %v2534
      %v2587 = vadd.f32 %v2262, %v2537
      %v2588 = vadd.f32 %v2263, %v2542
      %v2589 = vadd.f32 %v2264, %v2545
      %v2590 = vadd.f32 %v2265, %v2550
      %v2591 = vadd.f32 %v2266, %v2553
      %v2592 = vld [vmem:[#allocation2 + $0x36] sm:$0xff]
      %v2593 = vld [vmem:[#allocation2 + $0x3e] sm:$0xff]
      %v2594 = vld [vmem:[#allocation2 + $0x46] sm:$0xff]
      %v2595 = vld [vmem:[#allocation2 + $0x4e] sm:$0xff]
      %v2596 = vld [vmem:[#allocation2 + $0x56] sm:$0xff]
      %v2597 = vld [vmem:[#allocation2 + $0x5e] sm:$0xff]
      %v2598 = vld [vmem:[#allocation2 + $0x66] sm:$0xff]
      %v2599 = vld [vmem:[#allocation2 + $0x6e] sm:$0xff]
      %v2600 = vld [vmem:[#allocation2 + $0x76] sm:$0xff]
      %v2601 = vld [vmem:[#allocation2 + $0x7e] sm:$0xff]
      %v2602 = vld [vmem:[#allocation2 + $0x86] sm:$0xff]
      %v2603 = vld [vmem:[#allocation2 + $0x8e] sm:$0xff]
      %v2604 = vld [vmem:[#allocation2 + $0x96] sm:$0xff]
      %v2605 = vld [vmem:[#allocation2 + $0x9e] sm:$0xff]
      %v2606 = vld [vmem:[#allocation2 + $0xa6] sm:$0xff]
      %v2607 = vld [vmem:[#allocation2 + $0xae] sm:$0xff]
      %v2608 = vld [vmem:[#allocation2 + $0xb6] sm:$0xff]
      %v2609 = vld [vmem:[#allocation2 + $0xbe] sm:$0xff]
      %v2610 = vld [vmem:[#allocation2 + $0xc6] sm:$0xff]
      %v2611 = vld [vmem:[#allocation2 + $0xce] sm:$0xff]
      %v2612 = vld [vmem:[#allocation2 + $0xd6] sm:$0xff]
      %v2613 = vld [vmem:[#allocation2 + $0xde] sm:$0xff]
      %v2614 = vld [vmem:[#allocation2 + $0xe6] sm:$0xff]
      %v2615 = vld [vmem:[#allocation2 + $0xee] sm:$0xff]
      %v2616 = vld [vmem:[#allocation2 + $0xf6] sm:$0xff]
      %v2617 = vld [vmem:[#allocation2 + $0xfe] sm:$0xff]
      %v2618 = vld [vmem:[#allocation2 + $0x106] sm:$0xff]
      %v2619 = vld [vmem:[#allocation2 + $0x10e] sm:$0xff]
      %v2620 = vld [vmem:[#allocation2 + $0x116] sm:$0xff]
      %v2621 = vld [vmem:[#allocation2 + $0x11e] sm:$0xff]
      %v2622 = vld [vmem:[#allocation2 + $0x126] sm:$0xff]
      %v2623 = vld [vmem:[#allocation2 + $0x12e] sm:$0xff]
      %v2624 = vld [vmem:[#allocation2 + $0x136] sm:$0xff]
      %v2625 = vld [vmem:[#allocation2 + $0x13e] sm:$0xff]
      %v2626 = vld [vmem:[#allocation2 + $0x146] sm:$0xff]
      %v2627 = vld [vmem:[#allocation2 + $0x14e] sm:$0xff]
      %v2628 = vpack.c.bf16 %v2593, %v2592
      %v2629 = vpack.c.bf16 %v2595, %v2594
      %v2630 = vpack.c.bf16 %v2597, %v2596
      %v2631 = vpack.c.bf16 %v2599, %v2598
      %v2632 = vpack.c.bf16 %v2601, %v2600
      %v2633 = vpack.c.bf16 %v2603, %v2602
      %v2634 = vpack.c.bf16 %v2605, %v2604
      %v2635 = vpack.c.bf16 %v2607, %v2606
      %v2636 = vpack.c.bf16 %v2609, %v2608
      %v2637 = vpack.c.bf16 %v2611, %v2610
      %v2638 = vpack.c.bf16 %v2613, %v2612
      %v2639 = vpack.c.bf16 %v2615, %v2614
      %v2640 = vpack.c.bf16 %v2617, %v2616
      %v2641 = vpack.c.bf16 %v2619, %v2618
      %v2642 = vpack.c.bf16 %v2621, %v2620
      %v2643 = vpack.c.bf16 %v2623, %v2622
      %v2644 = vpack.c.bf16 %v2625, %v2624
      %v2645 = vpack.c.bf16 %v2627, %v2626
      %v2646 = vld [vmem:[%s1 + $0x1c] sm:$0xf]
      %v2648 = vsel %vm262, %v2628, 0
      %v2651 = vsel %vm262, %v2629, 0
      %v2654 = vsel %vm262, %v2630, 0
      %v2657 = vsel %vm262, %v2631, 0
      %v2660 = vsel %vm262, %v2632, 0
      %v2663 = vsel %vm262, %v2633, 0
      %v2666 = vsel %vm262, %v2634, 0
      %v2669 = vsel %vm262, %v2635, 0
      %v2672 = vsel %vm262, %v2636, 0
      %v2675 = vsel %vm262, %v2637, 0
      %v2678 = vsel %vm262, %v2638, 0
      %v2681 = vsel %vm262, %v2639, 0
      %v2684 = vsel %vm262, %v2640, 0
      %v2687 = vsel %vm262, %v2641, 0
      %v2690 = vsel %vm262, %v2642, 0
      %v2693 = vsel %vm262, %v2643, 0
      %v2696 = vsel %vm262, %v2644, 0
      %v2699 = vsel %vm262, %v2645, 0
      %v2702 = vsel %vm425, %v2646, 0
      %2704 = vmatprep.subr.bf16.mxu0 0
      %2705 = vmatpush1.bf16.msra.mxu0 %v2702
      %2706 = vmatprep.subr.bf16.mxu0 0
      %2707 = vmatpush1.bf16.msra.mxu0 0
      %2708 = vmatprep.subr.bf16.mxu0 0
      %2709 = vmatpush1.bf16.msra.mxu0 0
      %2710 = vmatprep.subr.bf16.mxu0 0
      %2711 = vmatpush1.bf16.msra.mxu0 0
      %2712 = vmatprep.subr.bf16.mxu0 0
      %2713 = vmatpush1.bf16.msra.mxu0 0
      %2714 = vmatprep.subr.bf16.mxu0 0
      %2715 = vmatpush1.bf16.msra.mxu0 0
      %2716 = vmatprep.subr.bf16.mxu0 0
      %2717 = vmatpush1.bf16.msra.mxu0 0
      %2718 = vmatprep.subr.bf16.mxu0 0
      %2719 = vmatpush1.bf16.msra.mxu0 0
      %2720 = vmatprep.subr.bf16.mxu0 0
      %2721 = vmatpush1.bf16.msra.mxu0 0
      %2722 = vmatprep.subr.bf16.mxu0 0
      %2723 = vmatpush1.bf16.msra.mxu0 0
      %2724 = vmatprep.subr.bf16.mxu0 0
      %2725 = vmatpush1.bf16.msra.mxu0 0
      %2726 = vmatprep.subr.bf16.mxu0 0
      %2727 = vmatpush1.bf16.msra.mxu0 0
      %2728 = vmatprep.subr.bf16.mxu0 0
      %2729 = vmatpush1.bf16.msra.mxu0 0
      %2730 = vmatprep.subr.bf16.mxu0 0
      %2731 = vmatpush1.bf16.msra.mxu0 0
      %2732 = vmatprep.subr.bf16.mxu0 0
      %2733 = vmatpush1.bf16.msra.mxu0 0
      %2734 = vmatprep.subr.bf16.mxu0 0
      %2735 = vmatpush1.bf16.msra.mxu0 0
      %2736 = vmatprep.mubr.bf16.mxu0 0
      %2737 = vmatmul.mubr.bf16.gmra.mrb[0].mxu0 %v2648
      %v2738 = vpop.f32.mrb[0].mxu0
      %v2739 = vadd.f32 0.0, %v2738
      %v2740 = vpop.f32.mrb[0].mxu0
      %v2741 = vpop.f32.mrb[0].mxu0
      %v2742 = vadd.f32 0.0, %v2741
      %v2743 = vpop.f32.mrb[0].mxu0
      %2744 = vmatprep.mubr.bf16.mxu0 0
      %2745 = vmatmul.mubr.bf16.gmra.mrb[0].mxu0 %v2651
      %v2746 = vpop.f32.mrb[0].mxu0
      %v2747 = vadd.f32 0.0, %v2746
      %v2748 = vpop.f32.mrb[0].mxu0
      %v2749 = vpop.f32.mrb[0].mxu0
      %v2750 = vadd.f32 0.0, %v2749
      %v2751 = vpop.f32.mrb[0].mxu0
      %2752 = vmatprep.mubr.bf16.mxu0 0
      %2753 = vmatmul.mubr.bf16.gmra.mrb[0].mxu0 %v2654
      %v2754 = vpop.f32.mrb[0].mxu0
      %v2755 = vadd.f32 0.0, %v2754
      %v2756 = vpop.f32.mrb[0].mxu0
      %v2757 = vpop.f32.mrb[0].mxu0
      %v2758 = vadd.f32 0.0, %v2757
      %v2759 = vpop.f32.mrb[0].mxu0
      %2760 = vmatprep.mubr.bf16.mxu0 0
      %2761 = vmatmul.mubr.bf16.gmra.mrb[0].mxu0 %v2657
      %v2762 = vpop.f32.mrb[0].mxu0
      %v2763 = vadd.f32 0.0, %v2762
      %v2764 = vpop.f32.mrb[0].mxu0
      %v2765 = vpop.f32.mrb[0].mxu0
      %v2766 = vadd.f32 0.0, %v2765
      %v2767 = vpop.f32.mrb[0].mxu0
      %2768 = vmatprep.mubr.bf16.mxu0 0
      %2769 = vmatmul.mubr.bf16.gmra.mrb[0].mxu0 %v2660
      %v2770 = vpop.f32.mrb[0].mxu0
      %v2771 = vadd.f32 0.0, %v2770
      %v2772 = vpop.f32.mrb[0].mxu0
      %v2773 = vpop.f32.mrb[0].mxu0
      %v2774 = vadd.f32 0.0, %v2773
      %v2775 = vpop.f32.mrb[0].mxu0
      %2776 = vmatprep.mubr.bf16.mxu0 0
      %2777 = vmatmul.mubr.bf16.gmra.mrb[0].mxu0 %v2663
      %v2778 = vpop.f32.mrb[0].mxu0
      %v2779 = vadd.f32 0.0, %v2778
      %v2780 = vpop.f32.mrb[0].mxu0
      %v2781 = vpop.f32.mrb[0].mxu0
      %v2782 = vadd.f32 0.0, %v2781
      %v2783 = vpop.f32.mrb[0].mxu0
      %2784 = vmatprep.mubr.bf16.mxu0 0
      %2785 = vmatmul.mubr.bf16.gmra.mrb[0].mxu0 %v2666
      %v2786 = vpop.f32.mrb[0].mxu0
      %v2787 = vadd.f32 0.0, %v2786
      %v2788 = vpop.f32.mrb[0].mxu0
      %v2789 = vpop.f32.mrb[0].mxu0
      %v2790 = vadd.f32 0.0, %v2789
      %v2791 = vpop.f32.mrb[0].mxu0
      %2792 = vmatprep.mubr.bf16.mxu0 0
      %2793 = vmatmul.mubr.bf16.gmra.mrb[0].mxu0 %v2669
      %v2794 = vpop.f32.mrb[0].mxu0
      %v2795 = vadd.f32 0.0, %v2794
      %v2796 = vpop.f32.mrb[0].mxu0
      %v2797 = vpop.f32.mrb[0].mxu0
      %v2798 = vadd.f32 0.0, %v2797
      %v2799 = vpop.f32.mrb[0].mxu0
      %2800 = vmatprep.mubr.bf16.mxu0 0
      %2801 = vmatmul.mubr.bf16.gmra.mrb[0].mxu0 %v2672
      %v2802 = vpop.f32.mrb[0].mxu0
      %v2803 = vadd.f32 0.0, %v2802
      %v2804 = vpop.f32.mrb[0].mxu0
      %v2805 = vpop.f32.mrb[0].mxu0
      %v2806 = vadd.f32 0.0, %v2805
      %v2807 = vpop.f32.mrb[0].mxu0
      %2808 = vmatprep.mubr.bf16.mxu0 0
      %2809 = vmatmul.mubr.bf16.gmra.mrb[0].mxu0 %v2675
      %v2810 = vpop.f32.mrb[0].mxu0
      %v2811 = vadd.f32 0.0, %v2810
      %v2812 = vpop.f32.mrb[0].mxu0
      %v2813 = vpop.f32.mrb[0].mxu0
      %v2814 = vadd.f32 0.0, %v2813
      %v2815 = vpop.f32.mrb[0].mxu0
      %2816 = vmatprep.mubr.bf16.mxu0 0
      %2817 = vmatmul.mubr.bf16.gmra.mrb[0].mxu0 %v2678
      %v2818 = vpop.f32.mrb[0].mxu0
      %v2819 = vadd.f32 0.0, %v2818
      %v2820 = vpop.f32.mrb[0].mxu0
      %v2821 = vpop.f32.mrb[0].mxu0
      %v2822 = vadd.f32 0.0, %v2821
      %v2823 = vpop.f32.mrb[0].mxu0
      %2824 = vmatprep.mubr.bf16.mxu0 0
      %2825 = vmatmul.mubr.bf16.gmra.mrb[0].mxu0 %v2681
      %v2826 = vpop.f32.mrb[0].mxu0
      %v2827 = vadd.f32 0.0, %v2826
      %v2828 = vpop.f32.mrb[0].mxu0
      %v2829 = vpop.f32.mrb[0].mxu0
      %v2830 = vadd.f32 0.0, %v2829
      %v2831 = vpop.f32.mrb[0].mxu0
      %2832 = vmatprep.mubr.bf16.mxu0 0
      %2833 = vmatmul.mubr.bf16.gmra.mrb[0].mxu0 %v2684
      %v2834 = vpop.f32.mrb[0].mxu0
      %v2835 = vadd.f32 0.0, %v2834
      %v2836 = vpop.f32.mrb[0].mxu0
      %v2837 = vpop.f32.mrb[0].mxu0
      %v2838 = vadd.f32 0.0, %v2837
      %v2839 = vpop.f32.mrb[0].mxu0
      %2840 = vmatprep.mubr.bf16.mxu0 0
      %2841 = vmatmul.mubr.bf16.gmra.mrb[0].mxu0 %v2687
      %v2842 = vpop.f32.mrb[0].mxu0
      %v2843 = vadd.f32 0.0, %v2842
      %v2844 = vpop.f32.mrb[0].mxu0
      %v2845 = vpop.f32.mrb[0].mxu0
      %v2846 = vadd.f32 0.0, %v2845
      %v2847 = vpop.f32.mrb[0].mxu0
      %2848 = vmatprep.mubr.bf16.mxu0 0
      %2849 = vmatmul.mubr.bf16.gmra.mrb[0].mxu0 %v2690
      %v2850 = vpop.f32.mrb[0].mxu0
      %v2851 = vadd.f32 0.0, %v2850
      %v2852 = vpop.f32.mrb[0].mxu0
      %v2853 = vpop.f32.mrb[0].mxu0
      %v2854 = vadd.f32 0.0, %v2853
      %v2855 = vpop.f32.mrb[0].mxu0
      %2856 = vmatprep.mubr.bf16.mxu0 0
      %2857 = vmatmul.mubr.bf16.gmra.mrb[0].mxu0 %v2693
      %v2858 = vpop.f32.mrb[0].mxu0
      %v2859 = vadd.f32 0.0, %v2858
      %v2860 = vpop.f32.mrb[0].mxu0
      %v2861 = vpop.f32.mrb[0].mxu0
      %v2862 = vadd.f32 0.0, %v2861
      %v2863 = vpop.f32.mrb[0].mxu0
      %2864 = vmatprep.mubr.bf16.mxu0 0
      %2865 = vmatmul.mubr.bf16.gmra.mrb[0].mxu0 %v2696
      %v2866 = vpop.f32.mrb[0].mxu0
      %v2867 = vadd.f32 0.0, %v2866
      %v2868 = vpop.f32.mrb[0].mxu0
      %v2869 = vpop.f32.mrb[0].mxu0
      %v2870 = vadd.f32 0.0, %v2869
      %v2871 = vpop.f32.mrb[0].mxu0
      %2872 = vmatprep.mubr.bf16.mxu0 0
      %2873 = vmatmul.mubr.bf16.gmra.mrb[0].mxu0 %v2699
      %v2874 = vpop.f32.mrb[0].mxu0
      %v2875 = vadd.f32 0.0, %v2874
      %v2876 = vpop.f32.mrb[0].mxu0
      %v2877 = vpop.f32.mrb[0].mxu0
      %v2878 = vadd.f32 0.0, %v2877
      %v2879 = vpop.f32.mrb[0].mxu0
      %2880 = vdwg.mxu0
      %v2881 = vadd.f32 %v2556, %v2739
      %v2882 = vadd.f32 %v2557, %v2742
      %v2883 = vadd.f32 %v2558, %v2747
      %v2884 = vadd.f32 %v2559, %v2750
      %v2885 = vadd.f32 %v2560, %v2755
      %v2886 = vadd.f32 %v2561, %v2758
      %v2887 = vadd.f32 %v2562, %v2763
      %v2888 = vadd.f32 %v2563, %v2766
      %v2889 = vadd.f32 %v2564, %v2771
      %v2890 = vadd.f32 %v2565, %v2774
      %v2891 = vadd.f32 %v2566, %v2779
      %v2892 = vadd.f32 %v2567, %v2782
      %v2893 = vadd.f32 %v2568, %v2787
      %v2894 = vadd.f32 %v2569, %v2790
      %v2895 = vadd.f32 %v2570, %v2795
      %v2896 = vadd.f32 %v2571, %v2798
      %v2897 = vadd.f32 %v2572, %v2803
      %v2898 = vadd.f32 %v2573, %v2806
      %v2899 = vadd.f32 %v2574, %v2811
      %v2900 = vadd.f32 %v2575, %v2814
      %v2901 = vadd.f32 %v2576, %v2819
      %v2902 = vadd.f32 %v2577, %v2822
      %v2903 = vadd.f32 %v2578, %v2827
      %v2904 = vadd.f32 %v2579, %v2830
      %v2905 = vadd.f32 %v2580, %v2835
      %v2906 = vadd.f32 %v2581, %v2838
      %v2907 = vadd.f32 %v2582, %v2843
      %v2908 = vadd.f32 %v2583, %v2846
      %v2909 = vadd.f32 %v2584, %v2851
      %v2910 = vadd.f32 %v2585, %v2854
      %v2911 = vadd.f32 %v2586, %v2859
      %v2912 = vadd.f32 %v2587, %v2862
      %v2913 = vadd.f32 %v2588, %v2867
      %v2914 = vadd.f32 %v2589, %v2870
      %v2915 = vadd.f32 %v2590, %v2875
      %v2916 = vadd.f32 %v2591, %v2878
      %v2917 = vld [vmem:[#allocation2 + $0x37] sm:$0xff]
      %v2918 = vld [vmem:[#allocation2 + $0x3f] sm:$0xff]
      %v2919 = vld [vmem:[#allocation2 + $0x47] sm:$0xff]
      %v2920 = vld [vmem:[#allocation2 + $0x4f] sm:$0xff]
      %v2921 = vld [vmem:[#allocation2 + $0x57] sm:$0xff]
      %v2922 = vld [vmem:[#allocation2 + $0x5f] sm:$0xff]
      %v2923 = vld [vmem:[#allocation2 + $0x67] sm:$0xff]
      %v2924 = vld [vmem:[#allocation2 + $0x6f] sm:$0xff]
      %v2925 = vld [vmem:[#allocation2 + $0x77] sm:$0xff]
      %v2926 = vld [vmem:[#allocation2 + $0x7f] sm:$0xff]
      %v2927 = vld [vmem:[#allocation2 + $0x87] sm:$0xff]
      %v2928 = vld [vmem:[#allocation2 + $0x8f] sm:$0xff]
      %v2929 = vld [vmem:[#allocation2 + $0x97] sm:$0xff]
      %v2930 = vld [vmem:[#allocation2 + $0x9f] sm:$0xff]
      %v2931 = vld [vmem:[#allocation2 + $0xa7] sm:$0xff]
      %v2932 = vld [vmem:[#allocation2 + $0xaf] sm:$0xff]
      %v2933 = vld [vmem:[#allocation2 + $0xb7] sm:$0xff]
      %v2934 = vld [vmem:[#allocation2 + $0xbf] sm:$0xff]
      %v2935 = vld [vmem:[#allocation2 + $0xc7] sm:$0xff]
      %v2936 = vld [vmem:[#allocation2 + $0xcf] sm:$0xff]
      %v2937 = vld [vmem:[#allocation2 + $0xd7] sm:$0xff]
      %v2938 = vld [vmem:[#allocation2 + $0xdf] sm:$0xff]
      %v2939 = vld [vmem:[#allocation2 + $0xe7] sm:$0xff]
      %v2940 = vld [vmem:[#allocation2 + $0xef] sm:$0xff]
      %v2941 = vld [vmem:[#allocation2 + $0xf7] sm:$0xff]
      %v2942 = vld [vmem:[#allocation2 + $0xff] sm:$0xff]
      %v2943 = vld [vmem:[#allocation2 + $0x107] sm:$0xff]
      %v2944 = vld [vmem:[#allocation2 + $0x10f] sm:$0xff]
      %v2945 = vld [vmem:[#allocation2 + $0x117] sm:$0xff]
      %v2946 = vld [vmem:[#allocation2 + $0x11f] sm:$0xff]
      %v2947 = vld [vmem:[#allocation2 + $0x127] sm:$0xff]
      %v2948 = vld [vmem:[#allocation2 + $0x12f] sm:$0xff]
      %v2949 = vld [vmem:[#allocation2 + $0x137] sm:$0xff]
      %v2950 = vld [vmem:[#allocation2 + $0x13f] sm:$0xff]
      %v2951 = vld [vmem:[#allocation2 + $0x147] sm:$0xff]
      %v2952 = vld [vmem:[#allocation2 + $0x14f] sm:$0xff]
      %v2953 = vpack.c.bf16 %v2918, %v2917
      %v2954 = vpack.c.bf16 %v2920, %v2919
      %v2955 = vpack.c.bf16 %v2922, %v2921
      %v2956 = vpack.c.bf16 %v2924, %v2923
      %v2957 = vpack.c.bf16 %v2926, %v2925
      %v2958 = vpack.c.bf16 %v2928, %v2927
      %v2959 = vpack.c.bf16 %v2930, %v2929
      %v2960 = vpack.c.bf16 %v2932, %v2931
      %v2961 = vpack.c.bf16 %v2934, %v2933
      %v2962 = vpack.c.bf16 %v2936, %v2935
      %v2963 = vpack.c.bf16 %v2938, %v2937
      %v2964 = vpack.c.bf16 %v2940, %v2939
      %v2965 = vpack.c.bf16 %v2942, %v2941
      %v2966 = vpack.c.bf16 %v2944, %v2943
      %v2967 = vpack.c.bf16 %v2946, %v2945
      %v2968 = vpack.c.bf16 %v2948, %v2947
      %v2969 = vpack.c.bf16 %v2950, %v2949
      %v2970 = vpack.c.bf16 %v2952, %v2951
      %v2971 = vld [vmem:[%s1 + $0x20] sm:$0xf]
      %v2973 = vsel %vm262, %v2953, 0
      %v2976 = vsel %vm262, %v2954, 0
      %v2979 = vsel %vm262, %v2955, 0
      %v2982 = vsel %vm262, %v2956, 0
      %v2985 = vsel %vm262, %v2957, 0
      %v2988 = vsel %vm262, %v2958, 0
      %v2991 = vsel %vm262, %v2959, 0
      %v2994 = vsel %vm262, %v2960, 0
      %v2997 = vsel %vm262, %v2961, 0
      %v3000 = vsel %vm262, %v2962, 0
      %v3003 = vsel %vm262, %v2963, 0
      %v3006 = vsel %vm262, %v2964, 0
      %v3009 = vsel %vm262, %v2965, 0
      %v3012 = vsel %vm262, %v2966, 0
      %v3015 = vsel %vm262, %v2967, 0
      %v3018 = vsel %vm262, %v2968, 0
      %v3021 = vsel %vm262, %v2969, 0
      %v3024 = vsel %vm262, %v2970, 0
      %v3027 = vsel %vm425, %v2971, 0
      %3029 = vmatprep.subr.bf16.mxu0 0
      %3030 = vmatpush1.bf16.msra.mxu0 %v3027
      %3031 = vmatprep.subr.bf16.mxu0 0
      %3032 = vmatpush1.bf16.msra.mxu0 0
      %3033 = vmatprep.subr.bf16.mxu0 0
      %3034 = vmatpush1.bf16.msra.mxu0 0
      %3035 = vmatprep.subr.bf16.mxu0 0
      %3036 = vmatpush1.bf16.msra.mxu0 0
      %3037 = vmatprep.subr.bf16.mxu0 0
      %3038 = vmatpush1.bf16.msra.mxu0 0
      %3039 = vmatprep.subr.bf16.mxu0 0
      %3040 = vmatpush1.bf16.msra.mxu0 0
      %3041 = vmatprep.subr.bf16.mxu0 0
      %3042 = vmatpush1.bf16.msra.mxu0 0
      %3043 = vmatprep.subr.bf16.mxu0 0
      %3044 = vmatpush1.bf16.msra.mxu0 0
      %3045 = vmatprep.subr.bf16.mxu0 0
      %3046 = vmatpush1.bf16.msra.mxu0 0
      %3047 = vmatprep.subr.bf16.mxu0 0
      %3048 = vmatpush1.bf16.msra.mxu0 0
      %3049 = vmatprep.subr.bf16.mxu0 0
      %3050 = vmatpush1.bf16.msra.mxu0 0
      %3051 = vmatprep.subr.bf16.mxu0 0
      %3052 = vmatpush1.bf16.msra.mxu0 0
      %3053 = vmatprep.subr.bf16.mxu0 0
      %3054 = vmatpush1.bf16.msra.mxu0 0
      %3055 = vmatprep.subr.bf16.mxu0 0
      %3056 = vmatpush1.bf16.msra.mxu0 0
      %3057 = vmatprep.subr.bf16.mxu0 0
      %3058 = vmatpush1.bf16.msra.mxu0 0
      %3059 = vmatprep.subr.bf16.mxu0 0
      %3060 = vmatpush1.bf16.msra.mxu0 0
      %3061 = vmatprep.mubr.bf16.mxu0 0
      %3062 = vmatmul.mubr.bf16.gmra.mrb[0].mxu0 %v2973
      %v3063 = vpop.f32.mrb[0].mxu0
      %v3064 = vadd.f32 0.0, %v3063
      %v3065 = vpop.f32.mrb[0].mxu0
      %v3066 = vpop.f32.mrb[0].mxu0
      %v3067 = vadd.f32 0.0, %v3066
      %v3068 = vpop.f32.mrb[0].mxu0
      %3069 = vmatprep.mubr.bf16.mxu0 0
      %3070 = vmatmul.mubr.bf16.gmra.mrb[0].mxu0 %v2976
      %v3071 = vpop.f32.mrb[0].mxu0
      %v3072 = vadd.f32 0.0, %v3071
      %v3073 = vpop.f32.mrb[0].mxu0
      %v3074 = vpop.f32.mrb[0].mxu0
      %v3075 = vadd.f32 0.0, %v3074
      %v3076 = vpop.f32.mrb[0].mxu0
      %3077 = vmatprep.mubr.bf16.mxu0 0
      %3078 = vmatmul.mubr.bf16.gmra.mrb[0].mxu0 %v2979
      %v3079 = vpop.f32.mrb[0].mxu0
      %v3080 = vadd.f32 0.0, %v3079
      %v3081 = vpop.f32.mrb[0].mxu0
      %v3082 = vpop.f32.mrb[0].mxu0
      %v3083 = vadd.f32 0.0, %v3082
      %v3084 = vpop.f32.mrb[0].mxu0
      %3085 = vmatprep.mubr.bf16.mxu0 0
      %3086 = vmatmul.mubr.bf16.gmra.mrb[0].mxu0 %v2982
      %v3087 = vpop.f32.mrb[0].mxu0
      %v3088 = vadd.f32 0.0, %v3087
      %v3089 = vpop.f32.mrb[0].mxu0
      %v3090 = vpop.f32.mrb[0].mxu0
      %v3091 = vadd.f32 0.0, %v3090
      %v3092 = vpop.f32.mrb[0].mxu0
      %3093 = vmatprep.mubr.bf16.mxu0 0
      %3094 = vmatmul.mubr.bf16.gmra.mrb[0].mxu0 %v2985
      %v3095 = vpop.f32.mrb[0].mxu0
      %v3096 = vadd.f32 0.0, %v3095
      %v3097 = vpop.f32.mrb[0].mxu0
      %v3098 = vpop.f32.mrb[0].mxu0
      %v3099 = vadd.f32 0.0, %v3098
      %v3100 = vpop.f32.mrb[0].mxu0
      %3101 = vmatprep.mubr.bf16.mxu0 0
      %3102 = vmatmul.mubr.bf16.gmra.mrb[0].mxu0 %v2988
      %v3103 = vpop.f32.mrb[0].mxu0
      %v3104 = vadd.f32 0.0, %v3103
      %v3105 = vpop.f32.mrb[0].mxu0
      %v3106 = vpop.f32.mrb[0].mxu0
      %v3107 = vadd.f32 0.0, %v3106
      %v3108 = vpop.f32.mrb[0].mxu0
      %3109 = vmatprep.mubr.bf16.mxu0 0
      %3110 = vmatmul.mubr.bf16.gmra.mrb[0].mxu0 %v2991
      %v3111 = vpop.f32.mrb[0].mxu0
      %v3112 = vadd.f32 0.0, %v3111
      %v3113 = vpop.f32.mrb[0].mxu0
      %v3114 = vpop.f32.mrb[0].mxu0
      %v3115 = vadd.f32 0.0, %v3114
      %v3116 = vpop.f32.mrb[0].mxu0
      %3117 = vmatprep.mubr.bf16.mxu0 0
      %3118 = vmatmul.mubr.bf16.gmra.mrb[0].mxu0 %v2994
      %v3119 = vpop.f32.mrb[0].mxu0
      %v3120 = vadd.f32 0.0, %v3119
      %v3121 = vpop.f32.mrb[0].mxu0
      %v3122 = vpop.f32.mrb[0].mxu0
      %v3123 = vadd.f32 0.0, %v3122
      %v3124 = vpop.f32.mrb[0].mxu0
      %3125 = vmatprep.mubr.bf16.mxu0 0
      %3126 = vmatmul.mubr.bf16.gmra.mrb[0].mxu0 %v2997
      %v3127 = vpop.f32.mrb[0].mxu0
      %v3128 = vadd.f32 0.0, %v3127
      %v3129 = vpop.f32.mrb[0].mxu0
      %v3130 = vpop.f32.mrb[0].mxu0
      %v3131 = vadd.f32 0.0, %v3130
      %v3132 = vpop.f32.mrb[0].mxu0
      %3133 = vmatprep.mubr.bf16.mxu0 0
      %3134 = vmatmul.mubr.bf16.gmra.mrb[0].mxu0 %v3000
      %v3135 = vpop.f32.mrb[0].mxu0
      %v3136 = vadd.f32 0.0, %v3135
      %v3137 = vpop.f32.mrb[0].mxu0
      %v3138 = vpop.f32.mrb[0].mxu0
      %v3139 = vadd.f32 0.0, %v3138
      %v3140 = vpop.f32.mrb[0].mxu0
      %3141 = vmatprep.mubr.bf16.mxu0 0
      %3142 = vmatmul.mubr.bf16.gmra.mrb[0].mxu0 %v3003
      %v3143 = vpop.f32.mrb[0].mxu0
      %v3144 = vadd.f32 0.0, %v3143
      %v3145 = vpop.f32.mrb[0].mxu0
      %v3146 = vpop.f32.mrb[0].mxu0
      %v3147 = vadd.f32 0.0, %v3146
      %v3148 = vpop.f32.mrb[0].mxu0
      %3149 = vmatprep.mubr.bf16.mxu0 0
      %3150 = vmatmul.mubr.bf16.gmra.mrb[0].mxu0 %v3006
      %v3151 = vpop.f32.mrb[0].mxu0
      %v3152 = vadd.f32 0.0, %v3151
      %v3153 = vpop.f32.mrb[0].mxu0
      %v3154 = vpop.f32.mrb[0].mxu0
      %v3155 = vadd.f32 0.0, %v3154
      %v3156 = vpop.f32.mrb[0].mxu0
      %3157 = vmatprep.mubr.bf16.mxu0 0
      %3158 = vmatmul.mubr.bf16.gmra.mrb[0].mxu0 %v3009
      %v3159 = vpop.f32.mrb[0].mxu0
      %v3160 = vadd.f32 0.0, %v3159
      %v3161 = vpop.f32.mrb[0].mxu0
      %v3162 = vpop.f32.mrb[0].mxu0
      %v3163 = vadd.f32 0.0, %v3162
      %v3164 = vpop.f32.mrb[0].mxu0
      %3165 = vmatprep.mubr.bf16.mxu0 0
      %3166 = vmatmul.mubr.bf16.gmra.mrb[0].mxu0 %v3012
      %v3167 = vpop.f32.mrb[0].mxu0
      %v3168 = vadd.f32 0.0, %v3167
      %v3169 = vpop.f32.mrb[0].mxu0
      %v3170 = vpop.f32.mrb[0].mxu0
      %v3171 = vadd.f32 0.0, %v3170
      %v3172 = vpop.f32.mrb[0].mxu0
      %3173 = vmatprep.mubr.bf16.mxu0 0
      %3174 = vmatmul.mubr.bf16.gmra.mrb[0].mxu0 %v3015
      %v3175 = vpop.f32.mrb[0].mxu0
      %v3176 = vadd.f32 0.0, %v3175
      %v3177 = vpop.f32.mrb[0].mxu0
      %v3178 = vpop.f32.mrb[0].mxu0
      %v3179 = vadd.f32 0.0, %v3178
      %v3180 = vpop.f32.mrb[0].mxu0
      %3181 = vmatprep.mubr.bf16.mxu0 0
      %3182 = vmatmul.mubr.bf16.gmra.mrb[0].mxu0 %v3018
      %v3183 = vpop.f32.mrb[0].mxu0
      %v3184 = vadd.f32 0.0, %v3183
      %v3185 = vpop.f32.mrb[0].mxu0
      %v3186 = vpop.f32.mrb[0].mxu0
      %v3187 = vadd.f32 0.0, %v3186
      %v3188 = vpop.f32.mrb[0].mxu0
      %3189 = vmatprep.mubr.bf16.mxu0 0
      %3190 = vmatmul.mubr.bf16.gmra.mrb[0].mxu0 %v3021
      %v3191 = vpop.f32.mrb[0].mxu0
      %v3192 = vadd.f32 0.0, %v3191
      %v3193 = vpop.f32.mrb[0].mxu0
      %v3194 = vpop.f32.mrb[0].mxu0
      %v3195 = vadd.f32 0.0, %v3194
      %v3196 = vpop.f32.mrb[0].mxu0
      %3197 = vmatprep.mubr.bf16.mxu0 0
      %3198 = vmatmul.mubr.bf16.gmra.mrb[0].mxu0 %v3024
      %v3199 = vpop.f32.mrb[0].mxu0
      %v3200 = vadd.f32 0.0, %v3199
      %v3201 = vpop.f32.mrb[0].mxu0
      %v3202 = vpop.f32.mrb[0].mxu0
      %v3203 = vadd.f32 0.0, %v3202
      %v3204 = vpop.f32.mrb[0].mxu0
      %3205 = vdwg.mxu0
      %v3206 = vadd.f32 %v2881, %v3064
      %v3207 = vadd.f32 %v2882, %v3067
      %v3208 = vadd.f32 %v2883, %v3072
      %v3209 = vadd.f32 %v2884, %v3075
      %v3210 = vadd.f32 %v2885, %v3080
      %v3211 = vadd.f32 %v2886, %v3083
      %v3212 = vadd.f32 %v2887, %v3088
      %v3213 = vadd.f32 %v2888, %v3091
      %v3214 = vadd.f32 %v2889, %v3096
      %v3215 = vadd.f32 %v2890, %v3099
      %v3216 = vadd.f32 %v2891, %v3104
      %v3217 = vadd.f32 %v2892, %v3107
      %v3218 = vadd.f32 %v2893, %v3112
      %v3219 = vadd.f32 %v2894, %v3115
      %v3220 = vadd.f32 %v2895, %v3120
      %v3221 = vadd.f32 %v2896, %v3123
      %v3222 = vadd.f32 %v2897, %v3128
      %v3223 = vadd.f32 %v2898, %v3131
      %v3224 = vadd.f32 %v2899, %v3136
      %v3225 = vadd.f32 %v2900, %v3139
      %v3226 = vadd.f32 %v2901, %v3144
      %v3227 = vadd.f32 %v2902, %v3147
      %v3228 = vadd.f32 %v2903, %v3152
      %v3229 = vadd.f32 %v2904, %v3155
      %v3230 = vadd.f32 %v2905, %v3160
      %v3231 = vadd.f32 %v2906, %v3163
      %v3232 = vadd.f32 %v2907, %v3168
      %v3233 = vadd.f32 %v2908, %v3171
      %v3234 = vadd.f32 %v2909, %v3176
      %v3235 = vadd.f32 %v2910, %v3179
      %v3236 = vadd.f32 %v2911, %v3184
      %v3237 = vadd.f32 %v2912, %v3187
      %v3238 = vadd.f32 %v2913, %v3192
      %v3239 = vadd.f32 %v2914, %v3195
      %v3240 = vadd.f32 %v2915, %v3200
      %v3241 = vadd.f32 %v2916, %v3203
      %v3242 = vpack.c.bf16 %v3207, %v3206
      %v3243 = vpack.c.bf16 %v3209, %v3208
      %v3244 = vpack.c.bf16 %v3211, %v3210
      %v3245 = vpack.c.bf16 %v3213, %v3212
      %v3246 = vpack.c.bf16 %v3215, %v3214
      %v3247 = vpack.c.bf16 %v3217, %v3216
      %v3248 = vpack.c.bf16 %v3219, %v3218
      %v3249 = vpack.c.bf16 %v3221, %v3220
      %v3250 = vpack.c.bf16 %v3223, %v3222
      %v3251 = vpack.c.bf16 %v3225, %v3224
      %v3252 = vpack.c.bf16 %v3227, %v3226
      %v3253 = vpack.c.bf16 %v3229, %v3228
      %v3254 = vpack.c.bf16 %v3231, %v3230
      %v3255 = vpack.c.bf16 %v3233, %v3232
      %v3256 = vpack.c.bf16 %v3235, %v3234
      %v3257 = vpack.c.bf16 %v3237, %v3236
      %v3258 = vpack.c.bf16 %v3239, %v3238
      %v3259 = vpack.c.bf16 %v3241, %v3240
      %v3278 = vunpack.c.l.b16 %v3242
      %v3279 = vunpack.c.h.b16 %v3242
      %v3280 = vunpack.c.l.b16 %v3243
      %v3281 = vunpack.c.h.b16 %v3243
      %v3282 = vunpack.c.l.b16 %v3244
      %v3283 = vunpack.c.h.b16 %v3244
      %v3284 = vunpack.c.l.b16 %v3245
      %v3285 = vunpack.c.h.b16 %v3245
      %v3286 = vunpack.c.l.b16 %v3246
      %v3287 = vunpack.c.h.b16 %v3246
      %v3288 = vunpack.c.l.b16 %v3247
      %v3289 = vunpack.c.h.b16 %v3247
      %v3290 = vunpack.c.l.b16 %v3248
      %v3291 = vunpack.c.h.b16 %v3248
      %v3292 = vunpack.c.l.b16 %v3249
      %v3293 = vunpack.c.h.b16 %v3249
      %v3294 = vunpack.c.l.b16 %v3250
      %v3295 = vunpack.c.h.b16 %v3250
      %v3296 = vunpack.c.l.b16 %v3251
      %v3297 = vunpack.c.h.b16 %v3251
      %v3298 = vunpack.c.l.b16 %v3252
      %v3299 = vunpack.c.h.b16 %v3252
      %v3300 = vunpack.c.l.b16 %v3253
      %v3301 = vunpack.c.h.b16 %v3253
      %v3302 = vunpack.c.l.b16 %v3254
      %v3303 = vunpack.c.h.b16 %v3254
      %v3304 = vunpack.c.l.b16 %v3255
      %v3305 = vunpack.c.h.b16 %v3255
      %v3306 = vunpack.c.l.b16 %v3256
      %v3307 = vunpack.c.h.b16 %v3256
      %v3308 = vunpack.c.l.b16 %v3257
      %v3309 = vunpack.c.h.b16 %v3257
      %v3310 = vunpack.c.l.b16 %v3258
      %v3311 = vunpack.c.h.b16 %v3258
      %v3312 = vunpack.c.l.b16 %v3259
      %v3313 = vunpack.c.h.b16 %v3259
      %v3314 = vpack.c.b16 %v3278, %v3278
      %v3315 = vpack.c.b16 %v3279, %v3279
      %v3316 = vpack.c.b16 %v3280, %v3280
      %v3317 = vpack.c.b16 %v3281, %v3281
      %v3318 = vpack.c.b16 %v3282, %v3282
      %v3319 = vpack.c.b16 %v3283, %v3283
      %v3320 = vpack.c.b16 %v3284, %v3284
      %v3321 = vpack.c.b16 %v3285, %v3285
      %v3322 = vpack.c.b16 %v3286, %v3286
      %v3323 = vpack.c.b16 %v3287, %v3287
      %v3324 = vpack.c.b16 %v3288, %v3288
      %v3325 = vpack.c.b16 %v3289, %v3289
      %v3326 = vpack.c.b16 %v3290, %v3290
      %v3327 = vpack.c.b16 %v3291, %v3291
      %v3328 = vpack.c.b16 %v3292, %v3292
      %v3329 = vpack.c.b16 %v3293, %v3293
      %v3330 = vpack.c.b16 %v3294, %v3294
      %v3331 = vpack.c.b16 %v3295, %v3295
      %v3332 = vpack.c.b16 %v3296, %v3296
      %v3333 = vpack.c.b16 %v3297, %v3297
      %v3334 = vpack.c.b16 %v3298, %v3298
      %v3335 = vpack.c.b16 %v3299, %v3299
      %v3336 = vpack.c.b16 %v3300, %v3300
      %v3337 = vpack.c.b16 %v3301, %v3301
      %v3338 = vpack.c.b16 %v3302, %v3302
      %v3339 = vpack.c.b16 %v3303, %v3303
      %v3340 = vpack.c.b16 %v3304, %v3304
      %v3341 = vpack.c.b16 %v3305, %v3305
      %v3342 = vpack.c.b16 %v3306, %v3306
      %v3343 = vpack.c.b16 %v3307, %v3307
      %v3344 = vpack.c.b16 %v3308, %v3308
      %v3345 = vpack.c.b16 %v3309, %v3309
      %v3346 = vpack.c.b16 %v3310, %v3310
      %v3347 = vpack.c.b16 %v3311, %v3311
      %v3348 = vpack.c.b16 %v3312, %v3312
      %v3349 = vpack.c.b16 %v3313, %v3313
      %3386 = vst [vmem:[%s170] sm:$0xf] %v3314
      %3387 = vst [vmem:[%s170 + $0x4] sm:$0xf] %v3315
      %3388 = vst [vmem:[%s170 + $0x8] sm:$0xf] %v3316
      %3389 = vst [vmem:[%s170 + $0xc] sm:$0xf] %v3317
      %3390 = vst [vmem:[%s170 + $0x10] sm:$0xf] %v3318
      %3391 = vst [vmem:[%s170 + $0x14] sm:$0xf] %v3319
      %3392 = vst [vmem:[%s170 + $0x18] sm:$0xf] %v3320
      %3393 = vst [vmem:[%s170 + $0x1c] sm:$0xf] %v3321
      %3394 = vst [vmem:[%s170 + $0x20] sm:$0xf] %v3322
      %3395 = vst [vmem:[%s170 + $0x24] sm:$0xf] %v3323
      %3396 = vst [vmem:[%s170 + $0x28] sm:$0xf] %v3324
      %3397 = vst [vmem:[%s170 + $0x2c] sm:$0xf] %v3325
      %3398 = vst [vmem:[%s170 + $0x30] sm:$0xf] %v3326
      %3399 = vst [vmem:[%s170 + $0x34] sm:$0xf] %v3327
      %3400 = vst [vmem:[%s170 + $0x38] sm:$0xf] %v3328
      %3401 = vst [vmem:[%s170 + $0x3c] sm:$0xf] %v3329
      %3402 = vst [vmem:[%s170 + $0x40] sm:$0xf] %v3330
      %3403 = vst [vmem:[%s170 + $0x44] sm:$0xf] %v3331
      %3404 = vst [vmem:[%s170 + $0x48] sm:$0xf] %v3332
      %3405 = vst [vmem:[%s170 + $0x4c] sm:$0xf] %v3333
      %3406 = vst [vmem:[%s170 + $0x50] sm:$0xf] %v3334
      %3407 = vst [vmem:[%s170 + $0x54] sm:$0xf] %v3335
      %3408 = vst [vmem:[%s170 + $0x58] sm:$0xf] %v3336
      %3409 = vst [vmem:[%s170 + $0x5c] sm:$0xf] %v3337
      %3410 = vst [vmem:[%s170 + $0x60] sm:$0xf] %v3338
      %3411 = vst [vmem:[%s170 + $0x64] sm:$0xf] %v3339
      %3412 = vst [vmem:[%s170 + $0x68] sm:$0xf] %v3340
      %3413 = vst [vmem:[%s170 + $0x6c] sm:$0xf] %v3341
      %3414 = vst [vmem:[%s170 + $0x70] sm:$0xf] %v3342
      %3415 = vst [vmem:[%s170 + $0x74] sm:$0xf] %v3343
      %3416 = vst [vmem:[%s170 + $0x78] sm:$0xf] %v3344
      %3417 = vst [vmem:[%s170 + $0x7c] sm:$0xf] %v3345
      %3418 = vst [vmem:[%s170 + $0x80] sm:$0xf] %v3346
      %3419 = vst [vmem:[%s170 + $0x84] sm:$0xf] %v3347
      %3420 = vst [vmem:[%s170 + $0x88] sm:$0xf] %v3348
      %3421 = vst [vmem:[%s170 + $0x8c] sm:$0xf] %v3349
      %p3422 = scmp.lt.s32.totalorder %s14, 1
      %s3423 = scalar_select %p3422, %s14, 1
      %s3424 = smul.addr %s3423, 36
      %s3425 = smul.addr %s3424, 4
      %s3426 = scalar_lea.vmem %s3, %s3425
      // Predicated region
      $region33: #{conv3x3.1} parent=31 // pred_check
        %p3427 = pneg %p100
      $region34: #{conv3x3.1} parent=31 // pred_check_branch
        %3429 = sbr.rel (%p3427) target = $region36
      $region35: #{conv3x3.1} parent=31 // pred_region
        _
      $region36: #{conv3x3.1} parent=31 // pred_fallthru
        _
    $region32: #{conv3x3.1} parent=5 // pred_fallthru
      _
    %p3430 = scmp.le.s32.totalorder 2, %s9
    // Predicated region
    $region37: #{conv3x3.1} parent=5 // pred_check
      %p3431 = pneg %p3430
    $region38: #{conv3x3.1} parent=5 // pred_check_branch
      %3433 = sbr.rel (%p3431) target = $region40
    $region39: #{conv3x3.1} parent=5 // pred_region
      %s3434 = ssub.s32 %s9, 2
      // Predicated region
      $region41: #{conv3x3.1} parent=39 // pred_check
        %p3435 = pneg %p106
      $region42: #{conv3x3.1} parent=39 // pred_check_branch
        %3437 = sbr.rel (%p3435) target = $region44
      $region43: #{conv3x3.1} parent=39 // pred_region
        %p3438 = scmp.lt.s32.totalorder %s15, 1
        %s3439 = scalar_select %p3438, %s15, 1
        %s3440 = smul.addr %s3439, 36
        %s3441 = smul.addr %s3440, 4
        %s3442 = scalar_lea.vmem %s3, %s3441
      $region44: #{conv3x3.1} parent=39 // pred_fallthru
        _
    $region40: #{conv3x3.1} parent=5 // pred_fallthru
      _
  $region6: #{conv3x3.1} parent=0 // loop_footer
    %s13 = sadd.s32 1, %s9
  $region7: #{conv3x3.1} parent=0 // loop_footer_branch
    %8 = sbr.rel target = $region3
  $region8: #{conv3x3.1} parent=0 // loop_exit
    _

</llo_original>
